<compile_context>
chip_gen: v5e
topology: v5e:2x2
jax: 0.10.0
libtpu: 0.0.40
codegen_flags: <defaults>
</compile_context>

<pallas_src>
import functools

import jax
import jax.numpy as jnp
import numpy as np
from jax import lax
from jax.experimental import pallas as pl
from jax.experimental.pallas import tpu as pltpu

KS = 3                      # kernel_size of AFG / Context
MXU_DTYPE = jnp.bfloat16    # HBM + fusion-matmul dtype for x / pha / amp


# --------------------------------------------------------------------------
# Pallas kernel: one (batch, row-tile) step, channels-major tiles in VMEM.
# --------------------------------------------------------------------------
def _afg_kernel(x_ref, pha_ref, amp_ref, halo_ref, bkb_ref,
                wf_ref, bf_ref, wdw_ref, bdw_ref, wk_ref,
                out_ref, *, W):
    C, T = out_ref.shape          # C = padded channels, T = row_tile * W
    L = T + 2 * W                 # extended width: one halo row above and below

    # Only column masks are needed: out-of-image halo ROWS are zero already
    # (wrapper zero-pads), and conv_sa's zero row-padding of `fusion` is applied
    # by zeroing fus_top / fus_bot on the boundary tiles below.
    col = lax.broadcasted_iota(jnp.int32, (1, L), 1) % W
    mask_l = col >= 1             # valid sources for ow = -1
    mask_r = col <= W - 2         # valid sources for ow = +1

    def tap_shift(src, k):
        """src value at spatial offset (dh-1, dw-1); zero outside image columns."""
        oh, ow = k // KS - 1, k % KS - 1
        off = oh * W + ow
        v = pltpu.roll(src, (-off) % L, axis=1) if off != 0 else src
        if ow < 0:
            v = jnp.where(mask_l, v, 0.0)
        elif ow > 0:
            v = jnp.where(mask_r, v, 0.0)
        return v

    # ---- fusion = Conv2d(3C -> C, 1x1): three K=C bf16 MXU matmuls (no concat) ----
    wf = wf_ref[...]                              # (C, 3C) bf16, columns [x|pha|amp]
    bf = bf_ref[...]                              # (C, 1)  f32
    fus_main = (jnp.dot(wf[:, 0:C],       x_ref[...],   preferred_element_type=jnp.float32)
                + jnp.dot(wf[:, C:2 * C], pha_ref[...], preferred_element_type=jnp.float32)
                + jnp.dot(wf[:, 2 * C:],  amp_ref[...], preferred_element_type=jnp.float32)
                + bf)                             # (C, T) f32

    # fusion on the two halo rows (halo is the stacked [x; pha; amp] row -> one
    # K=3C matmul each).  At the image top / bottom the halo row lies outside the
    # image: conv_sa zero-pads fusion there, so force those rows to exactly 0.
    i = pl.program_id(1)
    top_valid = (i > 0).astype(jnp.float32)
    bot_valid = (i < pl.num_programs(1) - 1).astype(jnp.float32)
    fus_top = (jnp.dot(wf, halo_ref[0], preferred_element_type=jnp.float32) + bf) * top_valid
    fus_bot = (jnp.dot(wf, halo_ref[1], preferred_element_type=jnp.float32) + bf) * bot_valid
    fus = jnp.concatenate([fus_top, fus_main, fus_bot], axis=1)     # (C, L) f32

    # ---- Context / spatial branch: depthwise 3x3 via lane rolls.
    # Centre tap first (no roll, no mask); halo-row results are garbage but unused.
    wdw = wdw_ref[...]                            # (C, 9) f32
    sa = bdw_ref[...] + wdw[:, 4:5] * fus
    for k in range(KS * KS):
        if k == 4:
            continue
        sa = sa + wdw[:, k:k + 1] * tap_shift(fus, k)
    # Channel attention (global avg-pool + Conv1d over channels) is folded into
    # the per-batch kernel-prediction bias `bkb` by the wrapper, so att == sa.

    # ---- kernel prediction fused with the unfold-apply: per-tap matmul, never
    # materialising the (9C, L) kernel tensor.
    x_ext = jnp.concatenate([halo_ref[0, 0:C, :], x_ref[...], halo_ref[1, 0:C, :]],
                            axis=1).astype(jnp.float32)             # (C, L)
    wk = wk_ref[...]                              # (9C, C) f32 (row k*C + c)
    bkb = bkb_ref[...]                            # (9C, 1) f32 (ca already folded in)

    def ker_tap(k):                               # per-pixel kernel for tap k
        return (jnp.dot(wk[k * C:(k + 1) * C, :], sa,
                        preferred_element_type=jnp.float32)
                + bkb[k * C:(k + 1) * C, :])      # (C, L) f32

    out = x_ext * ker_tap(4)                      # centre tap: no roll, no mask
    for k in range(KS * KS):
        if k == 4:
            continue
        out = out + tap_shift(x_ext, k) * ker_tap(k)

    out_ref[...] = out[:, W:W + T].astype(out_ref.dtype)


# --------------------------------------------------------------------------
# Wrapper glue: parameter re-layout, channel padding, halo gather, ca fold.
# --------------------------------------------------------------------------
def _pad_channels(a, Cp):
    C = a.shape[1]
    if C == Cp:
        return a
    return jnp.pad(a, ((0, 0), (0, Cp - C), (0, 0), (0, 0)))


def prep_params(p, C, Cp):
    """Re-layout module parameters; pad channels to Cp (multiple of 8)."""
    pad = Cp - C

    # fusion 1x1: (C, 3C) with column blocks [x | pha | amp]; pad each block.
    wf = p['w_fusion'][:, :, 0, 0].reshape(C, 3, C)
    wf = jnp.pad(wf, ((0, pad), (0, 0), (0, pad))).reshape(Cp, 3 * Cp)
    bf = jnp.pad(p['b_fusion'], (0, pad)).astype(jnp.float32)[:, None]       # (Cp, 1)

    # depthwise 3x3: (C, 9), taps row-major over (dh, dw)
    wdw = p['w_sa'][:, 0].reshape(C, KS * KS)
    wdw = jnp.pad(wdw, ((0, pad), (0, 0))).astype(jnp.float32)               # (Cp, 9)
    bdw = jnp.pad(p['b_sa'], (0, pad)).astype(jnp.float32)[:, None]          # (Cp, 1)

    # kernel prediction 1x1: re-index rows so row k*Cp + c == original row c*9 + k
    wk = p['w_kernel'][:, :, 0, 0].reshape(C, KS * KS, C).transpose(1, 0, 2)  # (9, C, C)
    wk = jnp.pad(wk, ((0, 0), (0, pad), (0, pad)))
    wk = wk.reshape(KS * KS * Cp, Cp).astype(jnp.float32)                     # (9Cp, Cp)
    bk = p['b_kernel'].reshape(C, KS * KS).T                                  # (9, C)
    bk = jnp.pad(bk, ((0, 0), (0, pad))).reshape(KS * KS * Cp).astype(jnp.float32)

    return wf.astype(MXU_DTYPE), bf, wdw, bdw, wk, bk


def _channel_attention_bias(x, pha, amp, p, wk_pad, bk_pad, C, Cp):
    """Two-pass global pool: ca from full-image means, folded into the kers bias."""
    # mean(fusion) over pixels == wf @ mean([x; pha; amp]) + bf  (1x1 conv is linear)
    m = jnp.concatenate([x.mean(axis=(2, 3)), pha.mean(axis=(2, 3)),
                         amp.mean(axis=(2, 3))], axis=1)                      # (B, 3C) f32
    wf = p['w_fusion'][:, :, 0, 0].astype(jnp.float32)                        # (C, 3C)
    y = m @ wf.T + p['b_fusion'][None, :].astype(jnp.float32)                 # (B, C)
    w1 = p['w_ca'][0, 0].astype(jnp.float32)                                  # (3,)
    yp = jnp.pad(y, ((0, 0), (1, 1)))
    ca = (w1[0] * yp[:, 0:C] + w1[1] * yp[:, 1:C + 1] + w1[2] * yp[:, 2:C + 2]
          + p['b_ca'][0].astype(jnp.float32))                                 # (B, C)
    ca = jnp.pad(ca, ((0, 0), (0, Cp - C)))                                   # (B, Cp)
    # kers = Wk @ sa + (Wk @ ca + bk)   ->   fold ca into a per-batch bias
    bkb = ca @ wk_pad.T + bk_pad[None, :]                                     # (B, 9Cp)
    return bkb[:, :, None].astype(jnp.float32)                                # (B, 9Cp, 1)


def _gather_halo(a, tH):
    """Per row-tile halo rows: row i*tH-1 (top) and (i+1)*tH (bottom); zero outside."""
    B, Cp, H, W = a.shape
    zero = jnp.zeros((B, Cp, 1, W), a.dtype)
    tops = jnp.concatenate([zero, a[:, :, tH - 1:H - 1:tH, :]], axis=2)       # (B,Cp,n,W)
    bots = jnp.concatenate([a[:, :, tH:H:tH, :], zero], axis=2)               # (B,Cp,n,W)
    return jnp.stack([tops, bots], axis=2)                                    # (B,Cp,2,n,W)


def _default_vmem_limit():
    try:
        cap = pltpu.get_tpu_info().vmem_capacity_bytes    # 64 MiB v7x, 128 MiB v5e/v6e
    except Exception:
        cap = 64 * 1024 * 1024                            # conservative (v7x) fallback
    return int(min(cap * 3 // 4, 96 * 1024 * 1024))


def _pick_row_tile(H, W, Cp, vmem_limit):
    """Largest row tile with tH*W % 128 == 0 (or whole image) fitting the budget."""
    # ~48 live bytes per (channel, extended pixel) incl. double-buffered bf16 I/O.
    budget_rows = (vmem_limit // 2) // max(1, Cp * W * 48)
    cands = [t for t in range(1, H + 1)
             if H % t == 0 and ((t * W) % 128 == 0 or t == H)]
    fitting = [t for t in cands if t + 2 <= budget_rows]
    # TODO(synk): for extremely wide rows (row_tile*W still too big for VMEM) add
    # column tiling with a 1-column halo as well.
    return max(fitting) if fitting else min(cands)


def afg_forward(x, pha, amp, params, *, row_tile=None, vmem_limit_bytes=None):
    """x, pha, amp: (B, C, H, W) float32 (NCHW).  Returns (B, C, H, W) float32."""
    B, C, H, W = x.shape
    Cp = ((C + 7) // 8) * 8                       # sublane-aligned channel count
    vmem_limit = vmem_limit_bytes or _default_vmem_limit()
    tH = row_tile or _pick_row_tile(H, W, Cp, vmem_limit)
    assert H % tH == 0, "row_tile must divide H"
    assert (tH * W) % 128 == 0 or tH == H, "row_tile*W must be a multiple of 128"
    n_tiles = H // tH
    T = tH * W

    wf, bf, wdw, bdw, wk, bk = prep_params(params, C, Cp)
    bkb = _channel_attention_bias(x, pha, amp, params, wk, bk, C, Cp)

    # bf16 HBM I/O for the three image inputs; f32 accumulation happens in-kernel.
    xb = _pad_channels(x, Cp).astype(MXU_DTYPE)
    pb = _pad_channels(pha, Cp).astype(MXU_DTYPE)
    ab = _pad_channels(amp, Cp).astype(MXU_DTYPE)

    halo = jnp.concatenate(
        [_gather_halo(xb, tH), _gather_halo(pb, tH), _gather_halo(ab, tH)],
        axis=1)                                   # (B, 3Cp, 2, n_tiles, W)
    halo = halo.transpose(0, 3, 2, 1, 4)          # (B, n_tiles, 2, 3Cp, W)

    # channels-major flattening of NCHW is just a reshape -- no transpose.
    xf = xb.reshape(B, Cp, H * W)
    pf = pb.reshape(B, Cp, H * W)
    af = ab.reshape(B, Cp, H * W)

    data_spec = pl.BlockSpec((pl.Squeezed(), Cp, T), lambda b, i: (b, 0, i))
    halo_spec = pl.BlockSpec((pl.Squeezed(), pl.Squeezed(), 2, 3 * Cp, W),
                             lambda b, i: (b, i, 0, 0, 0))
    bkb_spec = pl.BlockSpec((pl.Squeezed(), KS * KS * Cp, 1), lambda b, i: (b, 0, 0))

    def full_spec(arr):
        return pl.BlockSpec(arr.shape, lambda b, i, _nd=arr.ndim: (0,) * _nd)

    kernel = functools.partial(_afg_kernel, W=W)

    out = pl.pallas_call(
        kernel,
        out_shape=jax.ShapeDtypeStruct((B, Cp, H * W), jnp.float32),
        grid=(B, n_tiles),
        in_specs=[data_spec, data_spec, data_spec, halo_spec, bkb_spec,
                  full_spec(wf), full_spec(bf), full_spec(wdw), full_spec(bdw),
                  full_spec(wk)],
        out_specs=data_spec,
        compiler_params=pltpu.CompilerParams(
            dimension_semantics=("parallel", "parallel"),
            vmem_limit_bytes=vmem_limit),
    )(xf, pf, af, halo, bkb, wf, bf, wdw, bdw, wk)

    return out.reshape(B, Cp, H, W)[:, :C]


# --------------------------------------------------------------------------
# Pure-JAX reference (mirrors the PyTorch module exactly, NCHW, full f32)
# --------------------------------------------------------------------------
def afg_reference(x, pha, amp, p):
    B, C, H, W = x.shape
    dn = ('NCHW', 'OIHW', 'NCHW')
    cat = jnp.concatenate([x, pha, amp], axis=1)
    fusion = (lax.conv_general_dilated(cat, p['w_fusion'], (1, 1), 'VALID',
                                       dimension_numbers=dn)
              + p['b_fusion'][None, :, None, None])
    sa = (lax.conv_general_dilated(fusion, p['w_sa'], (1, 1), ((1, 1), (1, 1)),
                                   feature_group_count=C, dimension_numbers=dn)
          + p['b_sa'][None, :, None, None])
    y = jnp.mean(fusion, axis=(2, 3))                       # (B, C)
    yp = jnp.pad(y, ((0, 0), (1, 1)))
    w1 = p['w_ca'][0, 0]
    ca = (w1[0] * yp[:, 0:C] + w1[1] * yp[:, 1:C + 1] + w1[2] * yp[:, 2:C + 2]
          + p['b_ca'][0])
    att = sa + ca[:, :, None, None]
    kers = (lax.conv_general_dilated(att, p['w_kernel'], (1, 1), 'VALID',
                                     dimension_numbers=dn)
            + p['b_kernel'][None, :, None, None])
    filt = kers.reshape(B, C, KS * KS, H, W)
    xpad = jnp.pad(x, ((0, 0), (0, 0), (1, 1), (1, 1)))
    patches = [xpad[:, :, dh:dh + H, dw:dw + W] for dh in range(KS) for dw in range(KS)]
    unf = jnp.stack(patches, axis=2)                        # (B, C, 9, H, W)
    return (unf * filt).sum(2)


# --------------------------------------------------------------------------
if __name__ == "__main__":
    B, C, H, W = 2, 24, 16, 128          # module default in_channels=24

    key = jax.random.PRNGKey(0)
    ks = jax.random.split(key, 11)
    params = {
        'w_fusion': 0.1 * jax.random.normal(ks[0], (C, 3 * C, 1, 1), jnp.float32),
        'b_fusion': 0.1 * jax.random.normal(ks[1], (C,), jnp.float32),
        'w_sa':     0.1 * jax.random.normal(ks[2], (C, 1, KS, KS), jnp.float32),
        'b_sa':     0.1 * jax.random.normal(ks[3], (C,), jnp.float32),
        'w_ca':     0.1 * jax.random.normal(ks[4], (1, 1, KS), jnp.float32),
        'b_ca':     0.1 * jax.random.normal(ks[5], (1,), jnp.float32),
        'w_kernel': 0.1 * jax.random.normal(ks[6], (C * KS * KS, C, 1, 1), jnp.float32),
        'b_kernel': 0.1 * jax.random.normal(ks[7], (C * KS * KS,), jnp.float32),
    }
    x = jax.random.normal(ks[8], (B, C, H, W), jnp.float32)
    pha = jax.random.normal(ks[9], (B, C, H, W), jnp.float32)
    amp = jax.random.normal(ks[10], (B, C, H, W), jnp.float32)

    ref = jax.block_until_ready(afg_reference(x, pha, amp, params))

    # explicit 4-row tiles -> grid=(B, 4): exercises the halo / boundary-tile path
    out_tiled = jax.block_until_ready(afg_forward(x, pha, amp, params, row_tile=4))
    np.testing.assert_allclose(np.asarray(out_tiled), np.asarray(ref),
                               rtol=5e-2, atol=5e-2)

    # auto tile size (whole image fits VMEM at this size -> single tile per image)
    out_auto = jax.block_until_ready(afg_forward(x, pha, amp, params))
    np.testing.assert_allclose(np.asarray(out_auto), np.asarray(ref),
                               rtol=5e-2, atol=5e-2)

    print("KERNEL_OK")
</pallas_src>

<mosaic_0001>
module attributes {stable_mosaic.version = 11 : i64} {
  func.func @_afg_kernel(%arg0: i32, %arg1: i32, %arg2: memref<1x24x512xbf16, #tpu.memory_space<vmem>>, %arg3: memref<1x24x512xbf16, #tpu.memory_space<vmem>>, %arg4: memref<1x24x512xbf16, #tpu.memory_space<vmem>>, %arg5: memref<1x1x2x72x128xbf16, #tpu.memory_space<vmem>>, %arg6: memref<1x216x1xf32, #tpu.memory_space<vmem>>, %arg7: memref<24x72xbf16, #tpu.memory_space<vmem>>, %arg8: memref<24x1xf32, #tpu.memory_space<vmem>>, %arg9: memref<24x9xf32, #tpu.memory_space<vmem>>, %arg10: memref<24x1xf32, #tpu.memory_space<vmem>>, %arg11: memref<216x24xf32, #tpu.memory_space<vmem>>, %arg12: memref<1x24x512xf32, #tpu.memory_space<vmem>>) attributes {dimension_semantics = [#tpu.dimension_semantics<parallel>, #tpu.dimension_semantics<parallel>], iteration_bounds = array<i64: 2, 4>, scalar_prefetch = 0 : i64, scratch_operands = 0 : i64, tpu.core_type = #tpu.core_type<tc>, window_params = [{transform_indices = @transform_0, window_bounds = array<i64: 1, 24, 512>}, {transform_indices = @transform_1, window_bounds = array<i64: 1, 24, 512>}, {transform_indices = @transform_2, window_bounds = array<i64: 1, 24, 512>}, {transform_indices = @transform_3, window_bounds = array<i64: 1, 1, 2, 72, 128>}, {transform_indices = @transform_4, window_bounds = array<i64: 1, 216, 1>}, {pipeline_mode = #tpu.pipeline_mode<synchronous>, transform_indices = @transform_5, window_bounds = array<i64: 24, 72>}, {pipeline_mode = #tpu.pipeline_mode<synchronous>, transform_indices = @transform_6, window_bounds = array<i64: 24, 1>}, {pipeline_mode = #tpu.pipeline_mode<synchronous>, transform_indices = @transform_7, window_bounds = array<i64: 24, 9>}, {pipeline_mode = #tpu.pipeline_mode<synchronous>, transform_indices = @transform_8, window_bounds = array<i64: 24, 1>}, {pipeline_mode = #tpu.pipeline_mode<synchronous>, transform_indices = @transform_9, window_bounds = array<i64: 216, 24>}, {transform_indices = @transform_10, window_bounds = array<i64: 1, 24, 512>}]} {
    %0 = tpu.iota {dimensions = array<i32: 1>} : vector<1x768xi32>
    %c128_i32 = arith.constant 128 : i32
    %c0_i32 = arith.constant 0 : i32
    %1 = arith.cmpi eq, %c128_i32, %c0_i32 : i32
    %c1_i32 = arith.constant 1 : i32
    %2 = arith.select %1, %c1_i32, %c128_i32 : i32
    %3 = vector.broadcast %2 : i32 to vector<1x768xi32>
    %4 = arith.remsi %0, %3 : vector<1x768xi32>
    %c0_i32_0 = arith.constant 0 : i32
    %5 = vector.broadcast %c0_i32_0 : i32 to vector<1x768xi32>
    %6 = arith.cmpi ne, %4, %5 : vector<1x768xi32>
    %c0_i32_1 = arith.constant 0 : i32
    %7 = vector.broadcast %c0_i32_1 : i32 to vector<1x768xi32>
    %8 = arith.cmpi slt, %4, %7 : vector<1x768xi32>
    %c0_i32_2 = arith.constant 0 : i32
    %9 = arith.cmpi slt, %2, %c0_i32_2 : i32
    %10 = vector.broadcast %9 : i1 to vector<1x768xi1>
    %11 = vector.broadcast %10 : vector<1x768xi1> to vector<1x768xi1>
    %12 = arith.xori %8, %11 : vector<1x768xi1>
    %13 = arith.andi %12, %6 : vector<1x768xi1>
    %14 = vector.broadcast %2 : i32 to vector<1x768xi32>
    %15 = arith.addi %4, %14 : vector<1x768xi32>
    %16 = arith.select %13, %15, %4 : vector<1x768xi1>, vector<1x768xi32>
    %c1_i32_3 = arith.constant 1 : i32
    %17 = vector.broadcast %c1_i32_3 : i32 to vector<1x768xi32>
    %18 = arith.cmpi sge, %16, %17 : vector<1x768xi32>
    %c126_i32 = arith.constant 126 : i32
    %19 = vector.broadcast %c126_i32 : i32 to vector<1x768xi32>
    %20 = arith.cmpi sle, %16, %19 : vector<1x768xi32>
    %c0 = arith.constant 0 : index
    %c0_4 = arith.constant 0 : index
    %21 = vector.load %arg7[%c0, %c0_4] : memref<24x72xbf16, #tpu.memory_space<vmem>>, vector<24x72xbf16>
    %c0_5 = arith.constant 0 : index
    %c0_6 = arith.constant 0 : index
    %22 = vector.load %arg8[%c0_5, %c0_6] : memref<24x1xf32, #tpu.memory_space<vmem>>, vector<24x1xf32>
    %23 = vector.extract_strided_slice %21 {offsets = [0, 0], sizes = [24, 24], strides = [1, 1]} : vector<24x72xbf16> to vector<24x24xbf16>
    %c0_7 = arith.constant 0 : index
    %c0_8 = arith.constant 0 : index
    %c0_9 = arith.constant 0 : index
    %24 = vector.load %arg2[%c0_7, %c0_8, %c0_9] : memref<1x24x512xbf16, #tpu.memory_space<vmem>>, vector<1x24x512xbf16>
    %25 = vector.shape_cast %24 : vector<1x24x512xbf16> to vector<24x512xbf16>
    %cst = arith.constant dense<0.000000e+00> : vector<24x512xf32>
    %26 = tpu.matmul %23, %25, %cst {dimension_numbers = #tpu.dot_dimension_numbers<[1], [0], [0], [1], [0, 0, 1, 1], [], []>} : vector<24x24xbf16>, vector<24x512xbf16>, vector<24x512xf32> -> vector<24x512xf32>
    %27 = vector.extract_strided_slice %21 {offsets = [0, 24], sizes = [24, 24], strides = [1, 1]} : vector<24x72xbf16> to vector<24x24xbf16>
    %c0_10 = arith.constant 0 : index
    %c0_11 = arith.constant 0 : index
    %c0_12 = arith.constant 0 : index
    %28 = vector.load %arg3[%c0_10, %c0_11, %c0_12] : memref<1x24x512xbf16, #tpu.memory_space<vmem>>, vector<1x24x512xbf16>
    %29 = vector.shape_cast %28 : vector<1x24x512xbf16> to vector<24x512xbf16>
    %cst_13 = arith.constant dense<0.000000e+00> : vector<24x512xf32>
    %30 = tpu.matmul %27, %29, %cst_13 {dimension_numbers = #tpu.dot_dimension_numbers<[1], [0], [0], [1], [0, 0, 1, 1], [], []>} : vector<24x24xbf16>, vector<24x512xbf16>, vector<24x512xf32> -> vector<24x512xf32>
    %31 = arith.addf %26, %30 : vector<24x512xf32>
    %32 = vector.extract_strided_slice %21 {offsets = [0, 48], sizes = [24, 24], strides = [1, 1]} : vector<24x72xbf16> to vector<24x24xbf16>
    %c0_14 = arith.constant 0 : index
    %c0_15 = arith.constant 0 : index
    %c0_16 = arith.constant 0 : index
    %33 = vector.load %arg4[%c0_14, %c0_15, %c0_16] : memref<1x24x512xbf16, #tpu.memory_space<vmem>>, vector<1x24x512xbf16>
    %34 = vector.shape_cast %33 : vector<1x24x512xbf16> to vector<24x512xbf16>
    %cst_17 = arith.constant dense<0.000000e+00> : vector<24x512xf32>
    %35 = tpu.matmul %32, %34, %cst_17 {dimension_numbers = #tpu.dot_dimension_numbers<[1], [0], [0], [1], [0, 0, 1, 1], [], []>} : vector<24x24xbf16>, vector<24x512xbf16>, vector<24x512xf32> -> vector<24x512xf32>
    %36 = arith.addf %31, %35 : vector<24x512xf32>
    %37 = vector.broadcast %22 : vector<24x1xf32> to vector<24x512xf32>
    %38 = arith.addf %36, %37 : vector<24x512xf32>
    %c0_i32_18 = arith.constant 0 : i32
    %39 = arith.cmpi sgt, %arg1, %c0_i32_18 : i32
    %40 = arith.extui %39 : i1 to i32
    %41 = arith.sitofp %40 : i32 to f32
    %c3_i32 = arith.constant 3 : i32
    %42 = arith.cmpi slt, %arg1, %c3_i32 : i32
    %43 = arith.extui %42 : i1 to i32
    %44 = arith.sitofp %43 : i32 to f32
    %c0_19 = arith.constant 0 : index
    %c0_20 = arith.constant 0 : index
    %c0_21 = arith.constant 0 : index
    %c0_22 = arith.constant 0 : index
    %c0_23 = arith.constant 0 : index
    %45 = vector.load %arg5[%c0_19, %c0_20, %c0_21, %c0_22, %c0_23] : memref<1x1x2x72x128xbf16, #tpu.memory_space<vmem>>, vector<1x1x1x72x128xbf16>
    %46 = vector.shape_cast %45 : vector<1x1x1x72x128xbf16> to vector<72x128xbf16>
    %cst_24 = arith.constant dense<0.000000e+00> : vector<24x128xf32>
    %47 = tpu.matmul %21, %46, %cst_24 {dimension_numbers = #tpu.dot_dimension_numbers<[1], [0], [0], [1], [0, 0, 1, 1], [], []>} : vector<24x72xbf16>, vector<72x128xbf16>, vector<24x128xf32> -> vector<24x128xf32>
    %48 = vector.broadcast %22 : vector<24x1xf32> to vector<24x128xf32>
    %49 = arith.addf %47, %48 : vector<24x128xf32>
    %50 = vector.broadcast %41 : f32 to vector<24x128xf32>
    %51 = arith.mulf %49, %50 : vector<24x128xf32>
    %c0_25 = arith.constant 0 : index
    %c0_26 = arith.constant 0 : index
    %c1 = arith.constant 1 : index
    %c0_27 = arith.constant 0 : index
    %c0_28 = arith.constant 0 : index
    %52 = vector.load %arg5[%c0_25, %c0_26, %c1, %c0_27, %c0_28] : memref<1x1x2x72x128xbf16, #tpu.memory_space<vmem>>, vector<1x1x1x72x128xbf16>
    %53 = vector.shape_cast %52 : vector<1x1x1x72x128xbf16> to vector<72x128xbf16>
    %cst_29 = arith.constant dense<0.000000e+00> : vector<24x128xf32>
    %54 = tpu.matmul %21, %53, %cst_29 {dimension_numbers = #tpu.dot_dimension_numbers<[1], [0], [0], [1], [0, 0, 1, 1], [], []>} : vector<24x72xbf16>, vector<72x128xbf16>, vector<24x128xf32> -> vector<24x128xf32>
    %55 = vector.broadcast %22 : vector<24x1xf32> to vector<24x128xf32>
    %56 = arith.addf %54, %55 : vector<24x128xf32>
    %57 = vector.broadcast %44 : f32 to vector<24x128xf32>
    %58 = arith.mulf %56, %57 : vector<24x128xf32>
    %59 = tpu.concatenate %51, %38, %58 in 1 : vector<24x128xf32>, vector<24x512xf32>, vector<24x128xf32> -> vector<24x768xf32>
    %c0_30 = arith.constant 0 : index
    %c0_31 = arith.constant 0 : index
    %60 = vector.load %arg9[%c0_30, %c0_31] : memref<24x9xf32, #tpu.memory_space<vmem>>, vector<24x9xf32>
    %c0_32 = arith.constant 0 : index
    %c0_33 = arith.constant 0 : index
    %61 = vector.load %arg10[%c0_32, %c0_33] : memref<24x1xf32, #tpu.memory_space<vmem>>, vector<24x1xf32>
    %62 = vector.extract_strided_slice %60 {offsets = [0, 4], sizes = [24, 1], strides = [1, 1]} : vector<24x9xf32> to vector<24x1xf32>
    %63 = vector.broadcast %62 : vector<24x1xf32> to vector<24x768xf32>
    %64 = arith.mulf %63, %59 : vector<24x768xf32>
    %65 = vector.broadcast %61 : vector<24x1xf32> to vector<24x768xf32>
    %66 = arith.addf %65, %64 : vector<24x768xf32>
    %67 = vector.extract_strided_slice %60 {offsets = [0, 0], sizes = [24, 1], strides = [1, 1]} : vector<24x9xf32> to vector<24x1xf32>
    %c129_i32 = arith.constant 129 : i32
    %68 = tpu.dynamic_rotate %59 by %c129_i32 dim 1 : vector<24x768xf32>, i32 -> vector<24x768xf32>
    %cst_34 = arith.constant 0.000000e+00 : f32
    %69 = vector.shape_cast %18 : vector<1x768xi1> to vector<1x768xi1>
    %70 = vector.broadcast %69 : vector<1x768xi1> to vector<24x768xi1>
    %71 = vector.broadcast %cst_34 : f32 to vector<24x768xf32>
    %72 = arith.select %70, %68, %71 : vector<24x768xi1>, vector<24x768xf32>
    %73 = vector.broadcast %67 : vector<24x1xf32> to vector<24x768xf32>
    %74 = arith.mulf %73, %72 : vector<24x768xf32>
    %75 = arith.addf %66, %74 : vector<24x768xf32>
    %76 = vector.extract_strided_slice %60 {offsets = [0, 1], sizes = [24, 1], strides = [1, 1]} : vector<24x9xf32> to vector<24x1xf32>
    %c128_i32_35 = arith.constant 128 : i32
    %77 = tpu.dynamic_rotate %59 by %c128_i32_35 dim 1 : vector<24x768xf32>, i32 -> vector<24x768xf32>
    %78 = vector.broadcast %76 : vector<24x1xf32> to vector<24x768xf32>
    %79 = arith.mulf %78, %77 : vector<24x768xf32>
    %80 = arith.addf %75, %79 : vector<24x768xf32>
    %81 = vector.extract_strided_slice %60 {offsets = [0, 2], sizes = [24, 1], strides = [1, 1]} : vector<24x9xf32> to vector<24x1xf32>
    %c127_i32 = arith.constant 127 : i32
    %82 = tpu.dynamic_rotate %59 by %c127_i32 dim 1 : vector<24x768xf32>, i32 -> vector<24x768xf32>
    %cst_36 = arith.constant 0.000000e+00 : f32
    %83 = vector.shape_cast %20 : vector<1x768xi1> to vector<1x768xi1>
    %84 = vector.broadcast %83 : vector<1x768xi1> to vector<24x768xi1>
    %85 = vector.broadcast %cst_36 : f32 to vector<24x768xf32>
    %86 = arith.select %84, %82, %85 : vector<24x768xi1>, vector<24x768xf32>
    %87 = vector.broadcast %81 : vector<24x1xf32> to vector<24x768xf32>
    %88 = arith.mulf %87, %86 : vector<24x768xf32>
    %89 = arith.addf %80, %88 : vector<24x768xf32>
    %90 = vector.extract_strided_slice %60 {offsets = [0, 3], sizes = [24, 1], strides = [1, 1]} : vector<24x9xf32> to vector<24x1xf32>
    %c1_i32_37 = arith.constant 1 : i32
    %91 = tpu.dynamic_rotate %59 by %c1_i32_37 dim 1 : vector<24x768xf32>, i32 -> vector<24x768xf32>
    %cst_38 = arith.constant 0.000000e+00 : f32
    %92 = vector.shape_cast %18 : vector<1x768xi1> to vector<1x768xi1>
    %93 = vector.broadcast %92 : vector<1x768xi1> to vector<24x768xi1>
    %94 = vector.broadcast %cst_38 : f32 to vector<24x768xf32>
    %95 = arith.select %93, %91, %94 : vector<24x768xi1>, vector<24x768xf32>
    %96 = vector.broadcast %90 : vector<24x1xf32> to vector<24x768xf32>
    %97 = arith.mulf %96, %95 : vector<24x768xf32>
    %98 = arith.addf %89, %97 : vector<24x768xf32>
    %99 = vector.extract_strided_slice %60 {offsets = [0, 5], sizes = [24, 1], strides = [1, 1]} : vector<24x9xf32> to vector<24x1xf32>
    %c767_i32 = arith.constant 767 : i32
    %100 = tpu.dynamic_rotate %59 by %c767_i32 dim 1 : vector<24x768xf32>, i32 -> vector<24x768xf32>
    %cst_39 = arith.constant 0.000000e+00 : f32
    %101 = vector.shape_cast %20 : vector<1x768xi1> to vector<1x768xi1>
    %102 = vector.broadcast %101 : vector<1x768xi1> to vector<24x768xi1>
    %103 = vector.broadcast %cst_39 : f32 to vector<24x768xf32>
    %104 = arith.select %102, %100, %103 : vector<24x768xi1>, vector<24x768xf32>
    %105 = vector.broadcast %99 : vector<24x1xf32> to vector<24x768xf32>
    %106 = arith.mulf %105, %104 : vector<24x768xf32>
    %107 = arith.addf %98, %106 : vector<24x768xf32>
    %108 = vector.extract_strided_slice %60 {offsets = [0, 6], sizes = [24, 1], strides = [1, 1]} : vector<24x9xf32> to vector<24x1xf32>
    %c641_i32 = arith.constant 641 : i32
    %109 = tpu.dynamic_rotate %59 by %c641_i32 dim 1 : vector<24x768xf32>, i32 -> vector<24x768xf32>
    %cst_40 = arith.constant 0.000000e+00 : f32
    %110 = vector.shape_cast %18 : vector<1x768xi1> to vector<1x768xi1>
    %111 = vector.broadcast %110 : vector<1x768xi1> to vector<24x768xi1>
    %112 = vector.broadcast %cst_40 : f32 to vector<24x768xf32>
    %113 = arith.select %111, %109, %112 : vector<24x768xi1>, vector<24x768xf32>
    %114 = vector.broadcast %108 : vector<24x1xf32> to vector<24x768xf32>
    %115 = arith.mulf %114, %113 : vector<24x768xf32>
    %116 = arith.addf %107, %115 : vector<24x768xf32>
    %117 = vector.extract_strided_slice %60 {offsets = [0, 7], sizes = [24, 1], strides = [1, 1]} : vector<24x9xf32> to vector<24x1xf32>
    %c640_i32 = arith.constant 640 : i32
    %118 = tpu.dynamic_rotate %59 by %c640_i32 dim 1 : vector<24x768xf32>, i32 -> vector<24x768xf32>
    %119 = vector.broadcast %117 : vector<24x1xf32> to vector<24x768xf32>
    %120 = arith.mulf %119, %118 : vector<24x768xf32>
    %121 = arith.addf %116, %120 : vector<24x768xf32>
    %122 = vector.extract_strided_slice %60 {offsets = [0, 8], sizes = [24, 1], strides = [1, 1]} : vector<24x9xf32> to vector<24x1xf32>
    %c639_i32 = arith.constant 639 : i32
    %123 = tpu.dynamic_rotate %59 by %c639_i32 dim 1 : vector<24x768xf32>, i32 -> vector<24x768xf32>
    %cst_41 = arith.constant 0.000000e+00 : f32
    %124 = vector.shape_cast %20 : vector<1x768xi1> to vector<1x768xi1>
    %125 = vector.broadcast %124 : vector<1x768xi1> to vector<24x768xi1>
    %126 = vector.broadcast %cst_41 : f32 to vector<24x768xf32>
    %127 = arith.select %125, %123, %126 : vector<24x768xi1>, vector<24x768xf32>
    %128 = vector.broadcast %122 : vector<24x1xf32> to vector<24x768xf32>
    %129 = arith.mulf %128, %127 : vector<24x768xf32>
    %130 = arith.addf %121, %129 : vector<24x768xf32>
    %c0_42 = arith.constant 0 : index
    %c0_43 = arith.constant 0 : index
    %c0_44 = arith.constant 0 : index
    %c0_45 = arith.constant 0 : index
    %c0_46 = arith.constant 0 : index
    %131 = vector.load %arg5[%c0_42, %c0_43, %c0_44, %c0_45, %c0_46] : memref<1x1x2x72x128xbf16, #tpu.memory_space<vmem>>, vector<1x1x1x24x128xbf16>
    %132 = vector.shape_cast %131 : vector<1x1x1x24x128xbf16> to vector<24x128xbf16>
    %c0_47 = arith.constant 0 : index
    %c0_48 = arith.constant 0 : index
    %c0_49 = arith.constant 0 : index
    %133 = vector.load %arg2[%c0_47, %c0_48, %c0_49] : memref<1x24x512xbf16, #tpu.memory_space<vmem>>, vector<1x24x512xbf16>
    %134 = vector.shape_cast %133 : vector<1x24x512xbf16> to vector<24x512xbf16>
    %c0_50 = arith.constant 0 : index
    %c0_51 = arith.constant 0 : index
    %c1_52 = arith.constant 1 : index
    %c0_53 = arith.constant 0 : index
    %c0_54 = arith.constant 0 : index
    %135 = vector.load %arg5[%c0_50, %c0_51, %c1_52, %c0_53, %c0_54] : memref<1x1x2x72x128xbf16, #tpu.memory_space<vmem>>, vector<1x1x1x24x128xbf16>
    %136 = vector.shape_cast %135 : vector<1x1x1x24x128xbf16> to vector<24x128xbf16>
    %137 = tpu.concatenate %132, %134, %136 in 1 : vector<24x128xbf16>, vector<24x512xbf16>, vector<24x128xbf16> -> vector<24x768xbf16>
    %138 = arith.extf %137 : vector<24x768xbf16> to vector<24x768xf32>
    %c0_55 = arith.constant 0 : index
    %c0_56 = arith.constant 0 : index
    %139 = vector.load %arg11[%c0_55, %c0_56] : memref<216x24xf32, #tpu.memory_space<vmem>>, vector<216x24xf32>
    %c0_57 = arith.constant 0 : index
    %c0_58 = arith.constant 0 : index
    %c0_59 = arith.constant 0 : index
    %140 = vector.load %arg6[%c0_57, %c0_58, %c0_59] : memref<1x216x1xf32, #tpu.memory_space<vmem>>, vector<1x216x1xf32>
    %141 = vector.shape_cast %140 : vector<1x216x1xf32> to vector<216x1xf32>
    %142 = vector.extract_strided_slice %139 {offsets = [96, 0], sizes = [24, 24], strides = [1, 1]} : vector<216x24xf32> to vector<24x24xf32>
    %cst_60 = arith.constant dense<0.000000e+00> : vector<24x768xf32>
    %143 = tpu.matmul %142, %130, %cst_60 {dimension_numbers = #tpu.dot_dimension_numbers<[1], [0], [0], [1], [0, 0, 1, 1], [], []>} : vector<24x24xf32>, vector<24x768xf32>, vector<24x768xf32> -> vector<24x768xf32>
    %144 = vector.extract_strided_slice %141 {offsets = [96, 0], sizes = [24, 1], strides = [1, 1]} : vector<216x1xf32> to vector<24x1xf32>
    %145 = vector.broadcast %144 : vector<24x1xf32> to vector<24x768xf32>
    %146 = arith.addf %143, %145 : vector<24x768xf32>
    %147 = arith.mulf %138, %146 : vector<24x768xf32>
    %c129_i32_61 = arith.constant 129 : i32
    %148 = tpu.dynamic_rotate %138 by %c129_i32_61 dim 1 : vector<24x768xf32>, i32 -> vector<24x768xf32>
    %cst_62 = arith.constant 0.000000e+00 : f32
    %149 = vector.shape_cast %18 : vector<1x768xi1> to vector<1x768xi1>
    %150 = vector.broadcast %149 : vector<1x768xi1> to vector<24x768xi1>
    %151 = vector.broadcast %cst_62 : f32 to vector<24x768xf32>
    %152 = arith.select %150, %148, %151 : vector<24x768xi1>, vector<24x768xf32>
    %153 = vector.extract_strided_slice %139 {offsets = [0, 0], sizes = [24, 24], strides = [1, 1]} : vector<216x24xf32> to vector<24x24xf32>
    %cst_63 = arith.constant dense<0.000000e+00> : vector<24x768xf32>
    %154 = tpu.matmul %153, %130, %cst_63 {dimension_numbers = #tpu.dot_dimension_numbers<[1], [0], [0], [1], [0, 0, 1, 1], [], []>} : vector<24x24xf32>, vector<24x768xf32>, vector<24x768xf32> -> vector<24x768xf32>
    %155 = vector.extract_strided_slice %141 {offsets = [0, 0], sizes = [24, 1], strides = [1, 1]} : vector<216x1xf32> to vector<24x1xf32>
    %156 = vector.broadcast %155 : vector<24x1xf32> to vector<24x768xf32>
    %157 = arith.addf %154, %156 : vector<24x768xf32>
    %158 = arith.mulf %152, %157 : vector<24x768xf32>
    %159 = arith.addf %147, %158 : vector<24x768xf32>
    %c128_i32_64 = arith.constant 128 : i32
    %160 = tpu.dynamic_rotate %138 by %c128_i32_64 dim 1 : vector<24x768xf32>, i32 -> vector<24x768xf32>
    %161 = vector.extract_strided_slice %139 {offsets = [24, 0], sizes = [24, 24], strides = [1, 1]} : vector<216x24xf32> to vector<24x24xf32>
    %cst_65 = arith.constant dense<0.000000e+00> : vector<24x768xf32>
    %162 = tpu.matmul %161, %130, %cst_65 {dimension_numbers = #tpu.dot_dimension_numbers<[1], [0], [0], [1], [0, 0, 1, 1], [], []>} : vector<24x24xf32>, vector<24x768xf32>, vector<24x768xf32> -> vector<24x768xf32>
    %163 = vector.extract_strided_slice %141 {offsets = [24, 0], sizes = [24, 1], strides = [1, 1]} : vector<216x1xf32> to vector<24x1xf32>
    %164 = vector.broadcast %163 : vector<24x1xf32> to vector<24x768xf32>
    %165 = arith.addf %162, %164 : vector<24x768xf32>
    %166 = arith.mulf %160, %165 : vector<24x768xf32>
    %167 = arith.addf %159, %166 : vector<24x768xf32>
    %c127_i32_66 = arith.constant 127 : i32
    %168 = tpu.dynamic_rotate %138 by %c127_i32_66 dim 1 : vector<24x768xf32>, i32 -> vector<24x768xf32>
    %cst_67 = arith.constant 0.000000e+00 : f32
    %169 = vector.shape_cast %20 : vector<1x768xi1> to vector<1x768xi1>
    %170 = vector.broadcast %169 : vector<1x768xi1> to vector<24x768xi1>
    %171 = vector.broadcast %cst_67 : f32 to vector<24x768xf32>
    %172 = arith.select %170, %168, %171 : vector<24x768xi1>, vector<24x768xf32>
    %173 = vector.extract_strided_slice %139 {offsets = [48, 0], sizes = [24, 24], strides = [1, 1]} : vector<216x24xf32> to vector<24x24xf32>
    %cst_68 = arith.constant dense<0.000000e+00> : vector<24x768xf32>
    %174 = tpu.matmul %173, %130, %cst_68 {dimension_numbers = #tpu.dot_dimension_numbers<[1], [0], [0], [1], [0, 0, 1, 1], [], []>} : vector<24x24xf32>, vector<24x768xf32>, vector<24x768xf32> -> vector<24x768xf32>
    %175 = vector.extract_strided_slice %141 {offsets = [48, 0], sizes = [24, 1], strides = [1, 1]} : vector<216x1xf32> to vector<24x1xf32>
    %176 = vector.broadcast %175 : vector<24x1xf32> to vector<24x768xf32>
    %177 = arith.addf %174, %176 : vector<24x768xf32>
    %178 = arith.mulf %172, %177 : vector<24x768xf32>
    %179 = arith.addf %167, %178 : vector<24x768xf32>
    %c1_i32_69 = arith.constant 1 : i32
    %180 = tpu.dynamic_rotate %138 by %c1_i32_69 dim 1 : vector<24x768xf32>, i32 -> vector<24x768xf32>
    %cst_70 = arith.constant 0.000000e+00 : f32
    %181 = vector.shape_cast %18 : vector<1x768xi1> to vector<1x768xi1>
    %182 = vector.broadcast %181 : vector<1x768xi1> to vector<24x768xi1>
    %183 = vector.broadcast %cst_70 : f32 to vector<24x768xf32>
    %184 = arith.select %182, %180, %183 : vector<24x768xi1>, vector<24x768xf32>
    %185 = vector.extract_strided_slice %139 {offsets = [72, 0], sizes = [24, 24], strides = [1, 1]} : vector<216x24xf32> to vector<24x24xf32>
    %cst_71 = arith.constant dense<0.000000e+00> : vector<24x768xf32>
    %186 = tpu.matmul %185, %130, %cst_71 {dimension_numbers = #tpu.dot_dimension_numbers<[1], [0], [0], [1], [0, 0, 1, 1], [], []>} : vector<24x24xf32>, vector<24x768xf32>, vector<24x768xf32> -> vector<24x768xf32>
    %187 = vector.extract_strided_slice %141 {offsets = [72, 0], sizes = [24, 1], strides = [1, 1]} : vector<216x1xf32> to vector<24x1xf32>
    %188 = vector.broadcast %187 : vector<24x1xf32> to vector<24x768xf32>
    %189 = arith.addf %186, %188 : vector<24x768xf32>
    %190 = arith.mulf %184, %189 : vector<24x768xf32>
    %191 = arith.addf %179, %190 : vector<24x768xf32>
    %c767_i32_72 = arith.constant 767 : i32
    %192 = tpu.dynamic_rotate %138 by %c767_i32_72 dim 1 : vector<24x768xf32>, i32 -> vector<24x768xf32>
    %cst_73 = arith.constant 0.000000e+00 : f32
    %193 = vector.shape_cast %20 : vector<1x768xi1> to vector<1x768xi1>
    %194 = vector.broadcast %193 : vector<1x768xi1> to vector<24x768xi1>
    %195 = vector.broadcast %cst_73 : f32 to vector<24x768xf32>
    %196 = arith.select %194, %192, %195 : vector<24x768xi1>, vector<24x768xf32>
    %197 = vector.extract_strided_slice %139 {offsets = [120, 0], sizes = [24, 24], strides = [1, 1]} : vector<216x24xf32> to vector<24x24xf32>
    %cst_74 = arith.constant dense<0.000000e+00> : vector<24x768xf32>
    %198 = tpu.matmul %197, %130, %cst_74 {dimension_numbers = #tpu.dot_dimension_numbers<[1], [0], [0], [1], [0, 0, 1, 1], [], []>} : vector<24x24xf32>, vector<24x768xf32>, vector<24x768xf32> -> vector<24x768xf32>
    %199 = vector.extract_strided_slice %141 {offsets = [120, 0], sizes = [24, 1], strides = [1, 1]} : vector<216x1xf32> to vector<24x1xf32>
    %200 = vector.broadcast %199 : vector<24x1xf32> to vector<24x768xf32>
    %201 = arith.addf %198, %200 : vector<24x768xf32>
    %202 = arith.mulf %196, %201 : vector<24x768xf32>
    %203 = arith.addf %191, %202 : vector<24x768xf32>
    %c641_i32_75 = arith.constant 641 : i32
    %204 = tpu.dynamic_rotate %138 by %c641_i32_75 dim 1 : vector<24x768xf32>, i32 -> vector<24x768xf32>
    %cst_76 = arith.constant 0.000000e+00 : f32
    %205 = vector.shape_cast %18 : vector<1x768xi1> to vector<1x768xi1>
    %206 = vector.broadcast %205 : vector<1x768xi1> to vector<24x768xi1>
    %207 = vector.broadcast %cst_76 : f32 to vector<24x768xf32>
    %208 = arith.select %206, %204, %207 : vector<24x768xi1>, vector<24x768xf32>
    %209 = vector.extract_strided_slice %139 {offsets = [144, 0], sizes = [24, 24], strides = [1, 1]} : vector<216x24xf32> to vector<24x24xf32>
    %cst_77 = arith.constant dense<0.000000e+00> : vector<24x768xf32>
    %210 = tpu.matmul %209, %130, %cst_77 {dimension_numbers = #tpu.dot_dimension_numbers<[1], [0], [0], [1], [0, 0, 1, 1], [], []>} : vector<24x24xf32>, vector<24x768xf32>, vector<24x768xf32> -> vector<24x768xf32>
    %211 = vector.extract_strided_slice %141 {offsets = [144, 0], sizes = [24, 1], strides = [1, 1]} : vector<216x1xf32> to vector<24x1xf32>
    %212 = vector.broadcast %211 : vector<24x1xf32> to vector<24x768xf32>
    %213 = arith.addf %210, %212 : vector<24x768xf32>
    %214 = arith.mulf %208, %213 : vector<24x768xf32>
    %215 = arith.addf %203, %214 : vector<24x768xf32>
    %c640_i32_78 = arith.constant 640 : i32
    %216 = tpu.dynamic_rotate %138 by %c640_i32_78 dim 1 : vector<24x768xf32>, i32 -> vector<24x768xf32>
    %217 = vector.extract_strided_slice %139 {offsets = [168, 0], sizes = [24, 24], strides = [1, 1]} : vector<216x24xf32> to vector<24x24xf32>
    %cst_79 = arith.constant dense<0.000000e+00> : vector<24x768xf32>
    %218 = tpu.matmul %217, %130, %cst_79 {dimension_numbers = #tpu.dot_dimension_numbers<[1], [0], [0], [1], [0, 0, 1, 1], [], []>} : vector<24x24xf32>, vector<24x768xf32>, vector<24x768xf32> -> vector<24x768xf32>
    %219 = vector.extract_strided_slice %141 {offsets = [168, 0], sizes = [24, 1], strides = [1, 1]} : vector<216x1xf32> to vector<24x1xf32>
    %220 = vector.broadcast %219 : vector<24x1xf32> to vector<24x768xf32>
    %221 = arith.addf %218, %220 : vector<24x768xf32>
    %222 = arith.mulf %216, %221 : vector<24x768xf32>
    %223 = arith.addf %215, %222 : vector<24x768xf32>
    %c639_i32_80 = arith.constant 639 : i32
    %224 = tpu.dynamic_rotate %138 by %c639_i32_80 dim 1 : vector<24x768xf32>, i32 -> vector<24x768xf32>
    %cst_81 = arith.constant 0.000000e+00 : f32
    %225 = vector.shape_cast %20 : vector<1x768xi1> to vector<1x768xi1>
    %226 = vector.broadcast %225 : vector<1x768xi1> to vector<24x768xi1>
    %227 = vector.broadcast %cst_81 : f32 to vector<24x768xf32>
    %228 = arith.select %226, %224, %227 : vector<24x768xi1>, vector<24x768xf32>
    %229 = vector.extract_strided_slice %139 {offsets = [192, 0], sizes = [24, 24], strides = [1, 1]} : vector<216x24xf32> to vector<24x24xf32>
    %cst_82 = arith.constant dense<0.000000e+00> : vector<24x768xf32>
    %230 = tpu.matmul %229, %130, %cst_82 {dimension_numbers = #tpu.dot_dimension_numbers<[1], [0], [0], [1], [0, 0, 1, 1], [], []>} : vector<24x24xf32>, vector<24x768xf32>, vector<24x768xf32> -> vector<24x768xf32>
    %231 = vector.extract_strided_slice %141 {offsets = [192, 0], sizes = [24, 1], strides = [1, 1]} : vector<216x1xf32> to vector<24x1xf32>
    %232 = vector.broadcast %231 : vector<24x1xf32> to vector<24x768xf32>
    %233 = arith.addf %230, %232 : vector<24x768xf32>
    %234 = arith.mulf %228, %233 : vector<24x768xf32>
    %235 = arith.addf %223, %234 : vector<24x768xf32>
    %236 = vector.extract_strided_slice %235 {offsets = [0, 128], sizes = [24, 512], strides = [1, 1]} : vector<24x768xf32> to vector<24x512xf32>
    %c0_83 = arith.constant 0 : index
    %c0_84 = arith.constant 0 : index
    %c0_85 = arith.constant 0 : index
    %237 = vector.load %arg12[%c0_83, %c0_84, %c0_85] : memref<1x24x512xf32, #tpu.memory_space<vmem>>, vector<1x24x512xf32>
    %238 = vector.shape_cast %237 : vector<1x24x512xf32> to vector<24x512xf32>
    %239 = vector.shape_cast %236 : vector<24x512xf32> to vector<1x24x512xf32>
    tpu.vector_store %arg12[%c0_83, %c0_84, %c0_85], %239 {strides = array<i32>} : memref<1x24x512xf32, #tpu.memory_space<vmem>>, vector<1x24x512xf32>,
    return
  }
  func.func @transform_0(%arg0: i32, %arg1: i32) -> (i32, i32, i32) {
    %c0_i32 = arith.constant 0 : i32
    %c0_i32_0 = arith.constant 0 : i32
    return %arg0, %c0_i32, %arg1 : i32, i32, i32
  }
  func.func @transform_1(%arg0: i32, %arg1: i32) -> (i32, i32, i32) {
    %c0_i32 = arith.constant 0 : i32
    %c0_i32_0 = arith.constant 0 : i32
    return %arg0, %c0_i32, %arg1 : i32, i32, i32
  }
  func.func @transform_2(%arg0: i32, %arg1: i32) -> (i32, i32, i32) {
    %c0_i32 = arith.constant 0 : i32
    %c0_i32_0 = arith.constant 0 : i32
    return %arg0, %c0_i32, %arg1 : i32, i32, i32
  }
  func.func @transform_3(%arg0: i32, %arg1: i32) -> (i32, i32, i32, i32, i32) {
    %c0_i32 = arith.constant 0 : i32
    %c0_i32_0 = arith.constant 0 : i32
    %c0_i32_1 = arith.constant 0 : i32
    %c0_i32_2 = arith.constant 0 : i32
    return %arg0, %arg1, %c0_i32, %c0_i32_0, %c0_i32_1 : i32, i32, i32, i32, i32
  }
  func.func @transform_4(%arg0: i32, %arg1: i32) -> (i32, i32, i32) {
    %c0_i32 = arith.constant 0 : i32
    %c0_i32_0 = arith.constant 0 : i32
    %c0_i32_1 = arith.constant 0 : i32
    return %arg0, %c0_i32, %c0_i32_0 : i32, i32, i32
  }
  func.func @transform_5(%arg0: i32, %arg1: i32) -> (i32, i32) {
    %c0_i32 = arith.constant 0 : i32
    %c0_i32_0 = arith.constant 0 : i32
    %c0_i32_1 = arith.constant 0 : i32
    return %c0_i32, %c0_i32_0 : i32, i32
  }
  func.func @transform_6(%arg0: i32, %arg1: i32) -> (i32, i32) {
    %c0_i32 = arith.constant 0 : i32
    %c0_i32_0 = arith.constant 0 : i32
    %c0_i32_1 = arith.constant 0 : i32
    return %c0_i32, %c0_i32_0 : i32, i32
  }
  func.func @transform_7(%arg0: i32, %arg1: i32) -> (i32, i32) {
    %c0_i32 = arith.constant 0 : i32
    %c0_i32_0 = arith.constant 0 : i32
    %c0_i32_1 = arith.constant 0 : i32
    return %c0_i32, %c0_i32_0 : i32, i32
  }
  func.func @transform_8(%arg0: i32, %arg1: i32) -> (i32, i32) {
    %c0_i32 = arith.constant 0 : i32
    %c0_i32_0 = arith.constant 0 : i32
    %c0_i32_1 = arith.constant 0 : i32
    return %c0_i32, %c0_i32_0 : i32, i32
  }
  func.func @transform_9(%arg0: i32, %arg1: i32) -> (i32, i32) {
    %c0_i32 = arith.constant 0 : i32
    %c0_i32_0 = arith.constant 0 : i32
    %c0_i32_1 = arith.constant 0 : i32
    return %c0_i32, %c0_i32_0 : i32, i32
  }
  func.func @transform_10(%arg0: i32, %arg1: i32) -> (i32, i32, i32) {
    %c0_i32 = arith.constant 0 : i32
    %c0_i32_0 = arith.constant 0 : i32
    return %arg0, %c0_i32, %arg1 : i32, i32, i32
  }
}

</mosaic_0001>

<llo_original>
// kernel: tpu_custom_call.1
$region0: #{tpu_custom_call.1}
  #allocation0 [shape = 'u32[]', space=smem, size = 0x4, offset = 0x4, fixed_abs, tag = 'smem constant byte address 0x4 - core index']
  #allocation1 [shape = 'u32[72,128]{1,0:T(1,128)}', space=vmem, size = 0x9000, scoped, tag = 'internal scratch']
  %s0 = inlined_call_operand.hbm [shape: bf16[2,24,2048], index: 0, kind: input, shape index: {}]
  %s1 = inlined_call_operand.hbm [shape: bf16[2,24,2048], index: 1, kind: input, shape index: {}]
  %s2 = inlined_call_operand.hbm [shape: bf16[2,24,2048], index: 2, kind: input, shape index: {}]
  %s3 = inlined_call_operand.vmem [shape: bf16[2,4,2,72,128], index: 3, kind: input, shape index: {}]
  %s4 = inlined_call_operand.vmem [shape: f32[2,216,1], index: 4, kind: input, shape index: {}]
  %s5 = inlined_call_operand.vmem [shape: bf16[24,72], index: 5, kind: input, shape index: {}]
  %s6 = inlined_call_operand.vmem [shape: f32[24,1], index: 6, kind: input, shape index: {}]
  %s7 = inlined_call_operand.vmem [shape: f32[24,9], index: 7, kind: input, shape index: {}]
  %s8 = inlined_call_operand.vmem [shape: f32[24,1], index: 8, kind: input, shape index: {}]
  %s9 = inlined_call_operand.vmem [shape: f32[216,24], index: 9, kind: input, shape index: {}]
  %s10 = inlined_call_operand.hbm [shape: f32[2,24,2048], index: 10, kind: output, shape index: {}]
  %s11 = sld [smem:[#allocation0]]
  $region85: #{tpu_custom_call.1} parent=0
    _
  %s13 = ssub.s32 1, %s11
  %s14 = scalar_select 0, %s13, %s11
  $region1: #{tpu_custom_call.1} parent=0
    #allocation2 [shape = 'u8[49152]{0}', space=vmem, size = 0xc000, scoped, tag = 'input window, operand 0']
    #allocation3 [shape = 's32[2]{0}', space=sflag, size = 0x8, scoped, tag = 'scoped memory for tpu_custom_call.1']
    #allocation4 [shape = 's32[2]{0}', space=sflag, size = 0x8, scoped, tag = 'scoped memory for tpu_custom_call.1']
    #allocation5 [shape = 'u8[49152]{0}', space=vmem, size = 0xc000, scoped, tag = 'input window, operand 1']
    #allocation6 [shape = 's32[2]{0}', space=sflag, size = 0x8, scoped, tag = 'scoped memory for tpu_custom_call.1']
    #allocation7 [shape = 'u8[49152]{0}', space=vmem, size = 0xc000, scoped, tag = 'input window, operand 2']
    #allocation8 [shape = 'u8[98304]{0}', space=vmem, size = 0x18000, scoped, tag = 'output window, operand 0']
    %15 = vsyncpa [#allocation3], 0
    %s16 = scalar_lea.sflag [#allocation3], 1
    %17 = vsyncpa %s16, 0
    %18 = vsyncpa [#allocation6], 0
    %s19 = scalar_lea.sflag [#allocation6], 1
    %20 = vsyncpa %s19, 0
    %21 = vsyncpa [#allocation4], 0
    %s22 = scalar_lea.sflag [#allocation4], 1
    %23 = vsyncpa %s22, 0
    loop: start=0, step=1, limit=10
    $region2: #{tpu_custom_call.1} parent=1 // loop_pre_header
      _
    $region3: #{tpu_custom_call.1} parent=1 // loop_header
      %s25 = sphi 0, %s29
      %p26 = scmp.ge.s32.totalorder %s25, 10
      %s32 = sphi 0, %s44
      %s33 = sphi 0, %s40
      %s34 = sphi 0, %s32
      %s35 = sphi 0, %s33
      %s36 = sphi 0, %s34
      %s37 = sphi 0, %s35
      %s49 = sphi 0, %s51
      %s52 = sphi 0, %s49
      %s53 = sphi 0, %s52
      %s69 = sphi 0, %s53
      %s77 = sphi 0, %s79
      %s80 = sphi 0, %s77
      %s81 = sphi 0, %s80
      %s97 = sphi 0, %s81
      %s105 = sphi 0, %s107
      %s108 = sphi 0, %s105
      %s109 = sphi 0, %s108
      %s125 = sphi 0, %s109
      %s133 = sphi 0, %s135
      %s136 = sphi 0, %s133
      %s137 = sphi 0, %s136
      %s153 = sphi 0, %s137
      %s159 = sphi 0, %s161
      %s162 = sphi 0, %s159
      %s163 = sphi 0, %s162
      %s179 = sphi 0, %s163
      %s183 = sphi 0, %s183
      %s185 = sphi 0, %s183
      %s186 = sphi 0, %s185
      %s200 = sphi 0, %s186
      %s204 = sphi 0, %s204
      %s206 = sphi 0, %s204
      %s207 = sphi 0, %s206
      %s221 = sphi 0, %s207
      %s225 = sphi 0, %s225
      %s227 = sphi 0, %s225
      %s228 = sphi 0, %s227
      %s242 = sphi 0, %s228
      %s246 = sphi 0, %s246
      %s248 = sphi 0, %s246
      %s249 = sphi 0, %s248
      %s263 = sphi 0, %s249
      %s267 = sphi 0, %s267
      %s269 = sphi 0, %s267
      %s270 = sphi 0, %s269
      %s284 = sphi 0, %s270
      %s292 = sphi 0, %s294
      %s295 = sphi 0, %s292
      %s296 = sphi 0, %s295
      %s312 = sphi 0, %s296
    $region4: #{tpu_custom_call.1} parent=1 // loop_header_branch
      %28 = sbr.rel (%p26) target = $region8
    $region5: #{tpu_custom_call.1} parent=1 // loop_body
      %s30 = ssub.s32 %s25, 1
      %s31 = ssub.s32 %s25, 2
      %s38 = sadd.s32 1, %s33
      %p39 = scmp.ge.s32.totalorder %s38, 4
      %s40 = scalar_select %p39, 0, %s38
      %s41 = sadd.s32 1, %s32
      %s42 = scalar_select %p39, %s41, %s32
      %p43 = scmp.ge.s32.totalorder %s42, 2
      %s44 = scalar_select %p43, 0, %s42
      %s45 = ssub.s32 %s32, %s44
      %s46 = ssub.s32 %s33, %s40
      %s47 = sor.u32 %s45, %s46
      %p48 = scmp.eq.s32.totalorder %s47, 0
      %s50 = sadd.s32 %s49, 1
      %s51 = scalar_select %p48, %s49, %s50
      %p54 = pneg %p48
      %p55 = scmp.eq.s32.totalorder %s25, 7
      %p56 = por %p54, %p55
      %p57 = scmp.ne.s32.totalorder %s49, %s52
      %p58 = scmp.eq.s32.totalorder %s25, 0
      %p59 = por %p57, %p58
      %p60 = scmp.ne.s32.totalorder %s49, %s52
      %p61 = scmp.eq.s32.totalorder %s30, 7
      %p62 = por %p60, %p61
      %p63 = scmp.ne.s32.totalorder %s52, %s53
      %p64 = scmp.eq.s32.totalorder %s30, 0
      %p65 = por %p63, %p64
      %p66 = scmp.ne.s32.totalorder %s52, %s53
      %p67 = scmp.eq.s32.totalorder %s31, 7
      %p68 = por %p66, %p67
      %p70 = scmp.ne.s32.totalorder %s53, %s69
      %p71 = scmp.eq.s32.totalorder %s31, 0
      %p72 = por %p70, %p71
      %s73 = ssub.s32 %s32, %s44
      %s74 = ssub.s32 %s33, %s40
      %s75 = sor.u32 %s73, %s74
      %p76 = scmp.eq.s32.totalorder %s75, 0
      %s78 = sadd.s32 %s77, 1
      %s79 = scalar_select %p76, %s77, %s78
      %p82 = pneg %p76
      %p83 = scmp.eq.s32.totalorder %s25, 7
      %p84 = por %p82, %p83
      %p85 = scmp.ne.s32.totalorder %s77, %s80
      %p86 = scmp.eq.s32.totalorder %s25, 0
      %p87 = por %p85, %p86
      %p88 = scmp.ne.s32.totalorder %s77, %s80
      %p89 = scmp.eq.s32.totalorder %s30, 7
      %p90 = por %p88, %p89
      %p91 = scmp.ne.s32.totalorder %s80, %s81
      %p92 = scmp.eq.s32.totalorder %s30, 0
      %p93 = por %p91, %p92
      %p94 = scmp.ne.s32.totalorder %s80, %s81
      %p95 = scmp.eq.s32.totalorder %s31, 7
      %p96 = por %p94, %p95
      %p98 = scmp.ne.s32.totalorder %s81, %s97
      %p99 = scmp.eq.s32.totalorder %s31, 0
      %p100 = por %p98, %p99
      %s101 = ssub.s32 %s32, %s44
      %s102 = ssub.s32 %s33, %s40
      %s103 = sor.u32 %s101, %s102
      %p104 = scmp.eq.s32.totalorder %s103, 0
      %s106 = sadd.s32 %s105, 1
      %s107 = scalar_select %p104, %s105, %s106
      %p110 = pneg %p104
      %p111 = scmp.eq.s32.totalorder %s25, 7
      %p112 = por %p110, %p111
      %p113 = scmp.ne.s32.totalorder %s105, %s108
      %p114 = scmp.eq.s32.totalorder %s25, 0
      %p115 = por %p113, %p114
      %p116 = scmp.ne.s32.totalorder %s105, %s108
      %p117 = scmp.eq.s32.totalorder %s30, 7
      %p118 = por %p116, %p117
      %p119 = scmp.ne.s32.totalorder %s108, %s109
      %p120 = scmp.eq.s32.totalorder %s30, 0
      %p121 = por %p119, %p120
      %p122 = scmp.ne.s32.totalorder %s108, %s109
      %p123 = scmp.eq.s32.totalorder %s31, 7
      %p124 = por %p122, %p123
      %p126 = scmp.ne.s32.totalorder %s109, %s125
      %p127 = scmp.eq.s32.totalorder %s31, 0
      %p128 = por %p126, %p127
      %s129 = ssub.s32 %s32, %s44
      %s130 = ssub.s32 %s33, %s40
      %s131 = sor.u32 %s129, %s130
      %p132 = scmp.eq.s32.totalorder %s131, 0
      %s134 = sadd.s32 %s133, 1
      %s135 = scalar_select %p132, %s133, %s134
      %p138 = pneg %p132
      %p139 = scmp.eq.s32.totalorder %s25, 7
      %p140 = por %p138, %p139
      %p141 = scmp.ne.s32.totalorder %s133, %s136
      %p142 = scmp.eq.s32.totalorder %s25, 0
      %p143 = por %p141, %p142
      %p144 = scmp.ne.s32.totalorder %s133, %s136
      %p145 = scmp.eq.s32.totalorder %s30, 7
      %p146 = por %p144, %p145
      %p147 = scmp.ne.s32.totalorder %s136, %s137
      %p148 = scmp.eq.s32.totalorder %s30, 0
      %p149 = por %p147, %p148
      %p150 = scmp.ne.s32.totalorder %s136, %s137
      %p151 = scmp.eq.s32.totalorder %s31, 7
      %p152 = por %p150, %p151
      %p154 = scmp.ne.s32.totalorder %s137, %s153
      %p155 = scmp.eq.s32.totalorder %s31, 0
      %p156 = por %p154, %p155
      %s157 = ssub.s32 %s32, %s44
      %p158 = scmp.eq.s32.totalorder %s157, 0
      %s160 = sadd.s32 %s159, 1
      %s161 = scalar_select %p158, %s159, %s160
      %p164 = pneg %p158
      %p165 = scmp.eq.s32.totalorder %s25, 7
      %p166 = por %p164, %p165
      %p167 = scmp.ne.s32.totalorder %s159, %s162
      %p168 = scmp.eq.s32.totalorder %s25, 0
      %p169 = por %p167, %p168
      %p170 = scmp.ne.s32.totalorder %s159, %s162
      %p171 = scmp.eq.s32.totalorder %s30, 7
      %p172 = por %p170, %p171
      %p173 = scmp.ne.s32.totalorder %s162, %s163
      %p174 = scmp.eq.s32.totalorder %s30, 0
      %p175 = por %p173, %p174
      %p176 = scmp.ne.s32.totalorder %s162, %s163
      %p177 = scmp.eq.s32.totalorder %s31, 7
      %p178 = por %p176, %p177
      %p180 = scmp.ne.s32.totalorder %s163, %s179
      %p181 = scmp.eq.s32.totalorder %s31, 0
      %p182 = por %p180, %p181
      %s184 = sadd.s32 %s183, 1
      %p187 = scmp.eq.s32.totalorder %s25, 7
      %p188 = scmp.ne.s32.totalorder %s183, %s185
      %p189 = scmp.eq.s32.totalorder %s25, 0
      %p190 = por %p188, %p189
      %p191 = scmp.ne.s32.totalorder %s183, %s185
      %p192 = scmp.eq.s32.totalorder %s30, 7
      %p193 = por %p191, %p192
      %p194 = scmp.ne.s32.totalorder %s185, %s186
      %p195 = scmp.eq.s32.totalorder %s30, 0
      %p196 = por %p194, %p195
      %p197 = scmp.ne.s32.totalorder %s185, %s186
      %p198 = scmp.eq.s32.totalorder %s31, 7
      %p199 = por %p197, %p198
      %p201 = scmp.ne.s32.totalorder %s186, %s200
      %p202 = scmp.eq.s32.totalorder %s31, 0
      %p203 = por %p201, %p202
      %s205 = sadd.s32 %s204, 1
      %p208 = scmp.eq.s32.totalorder %s25, 7
      %p209 = scmp.ne.s32.totalorder %s204, %s206
      %p210 = scmp.eq.s32.totalorder %s25, 0
      %p211 = por %p209, %p210
      %p212 = scmp.ne.s32.totalorder %s204, %s206
      %p213 = scmp.eq.s32.totalorder %s30, 7
      %p214 = por %p212, %p213
      %p215 = scmp.ne.s32.totalorder %s206, %s207
      %p216 = scmp.eq.s32.totalorder %s30, 0
      %p217 = por %p215, %p216
      %p218 = scmp.ne.s32.totalorder %s206, %s207
      %p219 = scmp.eq.s32.totalorder %s31, 7
      %p220 = por %p218, %p219
      %p222 = scmp.ne.s32.totalorder %s207, %s221
      %p223 = scmp.eq.s32.totalorder %s31, 0
      %p224 = por %p222, %p223
      %s226 = sadd.s32 %s225, 1
      %p229 = scmp.eq.s32.totalorder %s25, 7
      %p230 = scmp.ne.s32.totalorder %s225, %s227
      %p231 = scmp.eq.s32.totalorder %s25, 0
      %p232 = por %p230, %p231
      %p233 = scmp.ne.s32.totalorder %s225, %s227
      %p234 = scmp.eq.s32.totalorder %s30, 7
      %p235 = por %p233, %p234
      %p236 = scmp.ne.s32.totalorder %s227, %s228
      %p237 = scmp.eq.s32.totalorder %s30, 0
      %p238 = por %p236, %p237
      %p239 = scmp.ne.s32.totalorder %s227, %s228
      %p240 = scmp.eq.s32.totalorder %s31, 7
      %p241 = por %p239, %p240
      %p243 = scmp.ne.s32.totalorder %s228, %s242
      %p244 = scmp.eq.s32.totalorder %s31, 0
      %p245 = por %p243, %p244
      %s247 = sadd.s32 %s246, 1
      %p250 = scmp.eq.s32.totalorder %s25, 7
      %p251 = scmp.ne.s32.totalorder %s246, %s248
      %p252 = scmp.eq.s32.totalorder %s25, 0
      %p253 = por %p251, %p252
      %p254 = scmp.ne.s32.totalorder %s246, %s248
      %p255 = scmp.eq.s32.totalorder %s30, 7
      %p256 = por %p254, %p255
      %p257 = scmp.ne.s32.totalorder %s248, %s249
      %p258 = scmp.eq.s32.totalorder %s30, 0
      %p259 = por %p257, %p258
      %p260 = scmp.ne.s32.totalorder %s248, %s249
      %p261 = scmp.eq.s32.totalorder %s31, 7
      %p262 = por %p260, %p261
      %p264 = scmp.ne.s32.totalorder %s249, %s263
      %p265 = scmp.eq.s32.totalorder %s31, 0
      %p266 = por %p264, %p265
      %s268 = sadd.s32 %s267, 1
      %p271 = scmp.eq.s32.totalorder %s25, 7
      %p272 = scmp.ne.s32.totalorder %s267, %s269
      %p273 = scmp.eq.s32.totalorder %s25, 0
      %p274 = por %p272, %p273
      %p275 = scmp.ne.s32.totalorder %s267, %s269
      %p276 = scmp.eq.s32.totalorder %s30, 7
      %p277 = por %p275, %p276
      %p278 = scmp.ne.s32.totalorder %s269, %s270
      %p279 = scmp.eq.s32.totalorder %s30, 0
      %p280 = por %p278, %p279
      %p281 = scmp.ne.s32.totalorder %s269, %s270
      %p282 = scmp.eq.s32.totalorder %s31, 7
      %p283 = por %p281, %p282
      %p285 = scmp.ne.s32.totalorder %s270, %s284
      %p286 = scmp.eq.s32.totalorder %s31, 0
      %p287 = por %p285, %p286
      %s288 = ssub.s32 %s32, %s44
      %s289 = ssub.s32 %s33, %s40
      %s290 = sor.u32 %s288, %s289
      %p291 = scmp.eq.s32.totalorder %s290, 0
      %s293 = sadd.s32 %s292, 1
      %s294 = scalar_select %p291, %s292, %s293
      %p297 = pneg %p291
      %p298 = scmp.eq.s32.totalorder %s25, 7
      %p299 = por %p297, %p298
      %p300 = scmp.ne.s32.totalorder %s292, %s295
      %p301 = scmp.eq.s32.totalorder %s25, 0
      %p302 = por %p300, %p301
      %p303 = scmp.ne.s32.totalorder %s292, %s295
      %p304 = scmp.eq.s32.totalorder %s30, 7
      %p305 = por %p303, %p304
      %p306 = scmp.ne.s32.totalorder %s295, %s296
      %p307 = scmp.eq.s32.totalorder %s30, 0
      %p308 = por %p306, %p307
      %p309 = scmp.ne.s32.totalorder %s295, %s296
      %p310 = scmp.eq.s32.totalorder %s31, 7
      %p311 = por %p309, %p310
      %p313 = scmp.ne.s32.totalorder %s296, %s312
      %p314 = scmp.eq.s32.totalorder %s31, 0
      %p315 = por %p313, %p314
      %p316 = scmp.le.s32.totalorder 1, %s25
      %p317 = scmp.lt.s32.totalorder %s25, 9
      %p318 = pnand %p316, %p317
      %p319 = pneg %p318
      // Predicated region
      $region9: #{tpu_custom_call.1} parent=5 // pred_check
        _
      $region10: #{tpu_custom_call.1} parent=5 // pred_check_branch
        %321 = sbr.rel (%p318) target = $region12
      $region11: #{tpu_custom_call.1} parent=5 // pred_region
        %s322 = ssub.s32 %s25, 1
        // Predicated region
        $region13: #{tpu_custom_call.1} parent=11 // pred_check
          %p323 = pneg %p196
        $region14: #{tpu_custom_call.1} parent=11 // pred_check_branch
          %325 = sbr.rel (%p323) target = $region16
        $region15: #{tpu_custom_call.1} parent=11 // pred_region
          _
        $region16: #{tpu_custom_call.1} parent=11 // pred_fallthru
          _
        // Predicated region
        $region17: #{tpu_custom_call.1} parent=11 // pred_check
          %p326 = pneg %p217
        $region18: #{tpu_custom_call.1} parent=11 // pred_check_branch
          %328 = sbr.rel (%p326) target = $region20
        $region19: #{tpu_custom_call.1} parent=11 // pred_region
          _
        $region20: #{tpu_custom_call.1} parent=11 // pred_fallthru
          _
        // Predicated region
        $region21: #{tpu_custom_call.1} parent=11 // pred_check
          %p329 = pneg %p238
        $region22: #{tpu_custom_call.1} parent=11 // pred_check_branch
          %331 = sbr.rel (%p329) target = $region24
        $region23: #{tpu_custom_call.1} parent=11 // pred_region
          _
        $region24: #{tpu_custom_call.1} parent=11 // pred_fallthru
          _
        // Predicated region
        $region25: #{tpu_custom_call.1} parent=11 // pred_check
          %p332 = pneg %p259
        $region26: #{tpu_custom_call.1} parent=11 // pred_check_branch
          %334 = sbr.rel (%p332) target = $region28
        $region27: #{tpu_custom_call.1} parent=11 // pred_region
          _
        $region28: #{tpu_custom_call.1} parent=11 // pred_fallthru
          _
        // Predicated region
        $region29: #{tpu_custom_call.1} parent=11 // pred_check
          %p335 = pneg %p280
        $region30: #{tpu_custom_call.1} parent=11 // pred_check_branch
          %337 = sbr.rel (%p335) target = $region32
        $region31: #{tpu_custom_call.1} parent=11 // pred_region
          _
        $region32: #{tpu_custom_call.1} parent=11 // pred_fallthru
          _
      $region12: #{tpu_custom_call.1} parent=5 // pred_fallthru
        _
      %p338 = scmp.lt.s32.totalorder %s25, 8
      // Predicated region
      $region33: #{tpu_custom_call.1} parent=5 // pred_check
        %p339 = pneg %p338
      $region34: #{tpu_custom_call.1} parent=5 // pred_check_branch
        %341 = sbr.rel (%p339) target = $region36
      $region35: #{tpu_custom_call.1} parent=5 // pred_region
        // Predicated region
        $region37: #{tpu_custom_call.1} parent=35 // pred_check
          %p342 = pneg %p59
        $region38: #{tpu_custom_call.1} parent=35 // pred_check_branch
          %344 = sbr.rel (%p342) target = $region40
        $region39: #{tpu_custom_call.1} parent=35 // pred_region
          %s345 = sand.u32 %s49, 1
          %s346 = scalar_lea.sflag [#allocation3], %s345
          %s347 = sand.u32 %s49, 1
          %s348 = smul.addr %s347, 48
          %s349 = scalar_lea.vmem [#allocation2], %s348
          %s350 = smul.u32 4, %s33
          %352 = vsyncadd %s346, 0
          %s353 = smul.addr %s32, 48
          %s354 = sadd.s32 %s350, %s353
          %s355 = smul.addr %s354, 4
          %s356 = scalar_lea.hbm %s0, %s355
          %s357 = sshll.u32 %s356, 4
          %s358 = int_to_ptr.hbm [resolvable:$true] %s357
          %s359 = sshll.u32 %s349, 4
          %s360 = int_to_ptr.vmem [resolvable:$true] %s359
          %365 = dma.hbm_to_vmem [thread:$0]  %s358, 768, %s360, %s346, 1024, 256, 16
        $region40: #{tpu_custom_call.1} parent=35 // pred_fallthru
          _
        // Predicated region
        $region41: #{tpu_custom_call.1} parent=35 // pred_check
          %p366 = pneg %p87
        $region42: #{tpu_custom_call.1} parent=35 // pred_check_branch
          %368 = sbr.rel (%p366) target = $region44
        $region43: #{tpu_custom_call.1} parent=35 // pred_region
          %s369 = sand.u32 %s25, 1
          %s370 = scalar_lea.sflag [#allocation6], %s369
          %s371 = sand.u32 %s77, 1
          %s372 = smul.addr %s371, 48
          %s373 = scalar_lea.vmem [#allocation5], %s372
          %s374 = smul.u32 4, %s33
          %376 = vsyncadd %s370, 0
          %s377 = smul.addr %s32, 48
          %s378 = sadd.s32 %s374, %s377
          %s379 = smul.addr %s378, 4
          %s380 = scalar_lea.hbm %s1, %s379
          %s381 = sshll.u32 %s380, 4
          %s382 = int_to_ptr.hbm [resolvable:$true] %s381
          %s383 = sshll.u32 %s373, 4
          %s384 = int_to_ptr.vmem [resolvable:$true] %s383
          %389 = dma.hbm_to_vmem [thread:$0]  %s382, 768, %s384, %s370, 1024, 256, 16
        $region44: #{tpu_custom_call.1} parent=35 // pred_fallthru
          _
        // Predicated region
        $region45: #{tpu_custom_call.1} parent=35 // pred_check
          %p390 = pneg %p115
        $region46: #{tpu_custom_call.1} parent=35 // pred_check_branch
          %392 = sbr.rel (%p390) target = $region48
        $region47: #{tpu_custom_call.1} parent=35 // pred_region
          %s393 = sand.u32 %s25, 1
          %s394 = scalar_lea.sflag [#allocation6], %s393
          %s395 = sand.u32 %s105, 1
          %s396 = smul.addr %s395, 48
          %s397 = scalar_lea.vmem [#allocation7], %s396
          %s398 = smul.u32 4, %s33
          %400 = vsyncadd %s394, 0
          %s401 = smul.addr %s32, 48
          %s402 = sadd.s32 %s398, %s401
          %s403 = smul.addr %s402, 4
          %s404 = scalar_lea.hbm %s2, %s403
          %s405 = sshll.u32 %s404, 4
          %s406 = int_to_ptr.hbm [resolvable:$true] %s405
          %s407 = sshll.u32 %s397, 4
          %s408 = int_to_ptr.vmem [resolvable:$true] %s407
          %413 = dma.hbm_to_vmem [thread:$0]  %s406, 768, %s408, %s394, 1024, 256, 16
        $region48: #{tpu_custom_call.1} parent=35 // pred_fallthru
          _
        // Predicated region
        $region49: #{tpu_custom_call.1} parent=35 // pred_check
          %p414 = pneg %p143
        $region50: #{tpu_custom_call.1} parent=35 // pred_check_branch
          %416 = sbr.rel (%p414) target = $region52
        $region51: #{tpu_custom_call.1} parent=35 // pred_region
          %p417 = scmp.lt.s32.totalorder %s32, 1
          %s418 = scalar_select %p417, %s32, 1
          %p419 = scmp.lt.s32.totalorder %s33, 3
          %s420 = scalar_select %p419, %s33, 3
          %s421 = smul.addr %s420, 18
          %s422 = smul.addr %s418, 72
          %s423 = sadd.s32 %s421, %s422
          %s424 = smul.addr %s423, 4
          %s425 = scalar_lea.vmem %s3, %s424
        $region52: #{tpu_custom_call.1} parent=35 // pred_fallthru
          _
        // Predicated region
        $region53: #{tpu_custom_call.1} parent=35 // pred_check
          %p426 = pneg %p169
        $region54: #{tpu_custom_call.1} parent=35 // pred_check_branch
          %428 = sbr.rel (%p426) target = $region56
        $region55: #{tpu_custom_call.1} parent=35 // pred_region
          %p429 = scmp.lt.s32.totalorder %s32, 1
          %s430 = scalar_select %p429, %s32, 1
          %s431 = smul.addr %s430, 27
          %s432 = smul.addr %s431, 8
          %s433 = scalar_lea.vmem %s4, %s432
        $region56: #{tpu_custom_call.1} parent=35 // pred_fallthru
          _
      $region36: #{tpu_custom_call.1} parent=5 // pred_fallthru
        _
      %p434 = scmp.le.s32.totalorder 1, %s25
      %p435 = scmp.lt.s32.totalorder %s25, 9
      %p436 = pnand %p434, %p435
      %p437 = pneg %p436
      // Predicated region
      $region57: #{tpu_custom_call.1} parent=5 // pred_check
        _
      $region58: #{tpu_custom_call.1} parent=5 // pred_check_branch
        %439 = sbr.rel (%p436) target = $region60
      $region59: #{tpu_custom_call.1} parent=5 // pred_region
        %s440 = ssub.s32 %s25, 1
        %s441 = sand.u32 %s52, 1
        %s442 = scalar_lea.sflag [#allocation3], %s441
        %s443 = sand.u32 %s52, 1
        %s444 = smul.addr %s443, 48
        %s445 = scalar_lea.vmem [#allocation2], %s444
        // Predicated region
        $region61: #{tpu_custom_call.1} parent=59 // pred_check
          %p446 = pneg %p65
        $region62: #{tpu_custom_call.1} parent=59 // pred_check_branch
          %448 = sbr.rel (%p446) target = $region64
        $region63: #{tpu_custom_call.1} parent=59 // pred_region
          %450 = dma.done %s442, 768
        $region64: #{tpu_custom_call.1} parent=59 // pred_fallthru
          _
        %s451 = sand.u32 %s30, 1
        %s452 = scalar_lea.sflag [#allocation6], %s451
        %s453 = sand.u32 %s80, 1
        %s454 = smul.addr %s453, 48
        %s455 = scalar_lea.vmem [#allocation5], %s454
        // Predicated region
        $region65: #{tpu_custom_call.1} parent=59 // pred_check
          %p456 = pneg %p93
        $region66: #{tpu_custom_call.1} parent=59 // pred_check_branch
          %458 = sbr.rel (%p456) target = $region68
        $region67: #{tpu_custom_call.1} parent=59 // pred_region
          %460 = dma.done %s452, 768
        $region68: #{tpu_custom_call.1} parent=59 // pred_fallthru
          _
        %s461 = sand.u32 %s30, 1
        %s462 = scalar_lea.sflag [#allocation6], %s461
        %s463 = sand.u32 %s108, 1
        %s464 = smul.addr %s463, 48
        %s465 = scalar_lea.vmem [#allocation7], %s464
        // Predicated region
        $region69: #{tpu_custom_call.1} parent=59 // pred_check
          %p466 = pneg %p121
        $region70: #{tpu_custom_call.1} parent=59 // pred_check_branch
          %468 = sbr.rel (%p466) target = $region72
        $region71: #{tpu_custom_call.1} parent=59 // pred_region
          %470 = dma.done %s462, 768
        $region72: #{tpu_custom_call.1} parent=59 // pred_fallthru
          _
        %s471 = sand.u32 %s52, 1
        %s472 = scalar_lea.sflag [#allocation3], %s471
        %s473 = sand.u32 %s52, 1
        %s474 = smul.addr %s473, 48
        %s475 = scalar_lea.vmem [#allocation2], %s474
        %p476 = pneg %p65
        %p477 = pneg %p62
        %s478 = sand.u32 %s30, 1
        %s479 = scalar_lea.sflag [#allocation6], %s478
        %s480 = sand.u32 %s80, 1
        %s481 = smul.addr %s480, 48
        %s482 = scalar_lea.vmem [#allocation5], %s481
        %p483 = pneg %p93
        %p484 = pneg %p90
        %s485 = sand.u32 %s30, 1
        %s486 = scalar_lea.sflag [#allocation6], %s485
        %s487 = sand.u32 %s108, 1
        %s488 = smul.addr %s487, 48
        %s489 = scalar_lea.vmem [#allocation7], %s488
        %p490 = pneg %p121
        %p491 = pneg %p118
        %p492 = scmp.lt.s32.totalorder %s34, 1
        %s493 = scalar_select %p492, %s34, 1
        %p494 = scmp.lt.s32.totalorder %s35, 3
        %s495 = scalar_select %p494, %s35, 3
        %s496 = smul.addr %s495, 18
        %s497 = smul.addr %s493, 72
        %s498 = sadd.s32 %s496, %s497
        %s499 = smul.addr %s498, 4
        %s500 = scalar_lea.vmem %s3, %s499
        %p501 = pneg %p149
        %p502 = pneg %p146
        %p503 = scmp.lt.s32.totalorder %s34, 1
        %s504 = scalar_select %p503, %s34, 1
        %s505 = smul.addr %s504, 27
        %s506 = smul.addr %s505, 8
        %s507 = scalar_lea.vmem %s4, %s506
        %p508 = pneg %p175
        %p509 = pneg %p172
        %p510 = pneg %p196
        %p511 = pneg %p193
        %p512 = pneg %p217
        %p513 = pneg %p214
        %p514 = pneg %p238
        %p515 = pneg %p235
        %p516 = pneg %p259
        %p517 = pneg %p256
        %p518 = pneg %p280
        %p519 = pneg %p277
        %p520 = pneg %p308
        %p521 = pneg %p305
        %s522 = sand.u32 %s295, 1
        %s523 = scalar_lea.sflag [#allocation4], %s522
        %s524 = sand.u32 %s295, 1
        %s525 = smul.addr %s524, 96
        %s526 = scalar_lea.vmem [#allocation8], %s525
        %s527 = smul.u32 4, %s35
        %s528 = smul.u32 4, %s35
        %s529 = smul.u32 4, %s35
        %p530 = scmp.lt.s32.totalorder %s34, 1
        %s531 = scalar_select %p530, %s34, 1
        %p532 = scmp.lt.s32.totalorder %s35, 3
        %s533 = scalar_select %p532, %s35, 3
        %s534 = smul.addr %s533, 18
        %s535 = smul.addr %s531, 72
        %s536 = sadd.s32 %s534, %s535
        %s537 = smul.addr %s536, 4
        %s538 = scalar_lea.vmem %s3, %s537
        %p539 = scmp.lt.s32.totalorder %s34, 1
        %s540 = scalar_select %p539, %s34, 1
        %s541 = smul.addr %s540, 27
        %s542 = smul.addr %s541, 8
        %s543 = scalar_lea.vmem %s4, %s542
        %s544 = smul.u32 4, %s35
        %v546 = vlaneseq
        %v547 = vand.u32 %v546, 127
        %v548 = vadd.s32 %v547, 128
        %v549 = vadd.s32 %v547, 256
        %v550 = vadd.s32 %v547, 384
        %v551 = vadd.s32 %v547, 512
        %vm552 = vcmp.lt.s32.totalorder %v548, 0
        %v553 = vsub.s32 0, %v548
        %v554 = vsel %vm552, %v553, %v548
        %v555 = vshrl.u32 %v554, 7
        %v556 = vand.u32 %v554, 127
        %v557 = vsub.s32 0, %v556
        %v558 = vsel %vm552, %v557, %v556
        %vm559 = vcmp.lt.s32.totalorder %v549, 0
        %v560 = vsub.s32 0, %v549
        %v561 = vsel %vm559, %v560, %v549
        %v562 = vshrl.u32 %v561, 7
        %v563 = vand.u32 %v561, 127
        %v564 = vsub.s32 0, %v563
        %v565 = vsel %vm559, %v564, %v563
        %vm566 = vcmp.lt.s32.totalorder %v550, 0
        %v567 = vsub.s32 0, %v550
        %v568 = vsel %vm566, %v567, %v550
        %v569 = vshrl.u32 %v568, 7
        %v570 = vand.u32 %v568, 127
        %v571 = vsub.s32 0, %v570
        %v572 = vsel %vm566, %v571, %v570
        %vm573 = vcmp.lt.s32.totalorder %v551, 0
        %v574 = vsub.s32 0, %v551
        %v575 = vsel %vm573, %v574, %v551
        %v576 = vshrl.u32 %v575, 7
        %v577 = vand.u32 %v575, 127
        %v578 = vsub.s32 0, %v577
        %v579 = vsel %vm573, %v578, %v577
        %vm580 = vcmp.ne.s32.totalorder %v558, 0
        %vm581 = vcmp.ne.s32.totalorder %v565, 0
        %vm582 = vcmp.ne.s32.totalorder %v572, 0
        %vm583 = vcmp.ne.s32.totalorder %v579, 0
        %vm584 = vcmp.lt.s32.totalorder %v558, 0
        %vm585 = vcmp.lt.s32.totalorder %v565, 0
        %vm586 = vcmp.lt.s32.totalorder %v572, 0
        %vm587 = vcmp.lt.s32.totalorder %v579, 0
        %vm588 = vmand %vm584, %vm580
        %vm589 = vmand %vm585, %vm581
        %vm590 = vmand %vm586, %vm582
        %vm591 = vmand %vm587, %vm583
        %v592 = vadd.s32 %v558, 128
        %v593 = vadd.s32 %v565, 128
        %v594 = vadd.s32 %v572, 128
        %v595 = vadd.s32 %v579, 128
        %v596 = vsel %vm588, %v592, %v558
        %v597 = vsel %vm589, %v593, %v565
        %v598 = vsel %vm590, %v594, %v572
        %v599 = vsel %vm591, %v595, %v579
        %vm600 = vcmp.ge.s32.totalorder %v596, 1
        %vm601 = vcmp.ge.s32.totalorder %v597, 1
        %vm602 = vcmp.ge.s32.totalorder %v598, 1
        %vm603 = vcmp.ge.s32.totalorder %v599, 1
        %vm604 = vcmp.le.s32.totalorder %v596, 126
        %vm605 = vcmp.le.s32.totalorder %v597, 126
        %vm606 = vcmp.le.s32.totalorder %v598, 126
        %vm607 = vcmp.le.s32.totalorder %v599, 126
        %v608 = vld [vmem:[%s5] sm:$0xf]
        %v609 = vld [vmem:[%s5 + $0x4] sm:$0xf]
        %v610 = vld [vmem:[%s5 + $0x8] sm:$0xf]
        %v611 = vld [vmem:[%s6] sm:$0xff]
        %v612 = vld [vmem:[%s6 + $0x8] sm:$0xff]
        %v613 = vld [vmem:[%s6 + $0x10] sm:$0xff]
        %v614 = vld [vmem:[%s445] sm:$0xff]
        %v615 = vld [vmem:[%s445 + $0x8] sm:$0xff]
        %v616 = vld [vmem:[%s445 + $0x10] sm:$0xff]
        %v617 = vld [vmem:[%s445 + $0x18] sm:$0xff]
        %v618 = vld [vmem:[%s445 + $0x20] sm:$0xff]
        %v619 = vld [vmem:[%s445 + $0x28] sm:$0xff]
        %v620 = vld [vmem:[%s455] sm:$0xff]
        %v621 = vld [vmem:[%s455 + $0x8] sm:$0xff]
        %v622 = vld [vmem:[%s455 + $0x10] sm:$0xff]
        %v623 = vld [vmem:[%s455 + $0x18] sm:$0xff]
        %v624 = vld [vmem:[%s455 + $0x20] sm:$0xff]
        %v625 = vld [vmem:[%s455 + $0x28] sm:$0xff]
        %v629 = vunpack.c.l.b16 %v608
        %v630 = vunpack.c.l.b16 %v609
        %v631 = vunpack.c.l.b16 %v610
        %v632 = vpack.c.b16 %v630, %v629
        %v633 = vpack.c.b16 %v631, %v631
        %634 = vrot.lane.b32.xlu0 %v632, 104
        %v635 = vpop.permute.xlu0 %634
        %636 = vrot.lane.b32.xlu0 %v633, 104
        %v637 = vpop.permute.xlu0 %636
        %v644 = vunpack.c.l.b16 %v620
        %v645 = vunpack.c.h.b16 %v620
        %v646 = vunpack.c.l.b16 %v621
        %v647 = vunpack.c.h.b16 %v621
        %v648 = vunpack.c.l.b16 %v622
        %v649 = vunpack.c.h.b16 %v622
        %v650 = vunpack.c.l.b16 %v623
        %v651 = vunpack.c.h.b16 %v623
        %v652 = vunpack.c.l.b16 %v624
        %v653 = vunpack.c.h.b16 %v624
        %v654 = vunpack.c.l.b16 %v625
        %v655 = vunpack.c.h.b16 %v625
        %v656 = vpack.c.b16 %v648, %v644
        %v657 = vpack.c.b16 %v649, %v645
        %v658 = vpack.c.b16 %v650, %v646
        %v659 = vpack.c.b16 %v651, %v647
        %v660 = vpack.c.b16 %v652, %v652
        %v661 = vpack.c.b16 %v653, %v653
        %v662 = vpack.c.b16 %v654, %v654
        %v663 = vpack.c.b16 %v655, %v655
        %vm668 = vcmask 195584
        %v670 = vsel %vm668, %v635, 0
        %v673 = vsel %vm668, %v637, 0
        %vm675 = vcmask 1043456
        %v677 = vsel %vm675, %v660, 0
        %v680 = vsel %vm675, %v661, 0
        %v683 = vsel %vm675, %v662, 0
        %v686 = vsel %vm675, %v663, 0
        %688 = vmatpush.bf16.msra.mxu0 0
        %689 = vmatpush.bf16.msra.mxu0 0
        %690 = vmatpush.bf16.msra.mxu0 0
        %691 = vmatpush.bf16.msra.mxu0 0
        %692 = vmatpush.bf16.msra.mxu0 0
        %693 = vmatpush.bf16.msra.mxu0 0
        %694 = vmatpush.bf16.msra.mxu0 %v677
        %695 = vmatpush.bf16.msra.mxu0 %v656
        %696 = vmatmul.bf16.gmra.mxu0 %v670
        %v697 = vpop.f32.mrf.mxu0
        %v698 = vadd.f32 0.0, %v697
        %v699 = vpop.f32.mrf.mxu0
        %v700 = vadd.f32 0.0, %v699
        %701 = vmatmul.bf16.gmra.mxu0 %v673
        %v702 = vpop.f32.mrf.mxu0
        %v703 = vadd.f32 0.0, %v702
        %v704 = vpop.f32.mrf.mxu0
        %705 = vdwg.mxu0
        %706 = vmatpush.bf16.msra.mxu0 0
        %707 = vmatpush.bf16.msra.mxu0 0
        %708 = vmatpush.bf16.msra.mxu0 0
        %709 = vmatpush.bf16.msra.mxu0 0
        %710 = vmatpush.bf16.msra.mxu0 0
        %711 = vmatpush.bf16.msra.mxu0 0
        %712 = vmatpush.bf16.msra.mxu0 %v680
        %713 = vmatpush.bf16.msra.mxu0 %v657
        %714 = vmatmul.bf16.gmra.mxu0 %v670
        %v715 = vpop.f32.mrf.mxu0
        %v716 = vadd.f32 0.0, %v715
        %v717 = vpop.f32.mrf.mxu0
        %v718 = vadd.f32 0.0, %v717
        %719 = vmatmul.bf16.gmra.mxu0 %v673
        %v720 = vpop.f32.mrf.mxu0
        %v721 = vadd.f32 0.0, %v720
        %v722 = vpop.f32.mrf.mxu0
        %723 = vdwg.mxu0
        %724 = vmatpush.bf16.msra.mxu0 0
        %725 = vmatpush.bf16.msra.mxu0 0
        %726 = vmatpush.bf16.msra.mxu0 0
        %727 = vmatpush.bf16.msra.mxu0 0
        %728 = vmatpush.bf16.msra.mxu0 0
        %729 = vmatpush.bf16.msra.mxu0 0
        %730 = vmatpush.bf16.msra.mxu0 %v683
        %731 = vmatpush.bf16.msra.mxu0 %v658
        %732 = vmatmul.bf16.gmra.mxu0 %v670
        %v733 = vpop.f32.mrf.mxu0
        %v734 = vadd.f32 0.0, %v733
        %v735 = vpop.f32.mrf.mxu0
        %v736 = vadd.f32 0.0, %v735
        %737 = vmatmul.bf16.gmra.mxu0 %v673
        %v738 = vpop.f32.mrf.mxu0
        %v739 = vadd.f32 0.0, %v738
        %v740 = vpop.f32.mrf.mxu0
        %741 = vdwg.mxu0
        %742 = vmatpush.bf16.msra.mxu0 0
        %743 = vmatpush.bf16.msra.mxu0 0
        %744 = vmatpush.bf16.msra.mxu0 0
        %745 = vmatpush.bf16.msra.mxu0 0
        %746 = vmatpush.bf16.msra.mxu0 0
        %747 = vmatpush.bf16.msra.mxu0 0
        %748 = vmatpush.bf16.msra.mxu0 %v686
        %749 = vmatpush.bf16.msra.mxu0 %v659
        %750 = vmatmul.bf16.gmra.mxu0 %v670
        %v751 = vpop.f32.mrf.mxu0
        %v752 = vadd.f32 0.0, %v751
        %v753 = vpop.f32.mrf.mxu0
        %v754 = vadd.f32 0.0, %v753
        %755 = vmatmul.bf16.gmra.mxu0 %v673
        %v756 = vpop.f32.mrf.mxu0
        %v757 = vadd.f32 0.0, %v756
        %v758 = vpop.f32.mrf.mxu0
        %759 = vdwg.mxu0
        %v766 = vunpack.c.l.b16 %v614
        %v767 = vunpack.c.h.b16 %v614
        %v768 = vunpack.c.l.b16 %v615
        %v769 = vunpack.c.h.b16 %v615
        %v770 = vunpack.c.l.b16 %v616
        %v771 = vunpack.c.h.b16 %v616
        %v772 = vunpack.c.l.b16 %v617
        %v773 = vunpack.c.h.b16 %v617
        %v774 = vunpack.c.l.b16 %v618
        %v775 = vunpack.c.h.b16 %v618
        %v776 = vunpack.c.l.b16 %v619
        %v777 = vunpack.c.h.b16 %v619
        %v778 = vpack.c.b16 %v770, %v766
        %v779 = vpack.c.b16 %v771, %v767
        %v780 = vpack.c.b16 %v772, %v768
        %v781 = vpack.c.b16 %v773, %v769
        %v782 = vpack.c.b16 %v774, %v774
        %v783 = vpack.c.b16 %v775, %v775
        %v784 = vpack.c.b16 %v776, %v776
        %v785 = vpack.c.b16 %v777, %v777
        %v791 = vsel %vm668, %v632, 0
        %v794 = vsel %vm668, %v633, 0
        %v797 = vsel %vm675, %v782, 0
        %v800 = vsel %vm675, %v783, 0
        %v803 = vsel %vm675, %v784, 0
        %v806 = vsel %vm675, %v785, 0
        %808 = vmatpush.bf16.msra.mxu0 0
        %809 = vmatpush.bf16.msra.mxu0 0
        %810 = vmatpush.bf16.msra.mxu0 0
        %811 = vmatpush.bf16.msra.mxu0 0
        %812 = vmatpush.bf16.msra.mxu0 0
        %813 = vmatpush.bf16.msra.mxu0 0
        %814 = vmatpush.bf16.msra.mxu0 %v797
        %815 = vmatpush.bf16.msra.mxu0 %v778
        %816 = vmatmul.bf16.gmra.mxu0 %v791
        %v817 = vpop.f32.mrf.mxu0
        %v818 = vadd.f32 %v698, %v817
        %v819 = vpop.f32.mrf.mxu0
        %v820 = vadd.f32 %v700, %v819
        %821 = vmatmul.bf16.gmra.mxu0 %v794
        %v822 = vpop.f32.mrf.mxu0
        %v823 = vadd.f32 %v703, %v822
        %v824 = vpop.f32.mrf.mxu0
        %825 = vdwg.mxu0
        %826 = vmatpush.bf16.msra.mxu0 0
        %827 = vmatpush.bf16.msra.mxu0 0
        %828 = vmatpush.bf16.msra.mxu0 0
        %829 = vmatpush.bf16.msra.mxu0 0
        %830 = vmatpush.bf16.msra.mxu0 0
        %831 = vmatpush.bf16.msra.mxu0 0
        %832 = vmatpush.bf16.msra.mxu0 %v800
        %833 = vmatpush.bf16.msra.mxu0 %v779
        %834 = vmatmul.bf16.gmra.mxu0 %v791
        %v835 = vpop.f32.mrf.mxu0
        %v836 = vadd.f32 %v716, %v835
        %v837 = vpop.f32.mrf.mxu0
        %v838 = vadd.f32 %v718, %v837
        %839 = vmatmul.bf16.gmra.mxu0 %v794
        %v840 = vpop.f32.mrf.mxu0
        %v841 = vadd.f32 %v721, %v840
        %v842 = vpop.f32.mrf.mxu0
        %843 = vdwg.mxu0
        %844 = vmatpush.bf16.msra.mxu0 0
        %845 = vmatpush.bf16.msra.mxu0 0
        %846 = vmatpush.bf16.msra.mxu0 0
        %847 = vmatpush.bf16.msra.mxu0 0
        %848 = vmatpush.bf16.msra.mxu0 0
        %849 = vmatpush.bf16.msra.mxu0 0
        %850 = vmatpush.bf16.msra.mxu0 %v803
        %851 = vmatpush.bf16.msra.mxu0 %v780
        %852 = vmatmul.bf16.gmra.mxu0 %v791
        %v853 = vpop.f32.mrf.mxu0
        %v854 = vadd.f32 %v734, %v853
        %v855 = vpop.f32.mrf.mxu0
        %v856 = vadd.f32 %v736, %v855
        %857 = vmatmul.bf16.gmra.mxu0 %v794
        %v858 = vpop.f32.mrf.mxu0
        %v859 = vadd.f32 %v739, %v858
        %v860 = vpop.f32.mrf.mxu0
        %861 = vdwg.mxu0
        %862 = vmatpush.bf16.msra.mxu0 0
        %863 = vmatpush.bf16.msra.mxu0 0
        %864 = vmatpush.bf16.msra.mxu0 0
        %865 = vmatpush.bf16.msra.mxu0 0
        %866 = vmatpush.bf16.msra.mxu0 0
        %867 = vmatpush.bf16.msra.mxu0 0
        %868 = vmatpush.bf16.msra.mxu0 %v806
        %869 = vmatpush.bf16.msra.mxu0 %v781
        %870 = vmatmul.bf16.gmra.mxu0 %v791
        %v871 = vpop.f32.mrf.mxu0
        %v872 = vadd.f32 %v752, %v871
        %v873 = vpop.f32.mrf.mxu0
        %v874 = vadd.f32 %v754, %v873
        %875 = vmatmul.bf16.gmra.mxu0 %v794
        %v876 = vpop.f32.mrf.mxu0
        %v877 = vadd.f32 %v757, %v876
        %v878 = vpop.f32.mrf.mxu0
        %879 = vdwg.mxu0
        %v880 = vld [vmem:[%s465] sm:$0xff]
        %v881 = vld [vmem:[%s465 + $0x8] sm:$0xff]
        %v882 = vld [vmem:[%s465 + $0x10] sm:$0xff]
        %v883 = vld [vmem:[%s465 + $0x18] sm:$0xff]
        %v884 = vld [vmem:[%s465 + $0x20] sm:$0xff]
        %v885 = vld [vmem:[%s465 + $0x28] sm:$0xff]
        %886 = vrot.lane.b32.xlu0 %v632, 80
        %v887 = vpop.permute.xlu0 %886
        %888 = vrot.lane.b32.xlu0 %v633, 80
        %v889 = vpop.permute.xlu0 %888
        %v896 = vunpack.c.l.b16 %v880
        %v897 = vunpack.c.h.b16 %v880
        %v898 = vunpack.c.l.b16 %v881
        %v899 = vunpack.c.h.b16 %v881
        %v900 = vunpack.c.l.b16 %v882
        %v901 = vunpack.c.h.b16 %v882
        %v902 = vunpack.c.l.b16 %v883
        %v903 = vunpack.c.h.b16 %v883
        %v904 = vunpack.c.l.b16 %v884
        %v905 = vunpack.c.h.b16 %v884
        %v906 = vunpack.c.l.b16 %v885
        %v907 = vunpack.c.h.b16 %v885
        %v908 = vpack.c.b16 %v900, %v896
        %v909 = vpack.c.b16 %v901, %v897
        %v910 = vpack.c.b16 %v902, %v898
        %v911 = vpack.c.b16 %v903, %v899
        %v912 = vpack.c.b16 %v904, %v904
        %v913 = vpack.c.b16 %v905, %v905
        %v914 = vpack.c.b16 %v906, %v906
        %v915 = vpack.c.b16 %v907, %v907
        %v921 = vsel %vm668, %v887, 0
        %v924 = vsel %vm668, %v889, 0
        %v927 = vsel %vm675, %v912, 0
        %v930 = vsel %vm675, %v913, 0
        %v933 = vsel %vm675, %v914, 0
        %v936 = vsel %vm675, %v915, 0
        %938 = vmatpush.bf16.msra.mxu0 0
        %939 = vmatpush.bf16.msra.mxu0 0
        %940 = vmatpush.bf16.msra.mxu0 0
        %941 = vmatpush.bf16.msra.mxu0 0
        %942 = vmatpush.bf16.msra.mxu0 0
        %943 = vmatpush.bf16.msra.mxu0 0
        %944 = vmatpush.bf16.msra.mxu0 %v927
        %945 = vmatpush.bf16.msra.mxu0 %v908
        %946 = vmatmul.bf16.gmra.mxu0 %v921
        %v947 = vpop.f32.mrf.mxu0
        %v948 = vadd.f32 0.0, %v947
        %v949 = vpop.f32.mrf.mxu0
        %v950 = vadd.f32 0.0, %v949
        %951 = vmatmul.bf16.gmra.mxu0 %v924
        %v952 = vpop.f32.mrf.mxu0
        %v953 = vadd.f32 0.0, %v952
        %v954 = vpop.f32.mrf.mxu0
        %955 = vdwg.mxu0
        %956 = vmatpush.bf16.msra.mxu0 0
        %957 = vmatpush.bf16.msra.mxu0 0
        %958 = vmatpush.bf16.msra.mxu0 0
        %959 = vmatpush.bf16.msra.mxu0 0
        %960 = vmatpush.bf16.msra.mxu0 0
        %961 = vmatpush.bf16.msra.mxu0 0
        %962 = vmatpush.bf16.msra.mxu0 %v930
        %963 = vmatpush.bf16.msra.mxu0 %v909
        %964 = vmatmul.bf16.gmra.mxu0 %v921
        %v965 = vpop.f32.mrf.mxu0
        %v966 = vadd.f32 0.0, %v965
        %v967 = vpop.f32.mrf.mxu0
        %v968 = vadd.f32 0.0, %v967
        %969 = vmatmul.bf16.gmra.mxu0 %v924
        %v970 = vpop.f32.mrf.mxu0
        %v971 = vadd.f32 0.0, %v970
        %v972 = vpop.f32.mrf.mxu0
        %973 = vdwg.mxu0
        %974 = vmatpush.bf16.msra.mxu0 0
        %975 = vmatpush.bf16.msra.mxu0 0
        %976 = vmatpush.bf16.msra.mxu0 0
        %977 = vmatpush.bf16.msra.mxu0 0
        %978 = vmatpush.bf16.msra.mxu0 0
        %979 = vmatpush.bf16.msra.mxu0 0
        %980 = vmatpush.bf16.msra.mxu0 %v933
        %981 = vmatpush.bf16.msra.mxu0 %v910
        %982 = vmatmul.bf16.gmra.mxu0 %v921
        %v983 = vpop.f32.mrf.mxu0
        %v984 = vadd.f32 0.0, %v983
        %v985 = vpop.f32.mrf.mxu0
        %v986 = vadd.f32 0.0, %v985
        %987 = vmatmul.bf16.gmra.mxu0 %v924
        %v988 = vpop.f32.mrf.mxu0
        %v989 = vadd.f32 0.0, %v988
        %v990 = vpop.f32.mrf.mxu0
        %991 = vdwg.mxu0
        %992 = vmatpush.bf16.msra.mxu0 0
        %993 = vmatpush.bf16.msra.mxu0 0
        %994 = vmatpush.bf16.msra.mxu0 0
        %995 = vmatpush.bf16.msra.mxu0 0
        %996 = vmatpush.bf16.msra.mxu0 0
        %997 = vmatpush.bf16.msra.mxu0 0
        %998 = vmatpush.bf16.msra.mxu0 %v936
        %999 = vmatpush.bf16.msra.mxu0 %v911
        %1000 = vmatmul.bf16.gmra.mxu0 %v921
        %v1001 = vpop.f32.mrf.mxu0
        %v1002 = vadd.f32 0.0, %v1001
        %v1003 = vpop.f32.mrf.mxu0
        %v1004 = vadd.f32 0.0, %v1003
        %1005 = vmatmul.bf16.gmra.mxu0 %v924
        %v1006 = vpop.f32.mrf.mxu0
        %v1007 = vadd.f32 0.0, %v1006
        %v1008 = vpop.f32.mrf.mxu0
        %1009 = vdwg.mxu0
        %v1010 = vadd.f32 %v818, %v948
        %v1011 = vadd.f32 %v836, %v966
        %v1012 = vadd.f32 %v854, %v984
        %v1013 = vadd.f32 %v872, %v1002
        %v1014 = vadd.f32 %v820, %v950
        %v1015 = vadd.f32 %v838, %v968
        %v1016 = vadd.f32 %v856, %v986
        %v1017 = vadd.f32 %v874, %v1004
        %v1018 = vadd.f32 %v823, %v953
        %v1019 = vadd.f32 %v841, %v971
        %v1020 = vadd.f32 %v859, %v989
        %v1021 = vadd.f32 %v877, %v1007
        %1023 = vset.pattern.permute.xlu0 0
        %1024 = vperm.xlu0 %1023, %v611
        %v1025 = vpop.permute.xlu0 %1024
        %1028 = vset.pattern.permute.xlu0 0
        %1029 = vperm.xlu0 %1028, %v612
        %v1030 = vpop.permute.xlu0 %1029
        %1033 = vset.pattern.permute.xlu0 0
        %1034 = vperm.xlu0 %1033, %v613
        %v1035 = vpop.permute.xlu0 %1034
        %v1037 = vadd.f32 %v1010, %v1025
        %v1038 = vadd.f32 %v1011, %v1025
        %v1039 = vadd.f32 %v1012, %v1025
        %v1040 = vadd.f32 %v1013, %v1025
        %v1041 = vadd.f32 %v1014, %v1030
        %v1042 = vadd.f32 %v1015, %v1030
        %v1043 = vadd.f32 %v1016, %v1030
        %v1044 = vadd.f32 %v1017, %v1030
        %v1045 = vadd.f32 %v1018, %v1035
        %v1046 = vadd.f32 %v1019, %v1035
        %v1047 = vadd.f32 %v1020, %v1035
        %v1048 = vadd.f32 %v1021, %v1035
        %p1049 = scmp.gt.s32.totalorder %s35, 0
        %s1050 = scalar_select %p1049, 1, 0
        %s1051 = scvt.s32.f32 %s1050
        %p1052 = scmp.lt.s32.totalorder %s35, 3
        %s1053 = scalar_select %p1052, 1, 0
        %s1054 = scvt.s32.f32 %s1053
        %v1055 = vld [vmem:[%s538] sm:$0xf]
        %v1056 = vld [vmem:[%s538 + $0x4] sm:$0xf]
        %v1057 = vld [vmem:[%s538 + $0x8] sm:$0xf]
        %v1058 = vld [vmem:[%s538 + $0xc] sm:$0xf]
        %v1059 = vld [vmem:[%s538 + $0x10] sm:$0xf]
        %v1060 = vld [vmem:[%s538 + $0x14] sm:$0xf]
        %v1061 = vld [vmem:[%s538 + $0x18] sm:$0xf]
        %v1062 = vld [vmem:[%s538 + $0x1c] sm:$0xf]
        %v1063 = vld [vmem:[%s538 + $0x20] sm:$0xf]
        %v1073 = vunpack.c.l.b16 %v1055
        %v1074 = vunpack.c.l.b16 %v1056
        %v1075 = vunpack.c.l.b16 %v1057
        %v1076 = vunpack.c.l.b16 %v1058
        %v1077 = vunpack.c.l.b16 %v1059
        %v1078 = vunpack.c.l.b16 %v1060
        %v1079 = vunpack.c.l.b16 %v1061
        %v1080 = vunpack.c.l.b16 %v1062
        %v1081 = vunpack.c.l.b16 %v1063
        %v1082 = vpack.c.b16 %v1074, %v1073
        %v1083 = vpack.c.b16 %v1076, %v1075
        %v1084 = vpack.c.b16 %v1078, %v1077
        %v1085 = vpack.c.b16 %v1080, %v1079
        %v1086 = vpack.c.b16 %v1081, %v1081
        %vm1091 = vcmask 588800
        %v1092 = vsel %vm1091, %v632, 0
        %v1094 = vsel %vm1091, %v633, 0
        %v1097 = vsel %vm675, %v1086, 0
        %1099 = vmatpush.bf16.msra.mxu0 0
        %1100 = vmatpush.bf16.msra.mxu0 0
        %1101 = vmatpush.bf16.msra.mxu0 0
        %1102 = vmatpush.bf16.msra.mxu0 %v1097
        %1103 = vmatpush.bf16.msra.mxu0 %v1085
        %1104 = vmatpush.bf16.msra.mxu0 %v1084
        %1105 = vmatpush.bf16.msra.mxu0 %v1083
        %1106 = vmatpush.bf16.msra.mxu0 %v1082
        %1107 = vmatmul.bf16.gmra.mxu0 %v1092
        %v1108 = vpop.f32.mrf.mxu0
        %v1109 = vadd.f32 %v1025, %v1108
        %v1110 = vpop.f32.mrf.mxu0
        %v1111 = vadd.f32 %v1030, %v1110
        %1112 = vmatmul.bf16.gmra.mxu0 %v1094
        %v1113 = vpop.f32.mrf.mxu0
        %v1114 = vadd.f32 %v1035, %v1113
        %v1115 = vpop.f32.mrf.mxu0
        %1116 = vdwg.mxu0
        %v1117 = vstv %s1051
        %v1118 = vmul.f32 %v1109, %v1117
        %v1119 = vmul.f32 %v1111, %v1117
        %v1120 = vmul.f32 %v1114, %v1117
        %s1121 = scalar_lea.vmem %s538, 36
        %v1122 = vld [vmem:[%s1121] sm:$0xf]
        %v1123 = vld [vmem:[%s1121 + $0x4] sm:$0xf]
        %v1124 = vld [vmem:[%s1121 + $0x8] sm:$0xf]
        %v1125 = vld [vmem:[%s1121 + $0xc] sm:$0xf]
        %v1126 = vld [vmem:[%s1121 + $0x10] sm:$0xf]
        %v1127 = vld [vmem:[%s1121 + $0x14] sm:$0xf]
        %v1128 = vld [vmem:[%s1121 + $0x18] sm:$0xf]
        %v1129 = vld [vmem:[%s1121 + $0x1c] sm:$0xf]
        %v1130 = vld [vmem:[%s1121 + $0x20] sm:$0xf]
        %v1140 = vunpack.c.l.b16 %v1122
        %v1141 = vunpack.c.l.b16 %v1123
        %v1142 = vunpack.c.l.b16 %v1124
        %v1143 = vunpack.c.l.b16 %v1125
        %v1144 = vunpack.c.l.b16 %v1126
        %v1145 = vunpack.c.l.b16 %v1127
        %v1146 = vunpack.c.l.b16 %v1128
        %v1147 = vunpack.c.l.b16 %v1129
        %v1148 = vunpack.c.l.b16 %v1130
        %v1149 = vpack.c.b16 %v1141, %v1140
        %v1150 = vpack.c.b16 %v1143, %v1142
        %v1151 = vpack.c.b16 %v1145, %v1144
        %v1152 = vpack.c.b16 %v1147, %v1146
        %v1153 = vpack.c.b16 %v1148, %v1148
        %v1159 = vsel %vm675, %v1153, 0
        %1161 = vmatpush.bf16.msra.mxu0 0
        %1162 = vmatpush.bf16.msra.mxu0 0
        %1163 = vmatpush.bf16.msra.mxu0 0
        %1164 = vmatpush.bf16.msra.mxu0 %v1159
        %1165 = vmatpush.bf16.msra.mxu0 %v1152
        %1166 = vmatpush.bf16.msra.mxu0 %v1151
        %1167 = vmatpush.bf16.msra.mxu0 %v1150
        %1168 = vmatpush.bf16.msra.mxu0 %v1149
        %1169 = vmatmul.bf16.gmra.mxu0 %v1092
        %v1170 = vpop.f32.mrf.mxu0
        %v1171 = vadd.f32 %v1025, %v1170
        %v1172 = vpop.f32.mrf.mxu0
        %v1173 = vadd.f32 %v1030, %v1172
        %1174 = vmatmul.bf16.gmra.mxu0 %v1094
        %v1175 = vpop.f32.mrf.mxu0
        %v1176 = vadd.f32 %v1035, %v1175
        %v1177 = vpop.f32.mrf.mxu0
        %1178 = vdwg.mxu0
        %v1179 = vstv %s1054
        %v1180 = vmul.f32 %v1171, %v1179
        %v1181 = vmul.f32 %v1173, %v1179
        %v1182 = vmul.f32 %v1176, %v1179
        %v1183 = vld [vmem:[%s7] sm:$0xff]
        %v1184 = vld [vmem:[%s7 + $0x8] sm:$0xff]
        %v1185 = vld [vmem:[%s7 + $0x10] sm:$0xff]
        %v1186 = vld [vmem:[%s8] sm:$0xff]
        %v1187 = vld [vmem:[%s8 + $0x8] sm:$0xff]
        %v1188 = vld [vmem:[%s8 + $0x10] sm:$0xff]
        %1190 = vset.pattern.permute.xlu0 4
        %1191 = vperm.xlu0 %1190, %v1183
        %v1192 = vpop.permute.xlu0 %1191
        %1195 = vset.pattern.permute.xlu0 4
        %1196 = vperm.xlu0 %1195, %v1184
        %v1197 = vpop.permute.xlu0 %1196
        %1200 = vset.pattern.permute.xlu0 4
        %1201 = vperm.xlu0 %1200, %v1185
        %v1202 = vpop.permute.xlu0 %1201
        %v1204 = vmul.f32 %v1192, %v1037
        %v1205 = vmul.f32 %v1192, %v1038
        %v1206 = vmul.f32 %v1192, %v1039
        %v1207 = vmul.f32 %v1192, %v1040
        %v1208 = vmul.f32 %v1197, %v1041
        %v1209 = vmul.f32 %v1197, %v1042
        %v1210 = vmul.f32 %v1197, %v1043
        %v1211 = vmul.f32 %v1197, %v1044
        %v1212 = vmul.f32 %v1202, %v1045
        %v1213 = vmul.f32 %v1202, %v1046
        %v1214 = vmul.f32 %v1202, %v1047
        %v1215 = vmul.f32 %v1202, %v1048
        %1217 = vset.pattern.permute.xlu0 0
        %1218 = vperm.xlu0 %1217, %v1186
        %v1219 = vpop.permute.xlu0 %1218
        %1222 = vset.pattern.permute.xlu0 0
        %1223 = vperm.xlu0 %1222, %v1187
        %v1224 = vpop.permute.xlu0 %1223
        %1227 = vset.pattern.permute.xlu0 0
        %1228 = vperm.xlu0 %1227, %v1188
        %v1229 = vpop.permute.xlu0 %1228
        %v1231 = vadd.f32 %v1219, %v1204
        %v1232 = vadd.f32 %v1219, %v1205
        %v1233 = vadd.f32 %v1219, %v1206
        %v1234 = vadd.f32 %v1219, %v1207
        %v1235 = vadd.f32 %v1224, %v1208
        %v1236 = vadd.f32 %v1224, %v1209
        %v1237 = vadd.f32 %v1224, %v1210
        %v1238 = vadd.f32 %v1224, %v1211
        %v1239 = vadd.f32 %v1229, %v1212
        %v1240 = vadd.f32 %v1229, %v1213
        %v1241 = vadd.f32 %v1229, %v1214
        %v1242 = vadd.f32 %v1229, %v1215
        %1243 = vrot.lane.b32.xlu0 %v1118, 1
        %v1244 = vpop.permute.xlu0 %1243
        %1245 = vrot.lane.b32.xlu0 %v1119, 1
        %v1246 = vpop.permute.xlu0 %1245
        %1247 = vrot.lane.b32.xlu0 %v1120, 1
        %v1248 = vpop.permute.xlu0 %1247
        %1249 = vrot.lane.b32.xlu0 %v1037, 1
        %v1250 = vpop.permute.xlu0 %1249
        %1251 = vrot.lane.b32.xlu0 %v1041, 1
        %v1252 = vpop.permute.xlu0 %1251
        %1253 = vrot.lane.b32.xlu0 %v1045, 1
        %v1254 = vpop.permute.xlu0 %1253
        %1255 = vrot.lane.b32.xlu0 %v1038, 1
        %v1256 = vpop.permute.xlu0 %1255
        %1257 = vrot.lane.b32.xlu0 %v1042, 1
        %v1258 = vpop.permute.xlu0 %1257
        %1259 = vrot.lane.b32.xlu0 %v1046, 1
        %v1260 = vpop.permute.xlu0 %1259
        %1261 = vrot.lane.b32.xlu0 %v1039, 1
        %v1262 = vpop.permute.xlu0 %1261
        %1263 = vrot.lane.b32.xlu0 %v1043, 1
        %v1264 = vpop.permute.xlu0 %1263
        %1265 = vrot.lane.b32.xlu0 %v1047, 1
        %v1266 = vpop.permute.xlu0 %1265
        %1267 = vrot.lane.b32.xlu0 %v1180, 1
        %v1268 = vpop.permute.xlu0 %1267
        %1269 = vrot.lane.b32.xlu0 %v1181, 1
        %v1270 = vpop.permute.xlu0 %1269
        %1271 = vrot.lane.b32.xlu0 %v1182, 1
        %v1272 = vpop.permute.xlu0 %1271
        %vm1273 = vcmp.lt.s32.totalorder %v547, 1
        %v1274 = vsel %vm1273, %v1256, %v1262
        %v1275 = vsel %vm1273, %v1258, %v1264
        %v1276 = vsel %vm1273, %v1260, %v1266
        %v1277 = vsel %vm1273, %v1250, %v1256
        %v1278 = vsel %vm1273, %v1252, %v1258
        %v1279 = vsel %vm1273, %v1254, %v1260
        %v1280 = vsel %vm1273, %v1244, %v1250
        %v1281 = vsel %vm1273, %v1246, %v1252
        %v1282 = vsel %vm1273, %v1248, %v1254
        %v1283 = vsel %vm1273, %v1268, %v1244
        %v1284 = vsel %vm1273, %v1270, %v1246
        %v1285 = vsel %vm1273, %v1272, %v1248
        %v1286 = vsel %vm600, 1, 0
        %v1287 = vsel %vm601, 1, 0
        %v1288 = vsel %vm602, 1, 0
        %v1289 = vsel %vm603, 1, 0
        %vm1290 = vcmp.eq.s32.totalorder %v1286, 1
        %vm1291 = vcmp.eq.s32.totalorder %v1287, 1
        %vm1292 = vcmp.eq.s32.totalorder %v1288, 1
        %vm1293 = vcmp.eq.s32.totalorder %v1289, 1
        %v1294 = vsel %vm1290, %v1283, 0.0
        %v1295 = vsel %vm1291, %v1280, 0.0
        %v1296 = vsel %vm1292, %v1277, 0.0
        %v1297 = vsel %vm1293, %v1274, 0.0
        %v1298 = vsel %vm1290, %v1284, 0.0
        %v1299 = vsel %vm1291, %v1281, 0.0
        %v1300 = vsel %vm1292, %v1278, 0.0
        %v1301 = vsel %vm1293, %v1275, 0.0
        %v1302 = vsel %vm1290, %v1285, 0.0
        %v1303 = vsel %vm1291, %v1282, 0.0
        %v1304 = vsel %vm1292, %v1279, 0.0
        %v1305 = vsel %vm1293, %v1276, 0.0
        %1306 = vset.pattern.permute.xlu0 0
        %1307 = vperm.xlu0 %1306, %v1183
        %v1308 = vpop.permute.xlu0 %1307
        %1310 = vset.pattern.permute.xlu0 0
        %1311 = vperm.xlu0 %1310, %v1184
        %v1312 = vpop.permute.xlu0 %1311
        %1314 = vset.pattern.permute.xlu0 0
        %1315 = vperm.xlu0 %1314, %v1185
        %v1316 = vpop.permute.xlu0 %1315
        %v1318 = vmul.f32 %v1308, %v1294
        %v1319 = vmul.f32 %v1308, %v1295
        %v1320 = vmul.f32 %v1308, %v1296
        %v1321 = vmul.f32 %v1308, %v1297
        %v1322 = vmul.f32 %v1312, %v1298
        %v1323 = vmul.f32 %v1312, %v1299
        %v1324 = vmul.f32 %v1312, %v1300
        %v1325 = vmul.f32 %v1312, %v1301
        %v1326 = vmul.f32 %v1316, %v1302
        %v1327 = vmul.f32 %v1316, %v1303
        %v1328 = vmul.f32 %v1316, %v1304
        %v1329 = vmul.f32 %v1316, %v1305
        %v1330 = vadd.f32 %v1231, %v1318
        %v1331 = vadd.f32 %v1232, %v1319
        %v1332 = vadd.f32 %v1233, %v1320
        %v1333 = vadd.f32 %v1234, %v1321
        %v1334 = vadd.f32 %v1235, %v1322
        %v1335 = vadd.f32 %v1236, %v1323
        %v1336 = vadd.f32 %v1237, %v1324
        %v1337 = vadd.f32 %v1238, %v1325
        %v1338 = vadd.f32 %v1239, %v1326
        %v1339 = vadd.f32 %v1240, %v1327
        %v1340 = vadd.f32 %v1241, %v1328
        %v1341 = vadd.f32 %v1242, %v1329
        %1342 = vset.pattern.permute.xlu0 1
        %1343 = vperm.xlu0 %1342, %v1183
        %v1344 = vpop.permute.xlu0 %1343
        %1346 = vset.pattern.permute.xlu0 1
        %1347 = vperm.xlu0 %1346, %v1184
        %v1348 = vpop.permute.xlu0 %1347
        %1350 = vset.pattern.permute.xlu0 1
        %1351 = vperm.xlu0 %1350, %v1185
        %v1352 = vpop.permute.xlu0 %1351
        %v1354 = vmul.f32 %v1344, %v1118
        %v1355 = vmul.f32 %v1344, %v1037
        %v1356 = vmul.f32 %v1344, %v1038
        %v1357 = vmul.f32 %v1344, %v1039
        %v1358 = vmul.f32 %v1348, %v1119
        %v1359 = vmul.f32 %v1348, %v1041
        %v1360 = vmul.f32 %v1348, %v1042
        %v1361 = vmul.f32 %v1348, %v1043
        %v1362 = vmul.f32 %v1352, %v1120
        %v1363 = vmul.f32 %v1352, %v1045
        %v1364 = vmul.f32 %v1352, %v1046
        %v1365 = vmul.f32 %v1352, %v1047
        %v1366 = vadd.f32 %v1330, %v1354
        %v1367 = vadd.f32 %v1331, %v1355
        %v1368 = vadd.f32 %v1332, %v1356
        %v1369 = vadd.f32 %v1333, %v1357
        %v1370 = vadd.f32 %v1334, %v1358
        %v1371 = vadd.f32 %v1335, %v1359
        %v1372 = vadd.f32 %v1336, %v1360
        %v1373 = vadd.f32 %v1337, %v1361
        %v1374 = vadd.f32 %v1338, %v1362
        %v1375 = vadd.f32 %v1339, %v1363
        %v1376 = vadd.f32 %v1340, %v1364
        %v1377 = vadd.f32 %v1341, %v1365
        %1378 = vrot.lane.b32.xlu0 %v1118, 127
        %v1379 = vpop.permute.xlu0 %1378
        %1380 = vrot.lane.b32.xlu0 %v1119, 127
        %v1381 = vpop.permute.xlu0 %1380
        %1382 = vrot.lane.b32.xlu0 %v1120, 127
        %v1383 = vpop.permute.xlu0 %1382
        %1384 = vrot.lane.b32.xlu0 %v1037, 127
        %v1385 = vpop.permute.xlu0 %1384
        %1386 = vrot.lane.b32.xlu0 %v1041, 127
        %v1387 = vpop.permute.xlu0 %1386
        %1388 = vrot.lane.b32.xlu0 %v1045, 127
        %v1389 = vpop.permute.xlu0 %1388
        %1390 = vrot.lane.b32.xlu0 %v1038, 127
        %v1391 = vpop.permute.xlu0 %1390
        %1392 = vrot.lane.b32.xlu0 %v1042, 127
        %v1393 = vpop.permute.xlu0 %1392
        %1394 = vrot.lane.b32.xlu0 %v1046, 127
        %v1395 = vpop.permute.xlu0 %1394
        %1396 = vrot.lane.b32.xlu0 %v1039, 127
        %v1397 = vpop.permute.xlu0 %1396
        %1398 = vrot.lane.b32.xlu0 %v1043, 127
        %v1399 = vpop.permute.xlu0 %1398
        %1400 = vrot.lane.b32.xlu0 %v1047, 127
        %v1401 = vpop.permute.xlu0 %1400
        %1402 = vrot.lane.b32.xlu0 %v1040, 127
        %v1403 = vpop.permute.xlu0 %1402
        %1404 = vrot.lane.b32.xlu0 %v1044, 127
        %v1405 = vpop.permute.xlu0 %1404
        %1406 = vrot.lane.b32.xlu0 %v1048, 127
        %v1407 = vpop.permute.xlu0 %1406
        %vm1408 = vcmp.lt.s32.totalorder %v547, 127
        %v1409 = vsel %vm1408, %v1397, %v1403
        %v1410 = vsel %vm1408, %v1399, %v1405
        %v1411 = vsel %vm1408, %v1401, %v1407
        %v1412 = vsel %vm1408, %v1391, %v1397
        %v1413 = vsel %vm1408, %v1393, %v1399
        %v1414 = vsel %vm1408, %v1395, %v1401
        %v1415 = vsel %vm1408, %v1385, %v1391
        %v1416 = vsel %vm1408, %v1387, %v1393
        %v1417 = vsel %vm1408, %v1389, %v1395
        %v1418 = vsel %vm1408, %v1379, %v1385
        %v1419 = vsel %vm1408, %v1381, %v1387
        %v1420 = vsel %vm1408, %v1383, %v1389
        %v1421 = vsel %vm604, 1, 0
        %v1422 = vsel %vm605, 1, 0
        %v1423 = vsel %vm606, 1, 0
        %v1424 = vsel %vm607, 1, 0
        %vm1425 = vcmp.eq.s32.totalorder %v1421, 1
        %vm1426 = vcmp.eq.s32.totalorder %v1422, 1
        %vm1427 = vcmp.eq.s32.totalorder %v1423, 1
        %vm1428 = vcmp.eq.s32.totalorder %v1424, 1
        %v1429 = vsel %vm1425, %v1418, 0.0
        %v1430 = vsel %vm1426, %v1415, 0.0
        %v1431 = vsel %vm1427, %v1412, 0.0
        %v1432 = vsel %vm1428, %v1409, 0.0
        %v1433 = vsel %vm1425, %v1419, 0.0
        %v1434 = vsel %vm1426, %v1416, 0.0
        %v1435 = vsel %vm1427, %v1413, 0.0
        %v1436 = vsel %vm1428, %v1410, 0.0
        %v1437 = vsel %vm1425, %v1420, 0.0
        %v1438 = vsel %vm1426, %v1417, 0.0
        %v1439 = vsel %vm1427, %v1414, 0.0
        %v1440 = vsel %vm1428, %v1411, 0.0
        %1441 = vset.pattern.permute.xlu0 2
        %1442 = vperm.xlu0 %1441, %v1183
        %v1443 = vpop.permute.xlu0 %1442
        %1445 = vset.pattern.permute.xlu0 2
        %1446 = vperm.xlu0 %1445, %v1184
        %v1447 = vpop.permute.xlu0 %1446
        %1449 = vset.pattern.permute.xlu0 2
        %1450 = vperm.xlu0 %1449, %v1185
        %v1451 = vpop.permute.xlu0 %1450
        %v1453 = vmul.f32 %v1443, %v1429
        %v1454 = vmul.f32 %v1443, %v1430
        %v1455 = vmul.f32 %v1443, %v1431
        %v1456 = vmul.f32 %v1443, %v1432
        %v1457 = vmul.f32 %v1447, %v1433
        %v1458 = vmul.f32 %v1447, %v1434
        %v1459 = vmul.f32 %v1447, %v1435
        %v1460 = vmul.f32 %v1447, %v1436
        %v1461 = vmul.f32 %v1451, %v1437
        %v1462 = vmul.f32 %v1451, %v1438
        %v1463 = vmul.f32 %v1451, %v1439
        %v1464 = vmul.f32 %v1451, %v1440
        %v1465 = vadd.f32 %v1366, %v1453
        %v1466 = vadd.f32 %v1367, %v1454
        %v1467 = vadd.f32 %v1368, %v1455
        %v1468 = vadd.f32 %v1369, %v1456
        %v1469 = vadd.f32 %v1370, %v1457
        %v1470 = vadd.f32 %v1371, %v1458
        %v1471 = vadd.f32 %v1372, %v1459
        %v1472 = vadd.f32 %v1373, %v1460
        %v1473 = vadd.f32 %v1374, %v1461
        %v1474 = vadd.f32 %v1375, %v1462
        %v1475 = vadd.f32 %v1376, %v1463
        %v1476 = vadd.f32 %v1377, %v1464
        %1477 = vrot.lane.b32.xlu0 %v1040, 1
        %v1478 = vpop.permute.xlu0 %1477
        %1479 = vrot.lane.b32.xlu0 %v1044, 1
        %v1480 = vpop.permute.xlu0 %1479
        %1481 = vrot.lane.b32.xlu0 %v1048, 1
        %v1482 = vpop.permute.xlu0 %1481
        %v1483 = vsel %vm1273, %v1262, %v1478
        %v1484 = vsel %vm1273, %v1264, %v1480
        %v1485 = vsel %vm1273, %v1266, %v1482
        %v1486 = vsel %vm1290, %v1280, 0.0
        %v1487 = vsel %vm1291, %v1277, 0.0
        %v1488 = vsel %vm1292, %v1274, 0.0
        %v1489 = vsel %vm1293, %v1483, 0.0
        %v1490 = vsel %vm1290, %v1281, 0.0
        %v1491 = vsel %vm1291, %v1278, 0.0
        %v1492 = vsel %vm1292, %v1275, 0.0
        %v1493 = vsel %vm1293, %v1484, 0.0
        %v1494 = vsel %vm1290, %v1282, 0.0
        %v1495 = vsel %vm1291, %v1279, 0.0
        %v1496 = vsel %vm1292, %v1276, 0.0
        %v1497 = vsel %vm1293, %v1485, 0.0
        %1498 = vset.pattern.permute.xlu0 3
        %1499 = vperm.xlu0 %1498, %v1183
        %v1500 = vpop.permute.xlu0 %1499
        %1502 = vset.pattern.permute.xlu0 3
        %1503 = vperm.xlu0 %1502, %v1184
        %v1504 = vpop.permute.xlu0 %1503
        %1506 = vset.pattern.permute.xlu0 3
        %1507 = vperm.xlu0 %1506, %v1185
        %v1508 = vpop.permute.xlu0 %1507
        %v1510 = vmul.f32 %v1500, %v1486
        %v1511 = vmul.f32 %v1500, %v1487
        %v1512 = vmul.f32 %v1500, %v1488
        %v1513 = vmul.f32 %v1500, %v1489
        %v1514 = vmul.f32 %v1504, %v1490
        %v1515 = vmul.f32 %v1504, %v1491
        %v1516 = vmul.f32 %v1504, %v1492
        %v1517 = vmul.f32 %v1504, %v1493
        %v1518 = vmul.f32 %v1508, %v1494
        %v1519 = vmul.f32 %v1508, %v1495
        %v1520 = vmul.f32 %v1508, %v1496
        %v1521 = vmul.f32 %v1508, %v1497
        %v1522 = vadd.f32 %v1465, %v1510
        %v1523 = vadd.f32 %v1466, %v1511
        %v1524 = vadd.f32 %v1467, %v1512
        %v1525 = vadd.f32 %v1468, %v1513
        %v1526 = vadd.f32 %v1469, %v1514
        %v1527 = vadd.f32 %v1470, %v1515
        %v1528 = vadd.f32 %v1471, %v1516
        %v1529 = vadd.f32 %v1472, %v1517
        %v1530 = vadd.f32 %v1473, %v1518
        %v1531 = vadd.f32 %v1474, %v1519
        %v1532 = vadd.f32 %v1475, %v1520
        %v1533 = vadd.f32 %v1476, %v1521
        %1534 = vrot.lane.b32.xlu0 %v1180, 127
        %v1535 = vpop.permute.xlu0 %1534
        %1536 = vrot.lane.b32.xlu0 %v1181, 127
        %v1537 = vpop.permute.xlu0 %1536
        %1538 = vrot.lane.b32.xlu0 %v1182, 127
        %v1539 = vpop.permute.xlu0 %1538
        %v1540 = vsel %vm1408, %v1403, %v1535
        %v1541 = vsel %vm1408, %v1405, %v1537
        %v1542 = vsel %vm1408, %v1407, %v1539
        %v1543 = vsel %vm1425, %v1415, 0.0
        %v1544 = vsel %vm1426, %v1412, 0.0
        %v1545 = vsel %vm1427, %v1409, 0.0
        %v1546 = vsel %vm1428, %v1540, 0.0
        %v1547 = vsel %vm1425, %v1416, 0.0
        %v1548 = vsel %vm1426, %v1413, 0.0
        %v1549 = vsel %vm1427, %v1410, 0.0
        %v1550 = vsel %vm1428, %v1541, 0.0
        %v1551 = vsel %vm1425, %v1417, 0.0
        %v1552 = vsel %vm1426, %v1414, 0.0
        %v1553 = vsel %vm1427, %v1411, 0.0
        %v1554 = vsel %vm1428, %v1542, 0.0
        %1555 = vset.pattern.permute.xlu0 5
        %1556 = vperm.xlu0 %1555, %v1183
        %v1557 = vpop.permute.xlu0 %1556
        %1559 = vset.pattern.permute.xlu0 5
        %1560 = vperm.xlu0 %1559, %v1184
        %v1561 = vpop.permute.xlu0 %1560
        %1563 = vset.pattern.permute.xlu0 5
        %1564 = vperm.xlu0 %1563, %v1185
        %v1565 = vpop.permute.xlu0 %1564
        %v1567 = vmul.f32 %v1557, %v1543
        %v1568 = vmul.f32 %v1557, %v1544
        %v1569 = vmul.f32 %v1557, %v1545
        %v1570 = vmul.f32 %v1557, %v1546
        %v1571 = vmul.f32 %v1561, %v1547
        %v1572 = vmul.f32 %v1561, %v1548
        %v1573 = vmul.f32 %v1561, %v1549
        %v1574 = vmul.f32 %v1561, %v1550
        %v1575 = vmul.f32 %v1565, %v1551
        %v1576 = vmul.f32 %v1565, %v1552
        %v1577 = vmul.f32 %v1565, %v1553
        %v1578 = vmul.f32 %v1565, %v1554
        %v1579 = vadd.f32 %v1522, %v1567
        %v1580 = vadd.f32 %v1523, %v1568
        %v1581 = vadd.f32 %v1524, %v1569
        %v1582 = vadd.f32 %v1525, %v1570
        %v1583 = vadd.f32 %v1526, %v1571
        %v1584 = vadd.f32 %v1527, %v1572
        %v1585 = vadd.f32 %v1528, %v1573
        %v1586 = vadd.f32 %v1529, %v1574
        %v1587 = vadd.f32 %v1530, %v1575
        %v1588 = vadd.f32 %v1531, %v1576
        %v1589 = vadd.f32 %v1532, %v1577
        %v1590 = vadd.f32 %v1533, %v1578
        %v1591 = vsel %vm1273, %v1478, %v1268
        %v1592 = vsel %vm1273, %v1480, %v1270
        %v1593 = vsel %vm1273, %v1482, %v1272
        %v1594 = vsel %vm1290, %v1277, 0.0
        %v1595 = vsel %vm1291, %v1274, 0.0
        %v1596 = vsel %vm1292, %v1483, 0.0
        %v1597 = vsel %vm1293, %v1591, 0.0
        %v1598 = vsel %vm1290, %v1278, 0.0
        %v1599 = vsel %vm1291, %v1275, 0.0
        %v1600 = vsel %vm1292, %v1484, 0.0
        %v1601 = vsel %vm1293, %v1592, 0.0
        %v1602 = vsel %vm1290, %v1279, 0.0
        %v1603 = vsel %vm1291, %v1276, 0.0
        %v1604 = vsel %vm1292, %v1485, 0.0
        %v1605 = vsel %vm1293, %v1593, 0.0
        %1606 = vset.pattern.permute.xlu0 6
        %1607 = vperm.xlu0 %1606, %v1183
        %v1608 = vpop.permute.xlu0 %1607
        %1610 = vset.pattern.permute.xlu0 6
        %1611 = vperm.xlu0 %1610, %v1184
        %v1612 = vpop.permute.xlu0 %1611
        %1614 = vset.pattern.permute.xlu0 6
        %1615 = vperm.xlu0 %1614, %v1185
        %v1616 = vpop.permute.xlu0 %1615
        %v1618 = vmul.f32 %v1608, %v1594
        %v1619 = vmul.f32 %v1608, %v1595
        %v1620 = vmul.f32 %v1608, %v1596
        %v1621 = vmul.f32 %v1608, %v1597
        %v1622 = vmul.f32 %v1612, %v1598
        %v1623 = vmul.f32 %v1612, %v1599
        %v1624 = vmul.f32 %v1612, %v1600
        %v1625 = vmul.f32 %v1612, %v1601
        %v1626 = vmul.f32 %v1616, %v1602
        %v1627 = vmul.f32 %v1616, %v1603
        %v1628 = vmul.f32 %v1616, %v1604
        %v1629 = vmul.f32 %v1616, %v1605
        %v1630 = vadd.f32 %v1579, %v1618
        %v1631 = vadd.f32 %v1580, %v1619
        %v1632 = vadd.f32 %v1581, %v1620
        %v1633 = vadd.f32 %v1582, %v1621
        %v1634 = vadd.f32 %v1583, %v1622
        %v1635 = vadd.f32 %v1584, %v1623
        %v1636 = vadd.f32 %v1585, %v1624
        %v1637 = vadd.f32 %v1586, %v1625
        %v1638 = vadd.f32 %v1587, %v1626
        %v1639 = vadd.f32 %v1588, %v1627
        %v1640 = vadd.f32 %v1589, %v1628
        %v1641 = vadd.f32 %v1590, %v1629
        %1642 = vset.pattern.permute.xlu0 7
        %1643 = vperm.xlu0 %1642, %v1183
        %v1644 = vpop.permute.xlu0 %1643
        %1646 = vset.pattern.permute.xlu0 7
        %1647 = vperm.xlu0 %1646, %v1184
        %v1648 = vpop.permute.xlu0 %1647
        %1650 = vset.pattern.permute.xlu0 7
        %1651 = vperm.xlu0 %1650, %v1185
        %v1652 = vpop.permute.xlu0 %1651
        %v1654 = vmul.f32 %v1644, %v1038
        %v1655 = vmul.f32 %v1644, %v1039
        %v1656 = vmul.f32 %v1644, %v1040
        %v1657 = vmul.f32 %v1644, %v1180
        %v1658 = vmul.f32 %v1648, %v1042
        %v1659 = vmul.f32 %v1648, %v1043
        %v1660 = vmul.f32 %v1648, %v1044
        %v1661 = vmul.f32 %v1648, %v1181
        %v1662 = vmul.f32 %v1652, %v1046
        %v1663 = vmul.f32 %v1652, %v1047
        %v1664 = vmul.f32 %v1652, %v1048
        %v1665 = vmul.f32 %v1652, %v1182
        %v1666 = vadd.f32 %v1630, %v1654
        %v1667 = vadd.f32 %v1631, %v1655
        %v1668 = vadd.f32 %v1632, %v1656
        %v1669 = vadd.f32 %v1633, %v1657
        %v1670 = vadd.f32 %v1634, %v1658
        %v1671 = vadd.f32 %v1635, %v1659
        %v1672 = vadd.f32 %v1636, %v1660
        %v1673 = vadd.f32 %v1637, %v1661
        %v1674 = vadd.f32 %v1638, %v1662
        %v1675 = vadd.f32 %v1639, %v1663
        %v1676 = vadd.f32 %v1640, %v1664
        %v1677 = vadd.f32 %v1641, %v1665
        %v1678 = vsel %vm1408, %v1535, %v1379
        %v1679 = vsel %vm1408, %v1537, %v1381
        %v1680 = vsel %vm1408, %v1539, %v1383
        %v1681 = vsel %vm1425, %v1412, 0.0
        %v1682 = vsel %vm1426, %v1409, 0.0
        %v1683 = vsel %vm1427, %v1540, 0.0
        %v1684 = vsel %vm1428, %v1678, 0.0
        %v1685 = vsel %vm1425, %v1413, 0.0
        %v1686 = vsel %vm1426, %v1410, 0.0
        %v1687 = vsel %vm1427, %v1541, 0.0
        %v1688 = vsel %vm1428, %v1679, 0.0
        %v1689 = vsel %vm1425, %v1414, 0.0
        %v1690 = vsel %vm1426, %v1411, 0.0
        %v1691 = vsel %vm1427, %v1542, 0.0
        %v1692 = vsel %vm1428, %v1680, 0.0
        %1693 = vset.pattern.permute.xlu0 8
        %1694 = vperm.xlu0 %1693, %v1183
        %v1695 = vpop.permute.xlu0 %1694
        %1697 = vset.pattern.permute.xlu0 8
        %1698 = vperm.xlu0 %1697, %v1184
        %v1699 = vpop.permute.xlu0 %1698
        %1701 = vset.pattern.permute.xlu0 8
        %1702 = vperm.xlu0 %1701, %v1185
        %v1703 = vpop.permute.xlu0 %1702
        %v1705 = vmul.f32 %v1695, %v1681
        %v1706 = vmul.f32 %v1695, %v1682
        %v1707 = vmul.f32 %v1695, %v1683
        %v1708 = vmul.f32 %v1695, %v1684
        %v1709 = vmul.f32 %v1699, %v1685
        %v1710 = vmul.f32 %v1699, %v1686
        %v1711 = vmul.f32 %v1699, %v1687
        %v1712 = vmul.f32 %v1699, %v1688
        %v1713 = vmul.f32 %v1703, %v1689
        %v1714 = vmul.f32 %v1703, %v1690
        %v1715 = vmul.f32 %v1703, %v1691
        %v1716 = vmul.f32 %v1703, %v1692
        %v1717 = vadd.f32 %v1666, %v1705
        %v1718 = vadd.f32 %v1667, %v1706
        %v1719 = vadd.f32 %v1668, %v1707
        %v1720 = vadd.f32 %v1669, %v1708
        %v1721 = vadd.f32 %v1670, %v1709
        %v1722 = vadd.f32 %v1671, %v1710
        %v1723 = vadd.f32 %v1672, %v1711
        %v1724 = vadd.f32 %v1673, %v1712
        %v1725 = vadd.f32 %v1674, %v1713
        %v1726 = vadd.f32 %v1675, %v1714
        %v1727 = vadd.f32 %v1676, %v1715
        %v1728 = vadd.f32 %v1677, %v1716
        %v1729 = vld [vmem:[%s538] sm:$0xf]
        %v1730 = vld [vmem:[%s538 + $0x4] sm:$0xf]
        %v1731 = vld [vmem:[%s538 + $0x8] sm:$0xf]
        %v1732 = vld [vmem:[%s1121] sm:$0xf]
        %v1733 = vld [vmem:[%s1121 + $0x4] sm:$0xf]
        %v1734 = vld [vmem:[%s1121 + $0x8] sm:$0xf]
        %v1738 = vunpack.c.l.b16 %v1729
        %v1739 = vunpack.c.l.b16 %v1730
        %v1740 = vunpack.c.l.b16 %v1731
        %v1741 = vpack.c.b16 %v1739, %v1738
        %v1742 = vpack.c.b16 %v1740, %v1740
        %v1752 = vunpack.c.l.b16 %v1732
        %v1753 = vunpack.c.l.b16 %v1733
        %v1754 = vunpack.c.l.b16 %v1734
        %v1755 = vpack.c.b16 %v1753, %v1752
        %v1756 = vpack.c.b16 %v1754, %v1754
        %v1759 = vunpack.c.l.bf16 %v1741
        %v1760 = vunpack.c.l.bf16 %v778
        %v1761 = vunpack.c.l.bf16 %v779
        %v1762 = vunpack.c.l.bf16 %v780
        %v1763 = vunpack.c.l.bf16 %v781
        %v1764 = vunpack.c.l.bf16 %v1755
        %v1765 = vunpack.c.h.bf16 %v1741
        %v1766 = vunpack.c.h.bf16 %v778
        %v1767 = vunpack.c.h.bf16 %v779
        %v1768 = vunpack.c.h.bf16 %v780
        %v1769 = vunpack.c.h.bf16 %v781
        %v1770 = vunpack.c.h.bf16 %v1755
        %v1771 = vunpack.c.l.bf16 %v1742
        %v1772 = vunpack.c.l.bf16 %v782
        %v1773 = vunpack.c.l.bf16 %v783
        %v1774 = vunpack.c.l.bf16 %v784
        %v1775 = vunpack.c.l.bf16 %v785
        %v1776 = vunpack.c.l.bf16 %v1756
        %v1777 = vld [vmem:[%s9] sm:$0xff]
        %v1778 = vld [vmem:[%s9 + $0x8] sm:$0xff]
        %v1779 = vld [vmem:[%s9 + $0x10] sm:$0xff]
        %v1780 = vld [vmem:[%s9 + $0x18] sm:$0xff]
        %v1781 = vld [vmem:[%s9 + $0x20] sm:$0xff]
        %v1782 = vld [vmem:[%s9 + $0x28] sm:$0xff]
        %v1783 = vld [vmem:[%s9 + $0x30] sm:$0xff]
        %v1784 = vld [vmem:[%s9 + $0x38] sm:$0xff]
        %v1785 = vld [vmem:[%s9 + $0x40] sm:$0xff]
        %v1786 = vld [vmem:[%s9 + $0x48] sm:$0xff]
        %v1787 = vld [vmem:[%s9 + $0x50] sm:$0xff]
        %v1788 = vld [vmem:[%s9 + $0x58] sm:$0xff]
        %v1789 = vld [vmem:[%s9 + $0x60] sm:$0xff]
        %v1790 = vld [vmem:[%s9 + $0x68] sm:$0xff]
        %v1791 = vld [vmem:[%s9 + $0x70] sm:$0xff]
        %v1792 = vld [vmem:[%s9 + $0x78] sm:$0xff]
        %v1793 = vld [vmem:[%s9 + $0x80] sm:$0xff]
        %v1794 = vld [vmem:[%s9 + $0x88] sm:$0xff]
        %v1795 = vld [vmem:[%s9 + $0x90] sm:$0xff]
        %v1796 = vld [vmem:[%s9 + $0x98] sm:$0xff]
        %v1797 = vld [vmem:[%s9 + $0xa0] sm:$0xff]
        %v1798 = vld [vmem:[%s9 + $0xa8] sm:$0xff]
        %v1799 = vld [vmem:[%s9 + $0xb0] sm:$0xff]
        %v1800 = vld [vmem:[%s9 + $0xb8] sm:$0xff]
        %v1801 = vld [vmem:[%s9 + $0xc0] sm:$0xff]
        %v1802 = vld [vmem:[%s9 + $0xc8] sm:$0xff]
        %v1803 = vld [vmem:[%s9 + $0xd0] sm:$0xff]
        %v1804 = vld [vmem:[%s543] sm:$0xff]
        %v1805 = vld [vmem:[%s543 + $0x8] sm:$0xff]
        %v1806 = vld [vmem:[%s543 + $0x10] sm:$0xff]
        %v1807 = vld [vmem:[%s543 + $0x18] sm:$0xff]
        %v1808 = vld [vmem:[%s543 + $0x20] sm:$0xff]
        %v1809 = vld [vmem:[%s543 + $0x28] sm:$0xff]
        %v1810 = vld [vmem:[%s543 + $0x30] sm:$0xff]
        %v1811 = vld [vmem:[%s543 + $0x38] sm:$0xff]
        %v1812 = vld [vmem:[%s543 + $0x40] sm:$0xff]
        %v1813 = vld [vmem:[%s543 + $0x48] sm:$0xff]
        %v1814 = vld [vmem:[%s543 + $0x50] sm:$0xff]
        %v1815 = vld [vmem:[%s543 + $0x58] sm:$0xff]
        %v1816 = vld [vmem:[%s543 + $0x60] sm:$0xff]
        %v1817 = vld [vmem:[%s543 + $0x68] sm:$0xff]
        %v1818 = vld [vmem:[%s543 + $0x70] sm:$0xff]
        %v1819 = vld [vmem:[%s543 + $0x78] sm:$0xff]
        %v1820 = vld [vmem:[%s543 + $0x80] sm:$0xff]
        %v1821 = vld [vmem:[%s543 + $0x88] sm:$0xff]
        %v1822 = vld [vmem:[%s543 + $0x90] sm:$0xff]
        %v1823 = vld [vmem:[%s543 + $0x98] sm:$0xff]
        %v1824 = vld [vmem:[%s543 + $0xa0] sm:$0xff]
        %v1825 = vld [vmem:[%s543 + $0xa8] sm:$0xff]
        %v1826 = vld [vmem:[%s543 + $0xb0] sm:$0xff]
        %v1827 = vld [vmem:[%s543 + $0xb8] sm:$0xff]
        %v1828 = vld [vmem:[%s543 + $0xc0] sm:$0xff]
        %v1829 = vld [vmem:[%s543 + $0xc8] sm:$0xff]
        %v1830 = vld [vmem:[%s543 + $0xd0] sm:$0xff]
        %1832 = vset.pattern.permute.xlu0 0
        %1833 = vperm.xlu0 %1832, %v1816
        %v1834 = vpop.permute.xlu0 %1833
        %1837 = vset.pattern.permute.xlu0 0
        %1838 = vperm.xlu0 %1837, %v1817
        %v1839 = vpop.permute.xlu0 %1838
        %1842 = vset.pattern.permute.xlu0 0
        %1843 = vperm.xlu0 %1842, %v1818
        %v1844 = vpop.permute.xlu0 %1843
        %v1847 = vsel %vm668, %v1789, 0
        %v1850 = vsel %vm668, %v1790, 0
        %v1853 = vsel %vm668, %v1791, 0
        %1855 = vmatpush.msra.mxu0 0.0
        %1856 = vmatpush.msra.mxu0 0.0
        %1857 = vmatpush.msra.mxu0 0.0
        %1858 = vmatpush.msra.mxu0 0.0
        %1859 = vmatpush.msra.mxu0 0.0
        %1860 = vmatpush.msra.mxu0 0.0
        %1861 = vmatpush.msra.mxu0 0.0
        %1862 = vmatpush.msra.mxu0 0.0
        %1863 = vmatpush.msra.mxu0 0.0
        %1864 = vmatpush.msra.mxu0 0.0
        %1865 = vmatpush.msra.mxu0 0.0
        %1866 = vmatpush.msra.mxu0 0.0
        %1867 = vmatpush.msra.mxu0 0.0
        %1868 = vmatpush.msra.mxu0 %v1725
        %1869 = vmatpush.msra.mxu0 %v1721
        %1870 = vmatpush.msra.mxu0 %v1717
        %1871 = vmatmul.f32.gmra.mxu0 %v1847
        %v1872 = vpop.f32.mrf.mxu0
        %v1873 = vadd.f32 %v1834, %v1872
        %1874 = vmatmul.f32.gmra.mxu0 %v1850
        %v1875 = vpop.f32.mrf.mxu0
        %v1876 = vadd.f32 %v1839, %v1875
        %1877 = vmatmul.f32.gmra.mxu0 %v1853
        %v1878 = vpop.f32.mrf.mxu0
        %v1879 = vadd.f32 %v1844, %v1878
        %1880 = vdwg.mxu0
        %1881 = vmatpush.msra.mxu0 0.0
        %1882 = vmatpush.msra.mxu0 0.0
        %1883 = vmatpush.msra.mxu0 0.0
        %1884 = vmatpush.msra.mxu0 0.0
        %1885 = vmatpush.msra.mxu0 0.0
        %1886 = vmatpush.msra.mxu0 0.0
        %1887 = vmatpush.msra.mxu0 0.0
        %1888 = vmatpush.msra.mxu0 0.0
        %1889 = vmatpush.msra.mxu0 0.0
        %1890 = vmatpush.msra.mxu0 0.0
        %1891 = vmatpush.msra.mxu0 0.0
        %1892 = vmatpush.msra.mxu0 0.0
        %1893 = vmatpush.msra.mxu0 0.0
        %1894 = vmatpush.msra.mxu0 %v1726
        %1895 = vmatpush.msra.mxu0 %v1722
        %1896 = vmatpush.msra.mxu0 %v1718
        %1897 = vmatmul.f32.gmra.mxu0 %v1847
        %v1898 = vpop.f32.mrf.mxu0
        %v1899 = vadd.f32 %v1834, %v1898
        %1900 = vmatmul.f32.gmra.mxu0 %v1850
        %v1901 = vpop.f32.mrf.mxu0
        %v1902 = vadd.f32 %v1839, %v1901
        %1903 = vmatmul.f32.gmra.mxu0 %v1853
        %v1904 = vpop.f32.mrf.mxu0
        %v1905 = vadd.f32 %v1844, %v1904
        %1906 = vdwg.mxu0
        %1907 = vmatpush.msra.mxu0 0.0
        %1908 = vmatpush.msra.mxu0 0.0
        %1909 = vmatpush.msra.mxu0 0.0
        %1910 = vmatpush.msra.mxu0 0.0
        %1911 = vmatpush.msra.mxu0 0.0
        %1912 = vmatpush.msra.mxu0 0.0
        %1913 = vmatpush.msra.mxu0 0.0
        %1914 = vmatpush.msra.mxu0 0.0
        %1915 = vmatpush.msra.mxu0 0.0
        %1916 = vmatpush.msra.mxu0 0.0
        %1917 = vmatpush.msra.mxu0 0.0
        %1918 = vmatpush.msra.mxu0 0.0
        %1919 = vmatpush.msra.mxu0 0.0
        %1920 = vmatpush.msra.mxu0 %v1727
        %1921 = vmatpush.msra.mxu0 %v1723
        %1922 = vmatpush.msra.mxu0 %v1719
        %1923 = vmatmul.f32.gmra.mxu0 %v1847
        %v1924 = vpop.f32.mrf.mxu0
        %v1925 = vadd.f32 %v1834, %v1924
        %1926 = vmatmul.f32.gmra.mxu0 %v1850
        %v1927 = vpop.f32.mrf.mxu0
        %v1928 = vadd.f32 %v1839, %v1927
        %1929 = vmatmul.f32.gmra.mxu0 %v1853
        %v1930 = vpop.f32.mrf.mxu0
        %v1931 = vadd.f32 %v1844, %v1930
        %1932 = vdwg.mxu0
        %1933 = vmatpush.msra.mxu0 0.0
        %1934 = vmatpush.msra.mxu0 0.0
        %1935 = vmatpush.msra.mxu0 0.0
        %1936 = vmatpush.msra.mxu0 0.0
        %1937 = vmatpush.msra.mxu0 0.0
        %1938 = vmatpush.msra.mxu0 0.0
        %1939 = vmatpush.msra.mxu0 0.0
        %1940 = vmatpush.msra.mxu0 0.0
        %1941 = vmatpush.msra.mxu0 0.0
        %1942 = vmatpush.msra.mxu0 0.0
        %1943 = vmatpush.msra.mxu0 0.0
        %1944 = vmatpush.msra.mxu0 0.0
        %1945 = vmatpush.msra.mxu0 0.0
        %1946 = vmatpush.msra.mxu0 %v1728
        %1947 = vmatpush.msra.mxu0 %v1724
        %1948 = vmatpush.msra.mxu0 %v1720
        %1949 = vmatmul.f32.gmra.mxu0 %v1847
        %v1950 = vpop.f32.mrf.mxu0
        %v1951 = vadd.f32 %v1834, %v1950
        %1952 = vmatmul.f32.gmra.mxu0 %v1850
        %v1953 = vpop.f32.mrf.mxu0
        %v1954 = vadd.f32 %v1839, %v1953
        %1955 = vmatmul.f32.gmra.mxu0 %v1853
        %v1956 = vpop.f32.mrf.mxu0
        %v1957 = vadd.f32 %v1844, %v1956
        %1958 = vdwg.mxu0
        %v1959 = vmul.f32 %v1760, %v1873
        %v1960 = vmul.f32 %v1761, %v1899
        %v1961 = vmul.f32 %v1762, %v1925
        %v1962 = vmul.f32 %v1763, %v1951
        %v1963 = vmul.f32 %v1766, %v1876
        %v1964 = vmul.f32 %v1767, %v1902
        %v1965 = vmul.f32 %v1768, %v1928
        %v1966 = vmul.f32 %v1769, %v1954
        %v1967 = vmul.f32 %v1772, %v1879
        %v1968 = vmul.f32 %v1773, %v1905
        %v1969 = vmul.f32 %v1774, %v1931
        %v1970 = vmul.f32 %v1775, %v1957
        %1971 = vrot.lane.b32.xlu0 %v1759, 1
        %v1972 = vpop.permute.xlu0 %1971
        %1973 = vrot.lane.b32.xlu0 %v1765, 1
        %v1974 = vpop.permute.xlu0 %1973
        %1975 = vrot.lane.b32.xlu0 %v1771, 1
        %v1976 = vpop.permute.xlu0 %1975
        %1977 = vrot.lane.b32.xlu0 %v1760, 1
        %v1978 = vpop.permute.xlu0 %1977
        %1979 = vrot.lane.b32.xlu0 %v1766, 1
        %v1980 = vpop.permute.xlu0 %1979
        %1981 = vrot.lane.b32.xlu0 %v1772, 1
        %v1982 = vpop.permute.xlu0 %1981
        %1983 = vrot.lane.b32.xlu0 %v1761, 1
        %v1984 = vpop.permute.xlu0 %1983
        %1985 = vrot.lane.b32.xlu0 %v1767, 1
        %v1986 = vpop.permute.xlu0 %1985
        %1987 = vrot.lane.b32.xlu0 %v1773, 1
        %v1988 = vpop.permute.xlu0 %1987
        %1989 = vrot.lane.b32.xlu0 %v1762, 1
        %v1990 = vpop.permute.xlu0 %1989
        %1991 = vrot.lane.b32.xlu0 %v1768, 1
        %v1992 = vpop.permute.xlu0 %1991
        %1993 = vrot.lane.b32.xlu0 %v1774, 1
        %v1994 = vpop.permute.xlu0 %1993
        %1995 = vrot.lane.b32.xlu0 %v1764, 1
        %v1996 = vpop.permute.xlu0 %1995
        %1997 = vrot.lane.b32.xlu0 %v1770, 1
        %v1998 = vpop.permute.xlu0 %1997
        %1999 = vrot.lane.b32.xlu0 %v1776, 1
        %v2000 = vpop.permute.xlu0 %1999
        %v2001 = vsel %vm1273, %v1984, %v1990
        %v2002 = vsel %vm1273, %v1986, %v1992
        %v2003 = vsel %vm1273, %v1988, %v1994
        %v2004 = vsel %vm1273, %v1978, %v1984
        %v2005 = vsel %vm1273, %v1980, %v1986
        %v2006 = vsel %vm1273, %v1982, %v1988
        %v2007 = vsel %vm1273, %v1972, %v1978
        %v2008 = vsel %vm1273, %v1974, %v1980
        %v2009 = vsel %vm1273, %v1976, %v1982
        %v2010 = vsel %vm1273, %v1996, %v1972
        %v2011 = vsel %vm1273, %v1998, %v1974
        %v2012 = vsel %vm1273, %v2000, %v1976
        %v2013 = vsel %vm1290, %v2010, 0.0
        %v2014 = vsel %vm1291, %v2007, 0.0
        %v2015 = vsel %vm1292, %v2004, 0.0
        %v2016 = vsel %vm1293, %v2001, 0.0
        %v2017 = vsel %vm1290, %v2011, 0.0
        %v2018 = vsel %vm1291, %v2008, 0.0
        %v2019 = vsel %vm1292, %v2005, 0.0
        %v2020 = vsel %vm1293, %v2002, 0.0
        %v2021 = vsel %vm1290, %v2012, 0.0
        %v2022 = vsel %vm1291, %v2009, 0.0
        %v2023 = vsel %vm1292, %v2006, 0.0
        %v2024 = vsel %vm1293, %v2003, 0.0
        %2026 = vset.pattern.permute.xlu0 0
        %2027 = vperm.xlu0 %2026, %v1804
        %v2028 = vpop.permute.xlu0 %2027
        %2031 = vset.pattern.permute.xlu0 0
        %2032 = vperm.xlu0 %2031, %v1805
        %v2033 = vpop.permute.xlu0 %2032
        %2036 = vset.pattern.permute.xlu0 0
        %2037 = vperm.xlu0 %2036, %v1806
        %v2038 = vpop.permute.xlu0 %2037
        %v2041 = vsel %vm668, %v1777, 0
        %v2044 = vsel %vm668, %v1778, 0
        %v2047 = vsel %vm668, %v1779, 0
        %2049 = vmatpush.msra.mxu0 0.0
        %2050 = vmatpush.msra.mxu0 0.0
        %2051 = vmatpush.msra.mxu0 0.0
        %2052 = vmatpush.msra.mxu0 0.0
        %2053 = vmatpush.msra.mxu0 0.0
        %2054 = vmatpush.msra.mxu0 0.0
        %2055 = vmatpush.msra.mxu0 0.0
        %2056 = vmatpush.msra.mxu0 0.0
        %2057 = vmatpush.msra.mxu0 0.0
        %2058 = vmatpush.msra.mxu0 0.0
        %2059 = vmatpush.msra.mxu0 0.0
        %2060 = vmatpush.msra.mxu0 0.0
        %2061 = vmatpush.msra.mxu0 0.0
        %2062 = vmatpush.msra.mxu0 %v1725
        %2063 = vmatpush.msra.mxu0 %v1721
        %2064 = vmatpush.msra.mxu0 %v1717
        %2065 = vmatmul.f32.gmra.mxu0 %v2041
        %v2066 = vpop.f32.mrf.mxu0
        %v2067 = vadd.f32 %v2028, %v2066
        %2068 = vmatmul.f32.gmra.mxu0 %v2044
        %v2069 = vpop.f32.mrf.mxu0
        %v2070 = vadd.f32 %v2033, %v2069
        %2071 = vmatmul.f32.gmra.mxu0 %v2047
        %v2072 = vpop.f32.mrf.mxu0
        %v2073 = vadd.f32 %v2038, %v2072
        %2074 = vdwg.mxu0
        %2075 = vmatpush.msra.mxu0 0.0
        %2076 = vmatpush.msra.mxu0 0.0
        %2077 = vmatpush.msra.mxu0 0.0
        %2078 = vmatpush.msra.mxu0 0.0
        %2079 = vmatpush.msra.mxu0 0.0
        %2080 = vmatpush.msra.mxu0 0.0
        %2081 = vmatpush.msra.mxu0 0.0
        %2082 = vmatpush.msra.mxu0 0.0
        %2083 = vmatpush.msra.mxu0 0.0
        %2084 = vmatpush.msra.mxu0 0.0
        %2085 = vmatpush.msra.mxu0 0.0
        %2086 = vmatpush.msra.mxu0 0.0
        %2087 = vmatpush.msra.mxu0 0.0
        %2088 = vmatpush.msra.mxu0 %v1726
        %2089 = vmatpush.msra.mxu0 %v1722
        %2090 = vmatpush.msra.mxu0 %v1718
        %2091 = vmatmul.f32.gmra.mxu0 %v2041
        %v2092 = vpop.f32.mrf.mxu0
        %v2093 = vadd.f32 %v2028, %v2092
        %2094 = vmatmul.f32.gmra.mxu0 %v2044
        %v2095 = vpop.f32.mrf.mxu0
        %v2096 = vadd.f32 %v2033, %v2095
        %2097 = vmatmul.f32.gmra.mxu0 %v2047
        %v2098 = vpop.f32.mrf.mxu0
        %v2099 = vadd.f32 %v2038, %v2098
        %2100 = vdwg.mxu0
        %2101 = vmatpush.msra.mxu0 0.0
        %2102 = vmatpush.msra.mxu0 0.0
        %2103 = vmatpush.msra.mxu0 0.0
        %2104 = vmatpush.msra.mxu0 0.0
        %2105 = vmatpush.msra.mxu0 0.0
        %2106 = vmatpush.msra.mxu0 0.0
        %2107 = vmatpush.msra.mxu0 0.0
        %2108 = vmatpush.msra.mxu0 0.0
        %2109 = vmatpush.msra.mxu0 0.0
        %2110 = vmatpush.msra.mxu0 0.0
        %2111 = vmatpush.msra.mxu0 0.0
        %2112 = vmatpush.msra.mxu0 0.0
        %2113 = vmatpush.msra.mxu0 0.0
        %2114 = vmatpush.msra.mxu0 %v1727
        %2115 = vmatpush.msra.mxu0 %v1723
        %2116 = vmatpush.msra.mxu0 %v1719
        %2117 = vmatmul.f32.gmra.mxu0 %v2041
        %v2118 = vpop.f32.mrf.mxu0
        %v2119 = vadd.f32 %v2028, %v2118
        %2120 = vmatmul.f32.gmra.mxu0 %v2044
        %v2121 = vpop.f32.mrf.mxu0
        %v2122 = vadd.f32 %v2033, %v2121
        %2123 = vmatmul.f32.gmra.mxu0 %v2047
        %v2124 = vpop.f32.mrf.mxu0
        %v2125 = vadd.f32 %v2038, %v2124
        %2126 = vdwg.mxu0
        %2127 = vmatpush.msra.mxu0 0.0
        %2128 = vmatpush.msra.mxu0 0.0
        %2129 = vmatpush.msra.mxu0 0.0
        %2130 = vmatpush.msra.mxu0 0.0
        %2131 = vmatpush.msra.mxu0 0.0
        %2132 = vmatpush.msra.mxu0 0.0
        %2133 = vmatpush.msra.mxu0 0.0
        %2134 = vmatpush.msra.mxu0 0.0
        %2135 = vmatpush.msra.mxu0 0.0
        %2136 = vmatpush.msra.mxu0 0.0
        %2137 = vmatpush.msra.mxu0 0.0
        %2138 = vmatpush.msra.mxu0 0.0
        %2139 = vmatpush.msra.mxu0 0.0
        %2140 = vmatpush.msra.mxu0 %v1728
        %2141 = vmatpush.msra.mxu0 %v1724
        %2142 = vmatpush.msra.mxu0 %v1720
        %2143 = vmatmul.f32.gmra.mxu0 %v2041
        %v2144 = vpop.f32.mrf.mxu0
        %v2145 = vadd.f32 %v2028, %v2144
        %2146 = vmatmul.f32.gmra.mxu0 %v2044
        %v2147 = vpop.f32.mrf.mxu0
        %v2148 = vadd.f32 %v2033, %v2147
        %2149 = vmatmul.f32.gmra.mxu0 %v2047
        %v2150 = vpop.f32.mrf.mxu0
        %v2151 = vadd.f32 %v2038, %v2150
        %2152 = vdwg.mxu0
        %v2153 = vmul.f32 %v2013, %v2067
        %v2154 = vmul.f32 %v2014, %v2093
        %v2155 = vmul.f32 %v2015, %v2119
        %v2156 = vmul.f32 %v2016, %v2145
        %v2157 = vmul.f32 %v2017, %v2070
        %v2158 = vmul.f32 %v2018, %v2096
        %v2159 = vmul.f32 %v2019, %v2122
        %v2160 = vmul.f32 %v2020, %v2148
        %v2161 = vmul.f32 %v2021, %v2073
        %v2162 = vmul.f32 %v2022, %v2099
        %v2163 = vmul.f32 %v2023, %v2125
        %v2164 = vmul.f32 %v2024, %v2151
        %v2165 = vadd.f32 %v1959, %v2153
        %v2166 = vadd.f32 %v1960, %v2154
        %v2167 = vadd.f32 %v1961, %v2155
        %v2168 = vadd.f32 %v1962, %v2156
        %v2169 = vadd.f32 %v1963, %v2157
        %v2170 = vadd.f32 %v1964, %v2158
        %v2171 = vadd.f32 %v1965, %v2159
        %v2172 = vadd.f32 %v1966, %v2160
        %v2173 = vadd.f32 %v1967, %v2161
        %v2174 = vadd.f32 %v1968, %v2162
        %v2175 = vadd.f32 %v1969, %v2163
        %v2176 = vadd.f32 %v1970, %v2164
        %2178 = vset.pattern.permute.xlu0 0
        %2179 = vperm.xlu0 %2178, %v1807
        %v2180 = vpop.permute.xlu0 %2179
        %2183 = vset.pattern.permute.xlu0 0
        %2184 = vperm.xlu0 %2183, %v1808
        %v2185 = vpop.permute.xlu0 %2184
        %2188 = vset.pattern.permute.xlu0 0
        %2189 = vperm.xlu0 %2188, %v1809
        %v2190 = vpop.permute.xlu0 %2189
        %v2193 = vsel %vm668, %v1780, 0
        %v2196 = vsel %vm668, %v1781, 0
        %v2199 = vsel %vm668, %v1782, 0
        %2201 = vmatpush.msra.mxu0 0.0
        %2202 = vmatpush.msra.mxu0 0.0
        %2203 = vmatpush.msra.mxu0 0.0
        %2204 = vmatpush.msra.mxu0 0.0
        %2205 = vmatpush.msra.mxu0 0.0
        %2206 = vmatpush.msra.mxu0 0.0
        %2207 = vmatpush.msra.mxu0 0.0
        %2208 = vmatpush.msra.mxu0 0.0
        %2209 = vmatpush.msra.mxu0 0.0
        %2210 = vmatpush.msra.mxu0 0.0
        %2211 = vmatpush.msra.mxu0 0.0
        %2212 = vmatpush.msra.mxu0 0.0
        %2213 = vmatpush.msra.mxu0 0.0
        %2214 = vmatpush.msra.mxu0 %v1725
        %2215 = vmatpush.msra.mxu0 %v1721
        %2216 = vmatpush.msra.mxu0 %v1717
        %2217 = vmatmul.f32.gmra.mxu0 %v2193
        %v2218 = vpop.f32.mrf.mxu0
        %v2219 = vadd.f32 %v2180, %v2218
        %2220 = vmatmul.f32.gmra.mxu0 %v2196
        %v2221 = vpop.f32.mrf.mxu0
        %v2222 = vadd.f32 %v2185, %v2221
        %2223 = vmatmul.f32.gmra.mxu0 %v2199
        %v2224 = vpop.f32.mrf.mxu0
        %v2225 = vadd.f32 %v2190, %v2224
        %2226 = vdwg.mxu0
        %2227 = vmatpush.msra.mxu0 0.0
        %2228 = vmatpush.msra.mxu0 0.0
        %2229 = vmatpush.msra.mxu0 0.0
        %2230 = vmatpush.msra.mxu0 0.0
        %2231 = vmatpush.msra.mxu0 0.0
        %2232 = vmatpush.msra.mxu0 0.0
        %2233 = vmatpush.msra.mxu0 0.0
        %2234 = vmatpush.msra.mxu0 0.0
        %2235 = vmatpush.msra.mxu0 0.0
        %2236 = vmatpush.msra.mxu0 0.0
        %2237 = vmatpush.msra.mxu0 0.0
        %2238 = vmatpush.msra.mxu0 0.0
        %2239 = vmatpush.msra.mxu0 0.0
        %2240 = vmatpush.msra.mxu0 %v1726
        %2241 = vmatpush.msra.mxu0 %v1722
        %2242 = vmatpush.msra.mxu0 %v1718
        %2243 = vmatmul.f32.gmra.mxu0 %v2193
        %v2244 = vpop.f32.mrf.mxu0
        %v2245 = vadd.f32 %v2180, %v2244
        %2246 = vmatmul.f32.gmra.mxu0 %v2196
        %v2247 = vpop.f32.mrf.mxu0
        %v2248 = vadd.f32 %v2185, %v2247
        %2249 = vmatmul.f32.gmra.mxu0 %v2199
        %v2250 = vpop.f32.mrf.mxu0
        %v2251 = vadd.f32 %v2190, %v2250
        %2252 = vdwg.mxu0
        %2253 = vmatpush.msra.mxu0 0.0
        %2254 = vmatpush.msra.mxu0 0.0
        %2255 = vmatpush.msra.mxu0 0.0
        %2256 = vmatpush.msra.mxu0 0.0
        %2257 = vmatpush.msra.mxu0 0.0
        %2258 = vmatpush.msra.mxu0 0.0
        %2259 = vmatpush.msra.mxu0 0.0
        %2260 = vmatpush.msra.mxu0 0.0
        %2261 = vmatpush.msra.mxu0 0.0
        %2262 = vmatpush.msra.mxu0 0.0
        %2263 = vmatpush.msra.mxu0 0.0
        %2264 = vmatpush.msra.mxu0 0.0
        %2265 = vmatpush.msra.mxu0 0.0
        %2266 = vmatpush.msra.mxu0 %v1727
        %2267 = vmatpush.msra.mxu0 %v1723
        %2268 = vmatpush.msra.mxu0 %v1719
        %2269 = vmatmul.f32.gmra.mxu0 %v2193
        %v2270 = vpop.f32.mrf.mxu0
        %v2271 = vadd.f32 %v2180, %v2270
        %2272 = vmatmul.f32.gmra.mxu0 %v2196
        %v2273 = vpop.f32.mrf.mxu0
        %v2274 = vadd.f32 %v2185, %v2273
        %2275 = vmatmul.f32.gmra.mxu0 %v2199
        %v2276 = vpop.f32.mrf.mxu0
        %v2277 = vadd.f32 %v2190, %v2276
        %2278 = vdwg.mxu0
        %2279 = vmatpush.msra.mxu0 0.0
        %2280 = vmatpush.msra.mxu0 0.0
        %2281 = vmatpush.msra.mxu0 0.0
        %2282 = vmatpush.msra.mxu0 0.0
        %2283 = vmatpush.msra.mxu0 0.0
        %2284 = vmatpush.msra.mxu0 0.0
        %2285 = vmatpush.msra.mxu0 0.0
        %2286 = vmatpush.msra.mxu0 0.0
        %2287 = vmatpush.msra.mxu0 0.0
        %2288 = vmatpush.msra.mxu0 0.0
        %2289 = vmatpush.msra.mxu0 0.0
        %2290 = vmatpush.msra.mxu0 0.0
        %2291 = vmatpush.msra.mxu0 0.0
        %2292 = vmatpush.msra.mxu0 %v1728
        %2293 = vmatpush.msra.mxu0 %v1724
        %2294 = vmatpush.msra.mxu0 %v1720
        %2295 = vmatmul.f32.gmra.mxu0 %v2193
        %v2296 = vpop.f32.mrf.mxu0
        %v2297 = vadd.f32 %v2180, %v2296
        %2298 = vmatmul.f32.gmra.mxu0 %v2196
        %v2299 = vpop.f32.mrf.mxu0
        %v2300 = vadd.f32 %v2185, %v2299
        %2301 = vmatmul.f32.gmra.mxu0 %v2199
        %v2302 = vpop.f32.mrf.mxu0
        %v2303 = vadd.f32 %v2190, %v2302
        %2304 = vdwg.mxu0
        %v2305 = vmul.f32 %v1759, %v2219
        %v2306 = vmul.f32 %v1760, %v2245
        %v2307 = vmul.f32 %v1761, %v2271
        %v2308 = vmul.f32 %v1762, %v2297
        %v2309 = vmul.f32 %v1765, %v2222
        %v2310 = vmul.f32 %v1766, %v2248
        %v2311 = vmul.f32 %v1767, %v2274
        %v2312 = vmul.f32 %v1768, %v2300
        %v2313 = vmul.f32 %v1771, %v2225
        %v2314 = vmul.f32 %v1772, %v2251
        %v2315 = vmul.f32 %v1773, %v2277
        %v2316 = vmul.f32 %v1774, %v2303
        %v2317 = vadd.f32 %v2165, %v2305
        %v2318 = vadd.f32 %v2166, %v2306
        %v2319 = vadd.f32 %v2167, %v2307
        %v2320 = vadd.f32 %v2168, %v2308
        %v2321 = vadd.f32 %v2169, %v2309
        %v2322 = vadd.f32 %v2170, %v2310
        %v2323 = vadd.f32 %v2171, %v2311
        %v2324 = vadd.f32 %v2172, %v2312
        %v2325 = vadd.f32 %v2173, %v2313
        %v2326 = vadd.f32 %v2174, %v2314
        %v2327 = vadd.f32 %v2175, %v2315
        %v2328 = vadd.f32 %v2176, %v2316
        %2329 = vrot.lane.b32.xlu0 %v1759, 127
        %v2330 = vpop.permute.xlu0 %2329
        %2331 = vrot.lane.b32.xlu0 %v1765, 127
        %v2332 = vpop.permute.xlu0 %2331
        %2333 = vrot.lane.b32.xlu0 %v1771, 127
        %v2334 = vpop.permute.xlu0 %2333
        %2335 = vrot.lane.b32.xlu0 %v1760, 127
        %v2336 = vpop.permute.xlu0 %2335
        %2337 = vrot.lane.b32.xlu0 %v1766, 127
        %v2338 = vpop.permute.xlu0 %2337
        %2339 = vrot.lane.b32.xlu0 %v1772, 127
        %v2340 = vpop.permute.xlu0 %2339
        %2341 = vrot.lane.b32.xlu0 %v1761, 127
        %v2342 = vpop.permute.xlu0 %2341
        %2343 = vrot.lane.b32.xlu0 %v1767, 127
        %v2344 = vpop.permute.xlu0 %2343
        %2345 = vrot.lane.b32.xlu0 %v1773, 127
        %v2346 = vpop.permute.xlu0 %2345
        %2347 = vrot.lane.b32.xlu0 %v1762, 127
        %v2348 = vpop.permute.xlu0 %2347
        %2349 = vrot.lane.b32.xlu0 %v1768, 127
        %v2350 = vpop.permute.xlu0 %2349
        %2351 = vrot.lane.b32.xlu0 %v1774, 127
        %v2352 = vpop.permute.xlu0 %2351
        %2353 = vrot.lane.b32.xlu0 %v1763, 127
        %v2354 = vpop.permute.xlu0 %2353
        %2355 = vrot.lane.b32.xlu0 %v1769, 127
        %v2356 = vpop.permute.xlu0 %2355
        %2357 = vrot.lane.b32.xlu0 %v1775, 127
        %v2358 = vpop.permute.xlu0 %2357
        %v2359 = vsel %vm1408, %v2348, %v2354
        %v2360 = vsel %vm1408, %v2350, %v2356
        %v2361 = vsel %vm1408, %v2352, %v2358
        %v2362 = vsel %vm1408, %v2342, %v2348
        %v2363 = vsel %vm1408, %v2344, %v2350
        %v2364 = vsel %vm1408, %v2346, %v2352
        %v2365 = vsel %vm1408, %v2336, %v2342
        %v2366 = vsel %vm1408, %v2338, %v2344
        %v2367 = vsel %vm1408, %v2340, %v2346
        %v2368 = vsel %vm1408, %v2330, %v2336
        %v2369 = vsel %vm1408, %v2332, %v2338
        %v2370 = vsel %vm1408, %v2334, %v2340
        %v2371 = vsel %vm1425, %v2368, 0.0
        %v2372 = vsel %vm1426, %v2365, 0.0
        %v2373 = vsel %vm1427, %v2362, 0.0
        %v2374 = vsel %vm1428, %v2359, 0.0
        %v2375 = vsel %vm1425, %v2369, 0.0
        %v2376 = vsel %vm1426, %v2366, 0.0
        %v2377 = vsel %vm1427, %v2363, 0.0
        %v2378 = vsel %vm1428, %v2360, 0.0
        %v2379 = vsel %vm1425, %v2370, 0.0
        %v2380 = vsel %vm1426, %v2367, 0.0
        %v2381 = vsel %vm1427, %v2364, 0.0
        %v2382 = vsel %vm1428, %v2361, 0.0
        %2384 = vset.pattern.permute.xlu0 0
        %2385 = vperm.xlu0 %2384, %v1810
        %v2386 = vpop.permute.xlu0 %2385
        %2389 = vset.pattern.permute.xlu0 0
        %2390 = vperm.xlu0 %2389, %v1811
        %v2391 = vpop.permute.xlu0 %2390
        %2394 = vset.pattern.permute.xlu0 0
        %2395 = vperm.xlu0 %2394, %v1812
        %v2396 = vpop.permute.xlu0 %2395
        %v2399 = vsel %vm668, %v1783, 0
        %v2402 = vsel %vm668, %v1784, 0
        %v2405 = vsel %vm668, %v1785, 0
        %2407 = vmatpush.msra.mxu0 0.0
        %2408 = vmatpush.msra.mxu0 0.0
        %2409 = vmatpush.msra.mxu0 0.0
        %2410 = vmatpush.msra.mxu0 0.0
        %2411 = vmatpush.msra.mxu0 0.0
        %2412 = vmatpush.msra.mxu0 0.0
        %2413 = vmatpush.msra.mxu0 0.0
        %2414 = vmatpush.msra.mxu0 0.0
        %2415 = vmatpush.msra.mxu0 0.0
        %2416 = vmatpush.msra.mxu0 0.0
        %2417 = vmatpush.msra.mxu0 0.0
        %2418 = vmatpush.msra.mxu0 0.0
        %2419 = vmatpush.msra.mxu0 0.0
        %2420 = vmatpush.msra.mxu0 %v1725
        %2421 = vmatpush.msra.mxu0 %v1721
        %2422 = vmatpush.msra.mxu0 %v1717
        %2423 = vmatmul.f32.gmra.mxu0 %v2399
        %v2424 = vpop.f32.mrf.mxu0
        %v2425 = vadd.f32 %v2386, %v2424
        %2426 = vmatmul.f32.gmra.mxu0 %v2402
        %v2427 = vpop.f32.mrf.mxu0
        %v2428 = vadd.f32 %v2391, %v2427
        %2429 = vmatmul.f32.gmra.mxu0 %v2405
        %v2430 = vpop.f32.mrf.mxu0
        %v2431 = vadd.f32 %v2396, %v2430
        %2432 = vdwg.mxu0
        %2433 = vmatpush.msra.mxu0 0.0
        %2434 = vmatpush.msra.mxu0 0.0
        %2435 = vmatpush.msra.mxu0 0.0
        %2436 = vmatpush.msra.mxu0 0.0
        %2437 = vmatpush.msra.mxu0 0.0
        %2438 = vmatpush.msra.mxu0 0.0
        %2439 = vmatpush.msra.mxu0 0.0
        %2440 = vmatpush.msra.mxu0 0.0
        %2441 = vmatpush.msra.mxu0 0.0
        %2442 = vmatpush.msra.mxu0 0.0
        %2443 = vmatpush.msra.mxu0 0.0
        %2444 = vmatpush.msra.mxu0 0.0
        %2445 = vmatpush.msra.mxu0 0.0
        %2446 = vmatpush.msra.mxu0 %v1726
        %2447 = vmatpush.msra.mxu0 %v1722
        %2448 = vmatpush.msra.mxu0 %v1718
        %2449 = vmatmul.f32.gmra.mxu0 %v2399
        %v2450 = vpop.f32.mrf.mxu0
        %v2451 = vadd.f32 %v2386, %v2450
        %2452 = vmatmul.f32.gmra.mxu0 %v2402
        %v2453 = vpop.f32.mrf.mxu0
        %v2454 = vadd.f32 %v2391, %v2453
        %2455 = vmatmul.f32.gmra.mxu0 %v2405
        %v2456 = vpop.f32.mrf.mxu0
        %v2457 = vadd.f32 %v2396, %v2456
        %2458 = vdwg.mxu0
        %2459 = vmatpush.msra.mxu0 0.0
        %2460 = vmatpush.msra.mxu0 0.0
        %2461 = vmatpush.msra.mxu0 0.0
        %2462 = vmatpush.msra.mxu0 0.0
        %2463 = vmatpush.msra.mxu0 0.0
        %2464 = vmatpush.msra.mxu0 0.0
        %2465 = vmatpush.msra.mxu0 0.0
        %2466 = vmatpush.msra.mxu0 0.0
        %2467 = vmatpush.msra.mxu0 0.0
        %2468 = vmatpush.msra.mxu0 0.0
        %2469 = vmatpush.msra.mxu0 0.0
        %2470 = vmatpush.msra.mxu0 0.0
        %2471 = vmatpush.msra.mxu0 0.0
        %2472 = vmatpush.msra.mxu0 %v1727
        %2473 = vmatpush.msra.mxu0 %v1723
        %2474 = vmatpush.msra.mxu0 %v1719
        %2475 = vmatmul.f32.gmra.mxu0 %v2399
        %v2476 = vpop.f32.mrf.mxu0
        %v2477 = vadd.f32 %v2386, %v2476
        %2478 = vmatmul.f32.gmra.mxu0 %v2402
        %v2479 = vpop.f32.mrf.mxu0
        %v2480 = vadd.f32 %v2391, %v2479
        %2481 = vmatmul.f32.gmra.mxu0 %v2405
        %v2482 = vpop.f32.mrf.mxu0
        %v2483 = vadd.f32 %v2396, %v2482
        %2484 = vdwg.mxu0
        %2485 = vmatpush.msra.mxu0 0.0
        %2486 = vmatpush.msra.mxu0 0.0
        %2487 = vmatpush.msra.mxu0 0.0
        %2488 = vmatpush.msra.mxu0 0.0
        %2489 = vmatpush.msra.mxu0 0.0
        %2490 = vmatpush.msra.mxu0 0.0
        %2491 = vmatpush.msra.mxu0 0.0
        %2492 = vmatpush.msra.mxu0 0.0
        %2493 = vmatpush.msra.mxu0 0.0
        %2494 = vmatpush.msra.mxu0 0.0
        %2495 = vmatpush.msra.mxu0 0.0
        %2496 = vmatpush.msra.mxu0 0.0
        %2497 = vmatpush.msra.mxu0 0.0
        %2498 = vmatpush.msra.mxu0 %v1728
        %2499 = vmatpush.msra.mxu0 %v1724
        %2500 = vmatpush.msra.mxu0 %v1720
        %2501 = vmatmul.f32.gmra.mxu0 %v2399
        %v2502 = vpop.f32.mrf.mxu0
        %v2503 = vadd.f32 %v2386, %v2502
        %2504 = vmatmul.f32.gmra.mxu0 %v2402
        %v2505 = vpop.f32.mrf.mxu0
        %v2506 = vadd.f32 %v2391, %v2505
        %2507 = vmatmul.f32.gmra.mxu0 %v2405
        %v2508 = vpop.f32.mrf.mxu0
        %v2509 = vadd.f32 %v2396, %v2508
        %2510 = vdwg.mxu0
        %v2511 = vmul.f32 %v2371, %v2425
        %v2512 = vmul.f32 %v2372, %v2451
        %v2513 = vmul.f32 %v2373, %v2477
        %v2514 = vmul.f32 %v2374, %v2503
        %v2515 = vmul.f32 %v2375, %v2428
        %v2516 = vmul.f32 %v2376, %v2454
        %v2517 = vmul.f32 %v2377, %v2480
        %v2518 = vmul.f32 %v2378, %v2506
        %v2519 = vmul.f32 %v2379, %v2431
        %v2520 = vmul.f32 %v2380, %v2457
        %v2521 = vmul.f32 %v2381, %v2483
        %v2522 = vmul.f32 %v2382, %v2509
        %v2523 = vadd.f32 %v2317, %v2511
        %v2524 = vadd.f32 %v2318, %v2512
        %v2525 = vadd.f32 %v2319, %v2513
        %v2526 = vadd.f32 %v2320, %v2514
        %v2527 = vadd.f32 %v2321, %v2515
        %v2528 = vadd.f32 %v2322, %v2516
        %v2529 = vadd.f32 %v2323, %v2517
        %v2530 = vadd.f32 %v2324, %v2518
        %v2531 = vadd.f32 %v2325, %v2519
        %v2532 = vadd.f32 %v2326, %v2520
        %v2533 = vadd.f32 %v2327, %v2521
        %v2534 = vadd.f32 %v2328, %v2522
        %2535 = vrot.lane.b32.xlu0 %v1763, 1
        %v2536 = vpop.permute.xlu0 %2535
        %2537 = vrot.lane.b32.xlu0 %v1769, 1
        %v2538 = vpop.permute.xlu0 %2537
        %2539 = vrot.lane.b32.xlu0 %v1775, 1
        %v2540 = vpop.permute.xlu0 %2539
        %v2541 = vsel %vm1273, %v1990, %v2536
        %v2542 = vsel %vm1273, %v1992, %v2538
        %v2543 = vsel %vm1273, %v1994, %v2540
        %v2544 = vsel %vm1290, %v2007, 0.0
        %v2545 = vsel %vm1291, %v2004, 0.0
        %v2546 = vsel %vm1292, %v2001, 0.0
        %v2547 = vsel %vm1293, %v2541, 0.0
        %v2548 = vsel %vm1290, %v2008, 0.0
        %v2549 = vsel %vm1291, %v2005, 0.0
        %v2550 = vsel %vm1292, %v2002, 0.0
        %v2551 = vsel %vm1293, %v2542, 0.0
        %v2552 = vsel %vm1290, %v2009, 0.0
        %v2553 = vsel %vm1291, %v2006, 0.0
        %v2554 = vsel %vm1292, %v2003, 0.0
        %v2555 = vsel %vm1293, %v2543, 0.0
        %2557 = vset.pattern.permute.xlu0 0
        %2558 = vperm.xlu0 %2557, %v1813
        %v2559 = vpop.permute.xlu0 %2558
        %2562 = vset.pattern.permute.xlu0 0
        %2563 = vperm.xlu0 %2562, %v1814
        %v2564 = vpop.permute.xlu0 %2563
        %2567 = vset.pattern.permute.xlu0 0
        %2568 = vperm.xlu0 %2567, %v1815
        %v2569 = vpop.permute.xlu0 %2568
        %v2572 = vsel %vm668, %v1786, 0
        %v2575 = vsel %vm668, %v1787, 0
        %v2578 = vsel %vm668, %v1788, 0
        %2580 = vmatpush.msra.mxu0 0.0
        %2581 = vmatpush.msra.mxu0 0.0
        %2582 = vmatpush.msra.mxu0 0.0
        %2583 = vmatpush.msra.mxu0 0.0
        %2584 = vmatpush.msra.mxu0 0.0
        %2585 = vmatpush.msra.mxu0 0.0
        %2586 = vmatpush.msra.mxu0 0.0
        %2587 = vmatpush.msra.mxu0 0.0
        %2588 = vmatpush.msra.mxu0 0.0
        %2589 = vmatpush.msra.mxu0 0.0
        %2590 = vmatpush.msra.mxu0 0.0
        %2591 = vmatpush.msra.mxu0 0.0
        %2592 = vmatpush.msra.mxu0 0.0
        %2593 = vmatpush.msra.mxu0 %v1725
        %2594 = vmatpush.msra.mxu0 %v1721
        %2595 = vmatpush.msra.mxu0 %v1717
        %2596 = vmatmul.f32.gmra.mxu0 %v2572
        %v2597 = vpop.f32.mrf.mxu0
        %v2598 = vadd.f32 %v2559, %v2597
        %2599 = vmatmul.f32.gmra.mxu0 %v2575
        %v2600 = vpop.f32.mrf.mxu0
        %v2601 = vadd.f32 %v2564, %v2600
        %2602 = vmatmul.f32.gmra.mxu0 %v2578
        %v2603 = vpop.f32.mrf.mxu0
        %v2604 = vadd.f32 %v2569, %v2603
        %2605 = vdwg.mxu0
        %2606 = vmatpush.msra.mxu0 0.0
        %2607 = vmatpush.msra.mxu0 0.0
        %2608 = vmatpush.msra.mxu0 0.0
        %2609 = vmatpush.msra.mxu0 0.0
        %2610 = vmatpush.msra.mxu0 0.0
        %2611 = vmatpush.msra.mxu0 0.0
        %2612 = vmatpush.msra.mxu0 0.0
        %2613 = vmatpush.msra.mxu0 0.0
        %2614 = vmatpush.msra.mxu0 0.0
        %2615 = vmatpush.msra.mxu0 0.0
        %2616 = vmatpush.msra.mxu0 0.0
        %2617 = vmatpush.msra.mxu0 0.0
        %2618 = vmatpush.msra.mxu0 0.0
        %2619 = vmatpush.msra.mxu0 %v1726
        %2620 = vmatpush.msra.mxu0 %v1722
        %2621 = vmatpush.msra.mxu0 %v1718
        %2622 = vmatmul.f32.gmra.mxu0 %v2572
        %v2623 = vpop.f32.mrf.mxu0
        %v2624 = vadd.f32 %v2559, %v2623
        %2625 = vmatmul.f32.gmra.mxu0 %v2575
        %v2626 = vpop.f32.mrf.mxu0
        %v2627 = vadd.f32 %v2564, %v2626
        %2628 = vmatmul.f32.gmra.mxu0 %v2578
        %v2629 = vpop.f32.mrf.mxu0
        %v2630 = vadd.f32 %v2569, %v2629
        %2631 = vdwg.mxu0
        %2632 = vmatpush.msra.mxu0 0.0
        %2633 = vmatpush.msra.mxu0 0.0
        %2634 = vmatpush.msra.mxu0 0.0
        %2635 = vmatpush.msra.mxu0 0.0
        %2636 = vmatpush.msra.mxu0 0.0
        %2637 = vmatpush.msra.mxu0 0.0
        %2638 = vmatpush.msra.mxu0 0.0
        %2639 = vmatpush.msra.mxu0 0.0
        %2640 = vmatpush.msra.mxu0 0.0
        %2641 = vmatpush.msra.mxu0 0.0
        %2642 = vmatpush.msra.mxu0 0.0
        %2643 = vmatpush.msra.mxu0 0.0
        %2644 = vmatpush.msra.mxu0 0.0
        %2645 = vmatpush.msra.mxu0 %v1727
        %2646 = vmatpush.msra.mxu0 %v1723
        %2647 = vmatpush.msra.mxu0 %v1719
        %2648 = vmatmul.f32.gmra.mxu0 %v2572
        %v2649 = vpop.f32.mrf.mxu0
        %v2650 = vadd.f32 %v2559, %v2649
        %2651 = vmatmul.f32.gmra.mxu0 %v2575
        %v2652 = vpop.f32.mrf.mxu0
        %v2653 = vadd.f32 %v2564, %v2652
        %2654 = vmatmul.f32.gmra.mxu0 %v2578
        %v2655 = vpop.f32.mrf.mxu0
        %v2656 = vadd.f32 %v2569, %v2655
        %2657 = vdwg.mxu0
        %2658 = vmatpush.msra.mxu0 0.0
        %2659 = vmatpush.msra.mxu0 0.0
        %2660 = vmatpush.msra.mxu0 0.0
        %2661 = vmatpush.msra.mxu0 0.0
        %2662 = vmatpush.msra.mxu0 0.0
        %2663 = vmatpush.msra.mxu0 0.0
        %2664 = vmatpush.msra.mxu0 0.0
        %2665 = vmatpush.msra.mxu0 0.0
        %2666 = vmatpush.msra.mxu0 0.0
        %2667 = vmatpush.msra.mxu0 0.0
        %2668 = vmatpush.msra.mxu0 0.0
        %2669 = vmatpush.msra.mxu0 0.0
        %2670 = vmatpush.msra.mxu0 0.0
        %2671 = vmatpush.msra.mxu0 %v1728
        %2672 = vmatpush.msra.mxu0 %v1724
        %2673 = vmatpush.msra.mxu0 %v1720
        %2674 = vmatmul.f32.gmra.mxu0 %v2572
        %v2675 = vpop.f32.mrf.mxu0
        %v2676 = vadd.f32 %v2559, %v2675
        %2677 = vmatmul.f32.gmra.mxu0 %v2575
        %v2678 = vpop.f32.mrf.mxu0
        %v2679 = vadd.f32 %v2564, %v2678
        %2680 = vmatmul.f32.gmra.mxu0 %v2578
        %v2681 = vpop.f32.mrf.mxu0
        %v2682 = vadd.f32 %v2569, %v2681
        %2683 = vdwg.mxu0
        %v2684 = vmul.f32 %v2544, %v2598
        %v2685 = vmul.f32 %v2545, %v2624
        %v2686 = vmul.f32 %v2546, %v2650
        %v2687 = vmul.f32 %v2547, %v2676
        %v2688 = vmul.f32 %v2548, %v2601
        %v2689 = vmul.f32 %v2549, %v2627
        %v2690 = vmul.f32 %v2550, %v2653
        %v2691 = vmul.f32 %v2551, %v2679
        %v2692 = vmul.f32 %v2552, %v2604
        %v2693 = vmul.f32 %v2553, %v2630
        %v2694 = vmul.f32 %v2554, %v2656
        %v2695 = vmul.f32 %v2555, %v2682
        %v2696 = vadd.f32 %v2523, %v2684
        %v2697 = vadd.f32 %v2524, %v2685
        %v2698 = vadd.f32 %v2525, %v2686
        %v2699 = vadd.f32 %v2526, %v2687
        %v2700 = vadd.f32 %v2527, %v2688
        %v2701 = vadd.f32 %v2528, %v2689
        %v2702 = vadd.f32 %v2529, %v2690
        %v2703 = vadd.f32 %v2530, %v2691
        %v2704 = vadd.f32 %v2531, %v2692
        %v2705 = vadd.f32 %v2532, %v2693
        %v2706 = vadd.f32 %v2533, %v2694
        %v2707 = vadd.f32 %v2534, %v2695
        %2708 = vrot.lane.b32.xlu0 %v1764, 127
        %v2709 = vpop.permute.xlu0 %2708
        %2710 = vrot.lane.b32.xlu0 %v1770, 127
        %v2711 = vpop.permute.xlu0 %2710
        %2712 = vrot.lane.b32.xlu0 %v1776, 127
        %v2713 = vpop.permute.xlu0 %2712
        %v2714 = vsel %vm1408, %v2354, %v2709
        %v2715 = vsel %vm1408, %v2356, %v2711
        %v2716 = vsel %vm1408, %v2358, %v2713
        %v2717 = vsel %vm1425, %v2365, 0.0
        %v2718 = vsel %vm1426, %v2362, 0.0
        %v2719 = vsel %vm1427, %v2359, 0.0
        %v2720 = vsel %vm1428, %v2714, 0.0
        %v2721 = vsel %vm1425, %v2366, 0.0
        %v2722 = vsel %vm1426, %v2363, 0.0
        %v2723 = vsel %vm1427, %v2360, 0.0
        %v2724 = vsel %vm1428, %v2715, 0.0
        %v2725 = vsel %vm1425, %v2367, 0.0
        %v2726 = vsel %vm1426, %v2364, 0.0
        %v2727 = vsel %vm1427, %v2361, 0.0
        %v2728 = vsel %vm1428, %v2716, 0.0
        %2730 = vset.pattern.permute.xlu0 0
        %2731 = vperm.xlu0 %2730, %v1819
        %v2732 = vpop.permute.xlu0 %2731
        %2735 = vset.pattern.permute.xlu0 0
        %2736 = vperm.xlu0 %2735, %v1820
        %v2737 = vpop.permute.xlu0 %2736
        %2740 = vset.pattern.permute.xlu0 0
        %2741 = vperm.xlu0 %2740, %v1821
        %v2742 = vpop.permute.xlu0 %2741
        %v2745 = vsel %vm668, %v1792, 0
        %v2748 = vsel %vm668, %v1793, 0
        %v2751 = vsel %vm668, %v1794, 0
        %2753 = vmatpush.msra.mxu0 0.0
        %2754 = vmatpush.msra.mxu0 0.0
        %2755 = vmatpush.msra.mxu0 0.0
        %2756 = vmatpush.msra.mxu0 0.0
        %2757 = vmatpush.msra.mxu0 0.0
        %2758 = vmatpush.msra.mxu0 0.0
        %2759 = vmatpush.msra.mxu0 0.0
        %2760 = vmatpush.msra.mxu0 0.0
        %2761 = vmatpush.msra.mxu0 0.0
        %2762 = vmatpush.msra.mxu0 0.0
        %2763 = vmatpush.msra.mxu0 0.0
        %2764 = vmatpush.msra.mxu0 0.0
        %2765 = vmatpush.msra.mxu0 0.0
        %2766 = vmatpush.msra.mxu0 %v1725
        %2767 = vmatpush.msra.mxu0 %v1721
        %2768 = vmatpush.msra.mxu0 %v1717
        %2769 = vmatmul.f32.gmra.mxu0 %v2745
        %v2770 = vpop.f32.mrf.mxu0
        %v2771 = vadd.f32 %v2732, %v2770
        %2772 = vmatmul.f32.gmra.mxu0 %v2748
        %v2773 = vpop.f32.mrf.mxu0
        %v2774 = vadd.f32 %v2737, %v2773
        %2775 = vmatmul.f32.gmra.mxu0 %v2751
        %v2776 = vpop.f32.mrf.mxu0
        %v2777 = vadd.f32 %v2742, %v2776
        %2778 = vdwg.mxu0
        %2779 = vmatpush.msra.mxu0 0.0
        %2780 = vmatpush.msra.mxu0 0.0
        %2781 = vmatpush.msra.mxu0 0.0
        %2782 = vmatpush.msra.mxu0 0.0
        %2783 = vmatpush.msra.mxu0 0.0
        %2784 = vmatpush.msra.mxu0 0.0
        %2785 = vmatpush.msra.mxu0 0.0
        %2786 = vmatpush.msra.mxu0 0.0
        %2787 = vmatpush.msra.mxu0 0.0
        %2788 = vmatpush.msra.mxu0 0.0
        %2789 = vmatpush.msra.mxu0 0.0
        %2790 = vmatpush.msra.mxu0 0.0
        %2791 = vmatpush.msra.mxu0 0.0
        %2792 = vmatpush.msra.mxu0 %v1726
        %2793 = vmatpush.msra.mxu0 %v1722
        %2794 = vmatpush.msra.mxu0 %v1718
        %2795 = vmatmul.f32.gmra.mxu0 %v2745
        %v2796 = vpop.f32.mrf.mxu0
        %v2797 = vadd.f32 %v2732, %v2796
        %2798 = vmatmul.f32.gmra.mxu0 %v2748
        %v2799 = vpop.f32.mrf.mxu0
        %v2800 = vadd.f32 %v2737, %v2799
        %2801 = vmatmul.f32.gmra.mxu0 %v2751
        %v2802 = vpop.f32.mrf.mxu0
        %v2803 = vadd.f32 %v2742, %v2802
        %2804 = vdwg.mxu0
        %2805 = vmatpush.msra.mxu0 0.0
        %2806 = vmatpush.msra.mxu0 0.0
        %2807 = vmatpush.msra.mxu0 0.0
        %2808 = vmatpush.msra.mxu0 0.0
        %2809 = vmatpush.msra.mxu0 0.0
        %2810 = vmatpush.msra.mxu0 0.0
        %2811 = vmatpush.msra.mxu0 0.0
        %2812 = vmatpush.msra.mxu0 0.0
        %2813 = vmatpush.msra.mxu0 0.0
        %2814 = vmatpush.msra.mxu0 0.0
        %2815 = vmatpush.msra.mxu0 0.0
        %2816 = vmatpush.msra.mxu0 0.0
        %2817 = vmatpush.msra.mxu0 0.0
        %2818 = vmatpush.msra.mxu0 %v1727
        %2819 = vmatpush.msra.mxu0 %v1723
        %2820 = vmatpush.msra.mxu0 %v1719
        %2821 = vmatmul.f32.gmra.mxu0 %v2745
        %v2822 = vpop.f32.mrf.mxu0
        %v2823 = vadd.f32 %v2732, %v2822
        %2824 = vmatmul.f32.gmra.mxu0 %v2748
        %v2825 = vpop.f32.mrf.mxu0
        %v2826 = vadd.f32 %v2737, %v2825
        %2827 = vmatmul.f32.gmra.mxu0 %v2751
        %v2828 = vpop.f32.mrf.mxu0
        %v2829 = vadd.f32 %v2742, %v2828
        %2830 = vdwg.mxu0
        %2831 = vmatpush.msra.mxu0 0.0
        %2832 = vmatpush.msra.mxu0 0.0
        %2833 = vmatpush.msra.mxu0 0.0
        %2834 = vmatpush.msra.mxu0 0.0
        %2835 = vmatpush.msra.mxu0 0.0
        %2836 = vmatpush.msra.mxu0 0.0
        %2837 = vmatpush.msra.mxu0 0.0
        %2838 = vmatpush.msra.mxu0 0.0
        %2839 = vmatpush.msra.mxu0 0.0
        %2840 = vmatpush.msra.mxu0 0.0
        %2841 = vmatpush.msra.mxu0 0.0
        %2842 = vmatpush.msra.mxu0 0.0
        %2843 = vmatpush.msra.mxu0 0.0
        %2844 = vmatpush.msra.mxu0 %v1728
        %2845 = vmatpush.msra.mxu0 %v1724
        %2846 = vmatpush.msra.mxu0 %v1720
        %2847 = vmatmul.f32.gmra.mxu0 %v2745
        %v2848 = vpop.f32.mrf.mxu0
        %v2849 = vadd.f32 %v2732, %v2848
        %2850 = vmatmul.f32.gmra.mxu0 %v2748
        %v2851 = vpop.f32.mrf.mxu0
        %v2852 = vadd.f32 %v2737, %v2851
        %2853 = vmatmul.f32.gmra.mxu0 %v2751
        %v2854 = vpop.f32.mrf.mxu0
        %v2855 = vadd.f32 %v2742, %v2854
        %2856 = vdwg.mxu0
        %v2857 = vmul.f32 %v2717, %v2771
        %v2858 = vmul.f32 %v2718, %v2797
        %v2859 = vmul.f32 %v2719, %v2823
        %v2860 = vmul.f32 %v2720, %v2849
        %v2861 = vmul.f32 %v2721, %v2774
        %v2862 = vmul.f32 %v2722, %v2800
        %v2863 = vmul.f32 %v2723, %v2826
        %v2864 = vmul.f32 %v2724, %v2852
        %v2865 = vmul.f32 %v2725, %v2777
        %v2866 = vmul.f32 %v2726, %v2803
        %v2867 = vmul.f32 %v2727, %v2829
        %v2868 = vmul.f32 %v2728, %v2855
        %v2869 = vadd.f32 %v2696, %v2857
        %v2870 = vadd.f32 %v2697, %v2858
        %v2871 = vadd.f32 %v2698, %v2859
        %v2872 = vadd.f32 %v2699, %v2860
        %v2873 = vadd.f32 %v2700, %v2861
        %v2874 = vadd.f32 %v2701, %v2862
        %v2875 = vadd.f32 %v2702, %v2863
        %v2876 = vadd.f32 %v2703, %v2864
        %v2877 = vadd.f32 %v2704, %v2865
        %v2878 = vadd.f32 %v2705, %v2866
        %v2879 = vadd.f32 %v2706, %v2867
        %v2880 = vadd.f32 %v2707, %v2868
        %v2881 = vsel %vm1273, %v2536, %v1996
        %v2882 = vsel %vm1273, %v2538, %v1998
        %v2883 = vsel %vm1273, %v2540, %v2000
        %v2884 = vsel %vm1290, %v2004, 0.0
        %v2885 = vsel %vm1291, %v2001, 0.0
        %v2886 = vsel %vm1292, %v2541, 0.0
        %v2887 = vsel %vm1293, %v2881, 0.0
        %v2888 = vsel %vm1290, %v2005, 0.0
        %v2889 = vsel %vm1291, %v2002, 0.0
        %v2890 = vsel %vm1292, %v2542, 0.0
        %v2891 = vsel %vm1293, %v2882, 0.0
        %v2892 = vsel %vm1290, %v2006, 0.0
        %v2893 = vsel %vm1291, %v2003, 0.0
        %v2894 = vsel %vm1292, %v2543, 0.0
        %v2895 = vsel %vm1293, %v2883, 0.0
        %2897 = vset.pattern.permute.xlu0 0
        %2898 = vperm.xlu0 %2897, %v1822
        %v2899 = vpop.permute.xlu0 %2898
        %2902 = vset.pattern.permute.xlu0 0
        %2903 = vperm.xlu0 %2902, %v1823
        %v2904 = vpop.permute.xlu0 %2903
        %2907 = vset.pattern.permute.xlu0 0
        %2908 = vperm.xlu0 %2907, %v1824
        %v2909 = vpop.permute.xlu0 %2908
        %v2912 = vsel %vm668, %v1795, 0
        %v2915 = vsel %vm668, %v1796, 0
        %v2918 = vsel %vm668, %v1797, 0
        %2920 = vmatpush.msra.mxu0 0.0
        %2921 = vmatpush.msra.mxu0 0.0
        %2922 = vmatpush.msra.mxu0 0.0
        %2923 = vmatpush.msra.mxu0 0.0
        %2924 = vmatpush.msra.mxu0 0.0
        %2925 = vmatpush.msra.mxu0 0.0
        %2926 = vmatpush.msra.mxu0 0.0
        %2927 = vmatpush.msra.mxu0 0.0
        %2928 = vmatpush.msra.mxu0 0.0
        %2929 = vmatpush.msra.mxu0 0.0
        %2930 = vmatpush.msra.mxu0 0.0
        %2931 = vmatpush.msra.mxu0 0.0
        %2932 = vmatpush.msra.mxu0 0.0
        %2933 = vmatpush.msra.mxu0 %v1725
        %2934 = vmatpush.msra.mxu0 %v1721
        %2935 = vmatpush.msra.mxu0 %v1717
        %2936 = vmatmul.f32.gmra.mxu0 %v2912
        %v2937 = vpop.f32.mrf.mxu0
        %v2938 = vadd.f32 %v2899, %v2937
        %2939 = vmatmul.f32.gmra.mxu0 %v2915
        %v2940 = vpop.f32.mrf.mxu0
        %v2941 = vadd.f32 %v2904, %v2940
        %2942 = vmatmul.f32.gmra.mxu0 %v2918
        %v2943 = vpop.f32.mrf.mxu0
        %v2944 = vadd.f32 %v2909, %v2943
        %2945 = vdwg.mxu0
        %2946 = vmatpush.msra.mxu0 0.0
        %2947 = vmatpush.msra.mxu0 0.0
        %2948 = vmatpush.msra.mxu0 0.0
        %2949 = vmatpush.msra.mxu0 0.0
        %2950 = vmatpush.msra.mxu0 0.0
        %2951 = vmatpush.msra.mxu0 0.0
        %2952 = vmatpush.msra.mxu0 0.0
        %2953 = vmatpush.msra.mxu0 0.0
        %2954 = vmatpush.msra.mxu0 0.0
        %2955 = vmatpush.msra.mxu0 0.0
        %2956 = vmatpush.msra.mxu0 0.0
        %2957 = vmatpush.msra.mxu0 0.0
        %2958 = vmatpush.msra.mxu0 0.0
        %2959 = vmatpush.msra.mxu0 %v1726
        %2960 = vmatpush.msra.mxu0 %v1722
        %2961 = vmatpush.msra.mxu0 %v1718
        %2962 = vmatmul.f32.gmra.mxu0 %v2912
        %v2963 = vpop.f32.mrf.mxu0
        %v2964 = vadd.f32 %v2899, %v2963
        %2965 = vmatmul.f32.gmra.mxu0 %v2915
        %v2966 = vpop.f32.mrf.mxu0
        %v2967 = vadd.f32 %v2904, %v2966
        %2968 = vmatmul.f32.gmra.mxu0 %v2918
        %v2969 = vpop.f32.mrf.mxu0
        %v2970 = vadd.f32 %v2909, %v2969
        %2971 = vdwg.mxu0
        %2972 = vmatpush.msra.mxu0 0.0
        %2973 = vmatpush.msra.mxu0 0.0
        %2974 = vmatpush.msra.mxu0 0.0
        %2975 = vmatpush.msra.mxu0 0.0
        %2976 = vmatpush.msra.mxu0 0.0
        %2977 = vmatpush.msra.mxu0 0.0
        %2978 = vmatpush.msra.mxu0 0.0
        %2979 = vmatpush.msra.mxu0 0.0
        %2980 = vmatpush.msra.mxu0 0.0
        %2981 = vmatpush.msra.mxu0 0.0
        %2982 = vmatpush.msra.mxu0 0.0
        %2983 = vmatpush.msra.mxu0 0.0
        %2984 = vmatpush.msra.mxu0 0.0
        %2985 = vmatpush.msra.mxu0 %v1727
        %2986 = vmatpush.msra.mxu0 %v1723
        %2987 = vmatpush.msra.mxu0 %v1719
        %2988 = vmatmul.f32.gmra.mxu0 %v2912
        %v2989 = vpop.f32.mrf.mxu0
        %v2990 = vadd.f32 %v2899, %v2989
        %2991 = vmatmul.f32.gmra.mxu0 %v2915
        %v2992 = vpop.f32.mrf.mxu0
        %v2993 = vadd.f32 %v2904, %v2992
        %2994 = vmatmul.f32.gmra.mxu0 %v2918
        %v2995 = vpop.f32.mrf.mxu0
        %v2996 = vadd.f32 %v2909, %v2995
        %2997 = vdwg.mxu0
        %2998 = vmatpush.msra.mxu0 0.0
        %2999 = vmatpush.msra.mxu0 0.0
        %3000 = vmatpush.msra.mxu0 0.0
        %3001 = vmatpush.msra.mxu0 0.0
        %3002 = vmatpush.msra.mxu0 0.0
        %3003 = vmatpush.msra.mxu0 0.0
        %3004 = vmatpush.msra.mxu0 0.0
        %3005 = vmatpush.msra.mxu0 0.0
        %3006 = vmatpush.msra.mxu0 0.0
        %3007 = vmatpush.msra.mxu0 0.0
        %3008 = vmatpush.msra.mxu0 0.0
        %3009 = vmatpush.msra.mxu0 0.0
        %3010 = vmatpush.msra.mxu0 0.0
        %3011 = vmatpush.msra.mxu0 %v1728
        %3012 = vmatpush.msra.mxu0 %v1724
        %3013 = vmatpush.msra.mxu0 %v1720
        %3014 = vmatmul.f32.gmra.mxu0 %v2912
        %v3015 = vpop.f32.mrf.mxu0
        %v3016 = vadd.f32 %v2899, %v3015
        %3017 = vmatmul.f32.gmra.mxu0 %v2915
        %v3018 = vpop.f32.mrf.mxu0
        %v3019 = vadd.f32 %v2904, %v3018
        %3020 = vmatmul.f32.gmra.mxu0 %v2918
        %v3021 = vpop.f32.mrf.mxu0
        %v3022 = vadd.f32 %v2909, %v3021
        %3023 = vdwg.mxu0
        %v3024 = vmul.f32 %v2884, %v2938
        %v3025 = vmul.f32 %v2885, %v2964
        %v3026 = vmul.f32 %v2886, %v2990
        %v3027 = vmul.f32 %v2887, %v3016
        %v3028 = vmul.f32 %v2888, %v2941
        %v3029 = vmul.f32 %v2889, %v2967
        %v3030 = vmul.f32 %v2890, %v2993
        %v3031 = vmul.f32 %v2891, %v3019
        %v3032 = vmul.f32 %v2892, %v2944
        %v3033 = vmul.f32 %v2893, %v2970
        %v3034 = vmul.f32 %v2894, %v2996
        %v3035 = vmul.f32 %v2895, %v3022
        %v3036 = vadd.f32 %v2869, %v3024
        %v3037 = vadd.f32 %v2870, %v3025
        %v3038 = vadd.f32 %v2871, %v3026
        %v3039 = vadd.f32 %v2872, %v3027
        %v3040 = vadd.f32 %v2873, %v3028
        %v3041 = vadd.f32 %v2874, %v3029
        %v3042 = vadd.f32 %v2875, %v3030
        %v3043 = vadd.f32 %v2876, %v3031
        %v3044 = vadd.f32 %v2877, %v3032
        %v3045 = vadd.f32 %v2878, %v3033
        %v3046 = vadd.f32 %v2879, %v3034
        %v3047 = vadd.f32 %v2880, %v3035
        %3049 = vset.pattern.permute.xlu0 0
        %3050 = vperm.xlu0 %3049, %v1825
        %v3051 = vpop.permute.xlu0 %3050
        %3054 = vset.pattern.permute.xlu0 0
        %3055 = vperm.xlu0 %3054, %v1826
        %v3056 = vpop.permute.xlu0 %3055
        %3059 = vset.pattern.permute.xlu0 0
        %3060 = vperm.xlu0 %3059, %v1827
        %v3061 = vpop.permute.xlu0 %3060
        %v3064 = vsel %vm668, %v1798, 0
        %v3067 = vsel %vm668, %v1799, 0
        %v3070 = vsel %vm668, %v1800, 0
        %3072 = vmatpush.msra.mxu0 0.0
        %3073 = vmatpush.msra.mxu0 0.0
        %3074 = vmatpush.msra.mxu0 0.0
        %3075 = vmatpush.msra.mxu0 0.0
        %3076 = vmatpush.msra.mxu0 0.0
        %3077 = vmatpush.msra.mxu0 0.0
        %3078 = vmatpush.msra.mxu0 0.0
        %3079 = vmatpush.msra.mxu0 0.0
        %3080 = vmatpush.msra.mxu0 0.0
        %3081 = vmatpush.msra.mxu0 0.0
        %3082 = vmatpush.msra.mxu0 0.0
        %3083 = vmatpush.msra.mxu0 0.0
        %3084 = vmatpush.msra.mxu0 0.0
        %3085 = vmatpush.msra.mxu0 %v1725
        %3086 = vmatpush.msra.mxu0 %v1721
        %3087 = vmatpush.msra.mxu0 %v1717
        %3088 = vmatmul.f32.gmra.mxu0 %v3064
        %v3089 = vpop.f32.mrf.mxu0
        %v3090 = vadd.f32 %v3051, %v3089
        %3091 = vmatmul.f32.gmra.mxu0 %v3067
        %v3092 = vpop.f32.mrf.mxu0
        %v3093 = vadd.f32 %v3056, %v3092
        %3094 = vmatmul.f32.gmra.mxu0 %v3070
        %v3095 = vpop.f32.mrf.mxu0
        %v3096 = vadd.f32 %v3061, %v3095
        %3097 = vdwg.mxu0
        %3098 = vmatpush.msra.mxu0 0.0
        %3099 = vmatpush.msra.mxu0 0.0
        %3100 = vmatpush.msra.mxu0 0.0
        %3101 = vmatpush.msra.mxu0 0.0
        %3102 = vmatpush.msra.mxu0 0.0
        %3103 = vmatpush.msra.mxu0 0.0
        %3104 = vmatpush.msra.mxu0 0.0
        %3105 = vmatpush.msra.mxu0 0.0
        %3106 = vmatpush.msra.mxu0 0.0
        %3107 = vmatpush.msra.mxu0 0.0
        %3108 = vmatpush.msra.mxu0 0.0
        %3109 = vmatpush.msra.mxu0 0.0
        %3110 = vmatpush.msra.mxu0 0.0
        %3111 = vmatpush.msra.mxu0 %v1726
        %3112 = vmatpush.msra.mxu0 %v1722
        %3113 = vmatpush.msra.mxu0 %v1718
        %3114 = vmatmul.f32.gmra.mxu0 %v3064
        %v3115 = vpop.f32.mrf.mxu0
        %v3116 = vadd.f32 %v3051, %v3115
        %3117 = vmatmul.f32.gmra.mxu0 %v3067
        %v3118 = vpop.f32.mrf.mxu0
        %v3119 = vadd.f32 %v3056, %v3118
        %3120 = vmatmul.f32.gmra.mxu0 %v3070
        %v3121 = vpop.f32.mrf.mxu0
        %v3122 = vadd.f32 %v3061, %v3121
        %3123 = vdwg.mxu0
        %3124 = vmatpush.msra.mxu0 0.0
        %3125 = vmatpush.msra.mxu0 0.0
        %3126 = vmatpush.msra.mxu0 0.0
        %3127 = vmatpush.msra.mxu0 0.0
        %3128 = vmatpush.msra.mxu0 0.0
        %3129 = vmatpush.msra.mxu0 0.0
        %3130 = vmatpush.msra.mxu0 0.0
        %3131 = vmatpush.msra.mxu0 0.0
        %3132 = vmatpush.msra.mxu0 0.0
        %3133 = vmatpush.msra.mxu0 0.0
        %3134 = vmatpush.msra.mxu0 0.0
        %3135 = vmatpush.msra.mxu0 0.0
        %3136 = vmatpush.msra.mxu0 0.0
        %3137 = vmatpush.msra.mxu0 %v1727
        %3138 = vmatpush.msra.mxu0 %v1723
        %3139 = vmatpush.msra.mxu0 %v1719
        %3140 = vmatmul.f32.gmra.mxu0 %v3064
        %v3141 = vpop.f32.mrf.mxu0
        %v3142 = vadd.f32 %v3051, %v3141
        %3143 = vmatmul.f32.gmra.mxu0 %v3067
        %v3144 = vpop.f32.mrf.mxu0
        %v3145 = vadd.f32 %v3056, %v3144
        %3146 = vmatmul.f32.gmra.mxu0 %v3070
        %v3147 = vpop.f32.mrf.mxu0
        %v3148 = vadd.f32 %v3061, %v3147
        %3149 = vdwg.mxu0
        %3150 = vmatpush.msra.mxu0 0.0
        %3151 = vmatpush.msra.mxu0 0.0
        %3152 = vmatpush.msra.mxu0 0.0
        %3153 = vmatpush.msra.mxu0 0.0
        %3154 = vmatpush.msra.mxu0 0.0
        %3155 = vmatpush.msra.mxu0 0.0
        %3156 = vmatpush.msra.mxu0 0.0
        %3157 = vmatpush.msra.mxu0 0.0
        %3158 = vmatpush.msra.mxu0 0.0
        %3159 = vmatpush.msra.mxu0 0.0
        %3160 = vmatpush.msra.mxu0 0.0
        %3161 = vmatpush.msra.mxu0 0.0
        %3162 = vmatpush.msra.mxu0 0.0
        %3163 = vmatpush.msra.mxu0 %v1728
        %3164 = vmatpush.msra.mxu0 %v1724
        %3165 = vmatpush.msra.mxu0 %v1720
        %3166 = vmatmul.f32.gmra.mxu0 %v3064
        %v3167 = vpop.f32.mrf.mxu0
        %v3168 = vadd.f32 %v3051, %v3167
        %3169 = vmatmul.f32.gmra.mxu0 %v3067
        %v3170 = vpop.f32.mrf.mxu0
        %v3171 = vadd.f32 %v3056, %v3170
        %3172 = vmatmul.f32.gmra.mxu0 %v3070
        %v3173 = vpop.f32.mrf.mxu0
        %v3174 = vadd.f32 %v3061, %v3173
        %3175 = vdwg.mxu0
        %v3176 = vmul.f32 %v1761, %v3090
        %v3177 = vmul.f32 %v1762, %v3116
        %v3178 = vmul.f32 %v1763, %v3142
        %v3179 = vmul.f32 %v1764, %v3168
        %v3180 = vmul.f32 %v1767, %v3093
        %v3181 = vmul.f32 %v1768, %v3119
        %v3182 = vmul.f32 %v1769, %v3145
        %v3183 = vmul.f32 %v1770, %v3171
        %v3184 = vmul.f32 %v1773, %v3096
        %v3185 = vmul.f32 %v1774, %v3122
        %v3186 = vmul.f32 %v1775, %v3148
        %v3187 = vmul.f32 %v1776, %v3174
        %v3188 = vadd.f32 %v3036, %v3176
        %v3189 = vadd.f32 %v3037, %v3177
        %v3190 = vadd.f32 %v3038, %v3178
        %v3191 = vadd.f32 %v3039, %v3179
        %v3192 = vadd.f32 %v3040, %v3180
        %v3193 = vadd.f32 %v3041, %v3181
        %v3194 = vadd.f32 %v3042, %v3182
        %v3195 = vadd.f32 %v3043, %v3183
        %v3196 = vadd.f32 %v3044, %v3184
        %v3197 = vadd.f32 %v3045, %v3185
        %v3198 = vadd.f32 %v3046, %v3186
        %v3199 = vadd.f32 %v3047, %v3187
        %v3200 = vsel %vm1408, %v2709, %v2330
        %v3201 = vsel %vm1408, %v2711, %v2332
        %v3202 = vsel %vm1408, %v2713, %v2334
        %v3203 = vsel %vm1425, %v2362, 0.0
        %v3204 = vsel %vm1426, %v2359, 0.0
        %v3205 = vsel %vm1427, %v2714, 0.0
        %v3206 = vsel %vm1428, %v3200, 0.0
        %v3207 = vsel %vm1425, %v2363, 0.0
        %v3208 = vsel %vm1426, %v2360, 0.0
        %v3209 = vsel %vm1427, %v2715, 0.0
        %v3210 = vsel %vm1428, %v3201, 0.0
        %v3211 = vsel %vm1425, %v2364, 0.0
        %v3212 = vsel %vm1426, %v2361, 0.0
        %v3213 = vsel %vm1427, %v2716, 0.0
        %v3214 = vsel %vm1428, %v3202, 0.0
        %3216 = vset.pattern.permute.xlu0 0
        %3217 = vperm.xlu0 %3216, %v1828
        %v3218 = vpop.permute.xlu0 %3217
        %3221 = vset.pattern.permute.xlu0 0
        %3222 = vperm.xlu0 %3221, %v1829
        %v3223 = vpop.permute.xlu0 %3222
        %3226 = vset.pattern.permute.xlu0 0
        %3227 = vperm.xlu0 %3226, %v1830
        %v3228 = vpop.permute.xlu0 %3227
        %v3231 = vsel %vm668, %v1801, 0
        %v3234 = vsel %vm668, %v1802, 0
        %v3237 = vsel %vm668, %v1803, 0
        %3239 = vmatpush.msra.mxu0 0.0
        %3240 = vmatpush.msra.mxu0 0.0
        %3241 = vmatpush.msra.mxu0 0.0
        %3242 = vmatpush.msra.mxu0 0.0
        %3243 = vmatpush.msra.mxu0 0.0
        %3244 = vmatpush.msra.mxu0 0.0
        %3245 = vmatpush.msra.mxu0 0.0
        %3246 = vmatpush.msra.mxu0 0.0
        %3247 = vmatpush.msra.mxu0 0.0
        %3248 = vmatpush.msra.mxu0 0.0
        %3249 = vmatpush.msra.mxu0 0.0
        %3250 = vmatpush.msra.mxu0 0.0
        %3251 = vmatpush.msra.mxu0 0.0
        %3252 = vmatpush.msra.mxu0 %v1725
        %3253 = vmatpush.msra.mxu0 %v1721
        %3254 = vmatpush.msra.mxu0 %v1717
        %3255 = vmatmul.f32.gmra.mxu0 %v3231
        %v3256 = vpop.f32.mrf.mxu0
        %v3257 = vadd.f32 %v3218, %v3256
        %3258 = vmatmul.f32.gmra.mxu0 %v3234
        %v3259 = vpop.f32.mrf.mxu0
        %v3260 = vadd.f32 %v3223, %v3259
        %3261 = vmatmul.f32.gmra.mxu0 %v3237
        %v3262 = vpop.f32.mrf.mxu0
        %v3263 = vadd.f32 %v3228, %v3262
        %3264 = vdwg.mxu0
        %3265 = vmatpush.msra.mxu0 0.0
        %3266 = vmatpush.msra.mxu0 0.0
        %3267 = vmatpush.msra.mxu0 0.0
        %3268 = vmatpush.msra.mxu0 0.0
        %3269 = vmatpush.msra.mxu0 0.0
        %3270 = vmatpush.msra.mxu0 0.0
        %3271 = vmatpush.msra.mxu0 0.0
        %3272 = vmatpush.msra.mxu0 0.0
        %3273 = vmatpush.msra.mxu0 0.0
        %3274 = vmatpush.msra.mxu0 0.0
        %3275 = vmatpush.msra.mxu0 0.0
        %3276 = vmatpush.msra.mxu0 0.0
        %3277 = vmatpush.msra.mxu0 0.0
        %3278 = vmatpush.msra.mxu0 %v1726
        %3279 = vmatpush.msra.mxu0 %v1722
        %3280 = vmatpush.msra.mxu0 %v1718
        %3281 = vmatmul.f32.gmra.mxu0 %v3231
        %v3282 = vpop.f32.mrf.mxu0
        %v3283 = vadd.f32 %v3218, %v3282
        %3284 = vmatmul.f32.gmra.mxu0 %v3234
        %v3285 = vpop.f32.mrf.mxu0
        %v3286 = vadd.f32 %v3223, %v3285
        %3287 = vmatmul.f32.gmra.mxu0 %v3237
        %v3288 = vpop.f32.mrf.mxu0
        %v3289 = vadd.f32 %v3228, %v3288
        %3290 = vdwg.mxu0
        %3291 = vmatpush.msra.mxu0 0.0
        %3292 = vmatpush.msra.mxu0 0.0
        %3293 = vmatpush.msra.mxu0 0.0
        %3294 = vmatpush.msra.mxu0 0.0
        %3295 = vmatpush.msra.mxu0 0.0
        %3296 = vmatpush.msra.mxu0 0.0
        %3297 = vmatpush.msra.mxu0 0.0
        %3298 = vmatpush.msra.mxu0 0.0
        %3299 = vmatpush.msra.mxu0 0.0
        %3300 = vmatpush.msra.mxu0 0.0
        %3301 = vmatpush.msra.mxu0 0.0
        %3302 = vmatpush.msra.mxu0 0.0
        %3303 = vmatpush.msra.mxu0 0.0
        %3304 = vmatpush.msra.mxu0 %v1727
        %3305 = vmatpush.msra.mxu0 %v1723
        %3306 = vmatpush.msra.mxu0 %v1719
        %3307 = vmatmul.f32.gmra.mxu0 %v3231
        %v3308 = vpop.f32.mrf.mxu0
        %v3309 = vadd.f32 %v3218, %v3308
        %3310 = vmatmul.f32.gmra.mxu0 %v3234
        %v3311 = vpop.f32.mrf.mxu0
        %v3312 = vadd.f32 %v3223, %v3311
        %3313 = vmatmul.f32.gmra.mxu0 %v3237
        %v3314 = vpop.f32.mrf.mxu0
        %v3315 = vadd.f32 %v3228, %v3314
        %3316 = vdwg.mxu0
        %3317 = vmatpush.msra.mxu0 0.0
        %3318 = vmatpush.msra.mxu0 0.0
        %3319 = vmatpush.msra.mxu0 0.0
        %3320 = vmatpush.msra.mxu0 0.0
        %3321 = vmatpush.msra.mxu0 0.0
        %3322 = vmatpush.msra.mxu0 0.0
        %3323 = vmatpush.msra.mxu0 0.0
        %3324 = vmatpush.msra.mxu0 0.0
        %3325 = vmatpush.msra.mxu0 0.0
        %3326 = vmatpush.msra.mxu0 0.0
        %3327 = vmatpush.msra.mxu0 0.0
        %3328 = vmatpush.msra.mxu0 0.0
        %3329 = vmatpush.msra.mxu0 0.0
        %3330 = vmatpush.msra.mxu0 %v1728
        %3331 = vmatpush.msra.mxu0 %v1724
        %3332 = vmatpush.msra.mxu0 %v1720
        %3333 = vmatmul.f32.gmra.mxu0 %v3231
        %v3334 = vpop.f32.mrf.mxu0
        %v3335 = vadd.f32 %v3218, %v3334
        %3336 = vmatmul.f32.gmra.mxu0 %v3234
        %v3337 = vpop.f32.mrf.mxu0
        %v3338 = vadd.f32 %v3223, %v3337
        %3339 = vmatmul.f32.gmra.mxu0 %v3237
        %v3340 = vpop.f32.mrf.mxu0
        %v3341 = vadd.f32 %v3228, %v3340
        %3342 = vdwg.mxu0
        %v3343 = vmul.f32 %v3203, %v3257
        %v3344 = vmul.f32 %v3204, %v3283
        %v3345 = vmul.f32 %v3205, %v3309
        %v3346 = vmul.f32 %v3206, %v3335
        %v3347 = vmul.f32 %v3207, %v3260
        %v3348 = vmul.f32 %v3208, %v3286
        %v3349 = vmul.f32 %v3209, %v3312
        %v3350 = vmul.f32 %v3210, %v3338
        %v3351 = vmul.f32 %v3211, %v3263
        %v3352 = vmul.f32 %v3212, %v3289
        %v3353 = vmul.f32 %v3213, %v3315
        %v3354 = vmul.f32 %v3214, %v3341
        %v3355 = vadd.f32 %v3188, %v3343
        %v3356 = vadd.f32 %v3189, %v3344
        %v3357 = vadd.f32 %v3190, %v3345
        %v3358 = vadd.f32 %v3191, %v3346
        %v3359 = vadd.f32 %v3192, %v3347
        %v3360 = vadd.f32 %v3193, %v3348
        %v3361 = vadd.f32 %v3194, %v3349
        %v3362 = vadd.f32 %v3195, %v3350
        %v3363 = vadd.f32 %v3196, %v3351
        %v3364 = vadd.f32 %v3197, %v3352
        %v3365 = vadd.f32 %v3198, %v3353
        %v3366 = vadd.f32 %v3199, %v3354
        %3367 = vst [vmem:[%s526] sm:$0xff] %v3355
        %3368 = vst [vmem:[%s526 + $0x8] sm:$0xff] %v3356
        %3369 = vst [vmem:[%s526 + $0x10] sm:$0xff] %v3357
        %3370 = vst [vmem:[%s526 + $0x18] sm:$0xff] %v3358
        %3371 = vst [vmem:[%s526 + $0x20] sm:$0xff] %v3359
        %3372 = vst [vmem:[%s526 + $0x28] sm:$0xff] %v3360
        %3373 = vst [vmem:[%s526 + $0x30] sm:$0xff] %v3361
        %3374 = vst [vmem:[%s526 + $0x38] sm:$0xff] %v3362
        %3375 = vst [vmem:[%s526 + $0x40] sm:$0xff] %v3363
        %3376 = vst [vmem:[%s526 + $0x48] sm:$0xff] %v3364
        %3377 = vst [vmem:[%s526 + $0x50] sm:$0xff] %v3365
        %3378 = vst [vmem:[%s526 + $0x58] sm:$0xff] %v3366
        %s3379 = sand.u32 %s295, 1
        %s3380 = scalar_lea.sflag [#allocation4], %s3379
        %s3381 = sand.u32 %s295, 1
        %s3382 = smul.addr %s3381, 96
        %s3383 = scalar_lea.vmem [#allocation8], %s3382
        // Predicated region
        $region73: #{tpu_custom_call.1} parent=59 // pred_check
          %p3384 = pneg %p305
        $region74: #{tpu_custom_call.1} parent=59 // pred_check_branch
          %3386 = sbr.rel (%p3384) target = $region76
        $region75: #{tpu_custom_call.1} parent=59 // pred_region
          %s3387 = smul.u32 4, %s35
          %3389 = vsyncadd %s3380, 0
          %s3390 = smul.addr %s34, 48
          %s3391 = sadd.s32 %s3387, %s3390
          %s3392 = smul.addr %s3391, 8
          %s3393 = scalar_lea.hbm %s10, %s3392
          %s3394 = sshll.u32 %s3383, 4
          %s3395 = int_to_ptr.vmem [resolvable:$true] %s3394
          %s3396 = sshll.u32 %s3393, 4
          %s3397 = int_to_ptr.hbm [resolvable:$true] %s3396
          %3402 = dma.vmem_to_hbm [thread:$0]  %s3395, 1536, %s3397, %s3380, 512, 2048, 32
        $region76: #{tpu_custom_call.1} parent=59 // pred_fallthru
          _
      $region60: #{tpu_custom_call.1} parent=5 // pred_fallthru
        _
      %p3403 = scmp.le.s32.totalorder 2, %s25
      // Predicated region
      $region77: #{tpu_custom_call.1} parent=5 // pred_check
        %p3404 = pneg %p3403
      $region78: #{tpu_custom_call.1} parent=5 // pred_check_branch
        %3406 = sbr.rel (%p3404) target = $region80
      $region79: #{tpu_custom_call.1} parent=5 // pred_region
        %s3407 = ssub.s32 %s25, 2
        // Predicated region
        $region81: #{tpu_custom_call.1} parent=79 // pred_check
          %p3408 = pneg %p311
        $region82: #{tpu_custom_call.1} parent=79 // pred_check_branch
          %3410 = sbr.rel (%p3408) target = $region84
        $region83: #{tpu_custom_call.1} parent=79 // pred_region
          %s3411 = sand.u32 %s296, 1
          %s3412 = scalar_lea.sflag [#allocation4], %s3411
          %s3413 = sand.u32 %s296, 1
          %s3414 = smul.addr %s3413, 96
          %s3415 = scalar_lea.vmem [#allocation8], %s3414
          %3417 = dma.done %s3412, 1536
        $region84: #{tpu_custom_call.1} parent=79 // pred_fallthru
          _
      $region80: #{tpu_custom_call.1} parent=5 // pred_fallthru
        _
    $region6: #{tpu_custom_call.1} parent=1 // loop_footer
      %s29 = sadd.s32 1, %s25
    $region7: #{tpu_custom_call.1} parent=1 // loop_footer_branch
      %24 = sbr.rel target = $region3
    $region8: #{tpu_custom_call.1} parent=1 // loop_exit
      _
    %3418 = vsyncpa [#allocation3], 1
    %s3419 = scalar_lea.sflag [#allocation3], 1
    %3420 = vsyncpa %s3419, 1
    %3421 = vsyncpa [#allocation6], 1
    %s3422 = scalar_lea.sflag [#allocation6], 1
    %3423 = vsyncpa %s3422, 1
    %3424 = vsyncpa [#allocation4], 1
    %s3425 = scalar_lea.sflag [#allocation4], 1
    %3426 = vsyncpa %s3425, 1

</llo_original>
